<compile_context>
chip_gen: v7x
topology: tpu7x:2x2x1
jax: 0.10.0
libtpu: 0.0.40
codegen_flags: <defaults>
</compile_context>

<pallas_src>
import math
import functools

import jax
import jax.numpy as jnp
from jax import lax
from jax.experimental import pallas as pl
from jax.experimental.pallas import tpu as pltpu

LANE = 128        # TPU lane width  (last dim tiling)
SUBLANE = 8       # TPU sublane width (second-to-last dim tiling)
MXU_DTYPE = jnp.bfloat16          # MXU operand / inter-kernel activation dtype


def _vmem_limit_bytes():
    """Chip-dependent scoped-VMEM budget: ~3/4 of physical, capped at 100 MiB
    (v5e/v6e have 128 MiB physical; v7x has 64 MiB -> ~48 MiB here)."""
    try:
        info = pltpu.get_tpu_info()
        cap = int(getattr(info, "vmem_capacity_bytes", 64 * 1024 * 1024))
    except Exception:
        cap = 64 * 1024 * 1024
    return min((cap * 3) // 4, 100 * 1024 * 1024)


VMEM_LIMIT = _vmem_limit_bytes()


def _round_up(x, m):
    return ((x + m - 1) // m) * m


def _pad_to(a, shape):
    pads = [(0, s - d) for d, s in zip(a.shape, shape)]
    if all(p == (0, 0) for p in pads):
        return a
    return jnp.pad(a, pads)


# ----------------------------------------------------------------------------
# Kernel 1: fused 3x3 conv + bias + ReLU (+ optional 2x2 maxpool)
#   - in-kernel zero halo (no XLA-side jnp.pad round-trip)
#   - in-VMEM im2col slab -> single wide-K MXU matmul (K = 9*Cin)
#   - pooling on the f32 acc before the lane-dense bf16 store
# ----------------------------------------------------------------------------
def _conv3x3_kernel(x_ref, w_ref, b_ref, o_ref, pad_ref, patch_ref,
                    *, H, W, relu, pool):
    # x_ref:     (1, H, W, Cin)        bf16, channel-padded to 128 lanes
    # w_ref:     (9*Cin, Cout)         bf16, tap-major (dy*3+dx), grid-resident
    # b_ref:     (1, Cout)             f32, grid-resident
    # o_ref:     (1, Ho, Wo, Cout)     bf16 (Ho,Wo = H/2,W/2 if pool else H,W)
    # pad_ref:   (H+2, W+2, Cin)       bf16 VMEM scratch (zero halo)
    # patch_ref: (H*W, 9*Cin)          bf16 VMEM scratch (im2col slab)
    cin = x_ref.shape[-1]
    cout = o_ref.shape[-1]

    # Zero the halo once; the interior is fully overwritten every grid step.
    @pl.when(pl.program_id(0) == 0)
    def _():
        pad_ref[...] = jnp.zeros_like(pad_ref)

    pad_ref[pl.ds(1, H), pl.ds(1, W), :] = x_ref[0]

    # Build the (H*W, 9*Cin) im2col slab: one lane-dense copy per tap, no
    # per-tap f32->bf16 packing (activations are already bf16).
    for dy in range(3):
        for dx in range(3):
            t = dy * 3 + dx
            win = pad_ref[pl.ds(dy, H), pl.ds(dx, W), :]           # (H, W, Cin)
            patch_ref[:, pl.ds(t * cin, cin)] = win.reshape(H * W, cin)

    # One wide-K MXU matmul; accumulation stays in the MXU result path.
    acc = jnp.dot(patch_ref[...], w_ref[...],
                  preferred_element_type=jnp.float32)              # (H*W, Cout)
    acc = acc + b_ref[...]                                         # f32 epilogue
    if relu:
        acc = jnp.maximum(acc, 0.0)

    if pool:
        ho, wo = H // 2, W // 2
        a4 = acc.reshape(ho, 2, wo, 2, cout)
        pooled = jnp.max(jnp.max(a4, axis=3), axis=1)              # (ho, wo, Cout)
        o_ref[...] = pooled.reshape(1, ho, wo, cout).astype(o_ref.dtype)
    else:
        o_ref[...] = acc.reshape(1, H, W, cout).astype(o_ref.dtype)


def conv3x3_relu_pool(x_nhwc, w_flat, b_row, pool):
    """x_nhwc: (N,H,W,Cp) bf16; w_flat: (9*Cp,Cop) bf16; b_row: (1,Cop) f32."""
    N, H, W, Cin = x_nhwc.shape
    Cout = w_flat.shape[-1]
    assert w_flat.shape[0] == 9 * Cin
    Ho, Wo = (H // 2, W // 2) if pool else (H, W)
    kernel = functools.partial(_conv3x3_kernel, H=H, W=W, relu=True, pool=pool)
    flops = 2 * N * H * W * 9 * Cin * Cout
    bytes_accessed = (N * H * W * Cin + N * Ho * Wo * Cout
                      + 9 * Cin * Cout) * 2 + Cout * 4
    return pl.pallas_call(
        kernel,
        out_shape=jax.ShapeDtypeStruct((N, Ho, Wo, Cout), MXU_DTYPE),
        grid=(N,),
        in_specs=[
            pl.BlockSpec((1, H, W, Cin), lambda n: (n, 0, 0, 0)),
            pl.BlockSpec((9 * Cin, Cout), lambda n: (0, 0)),   # resident weight
            pl.BlockSpec((1, Cout), lambda n: (0, 0)),         # resident bias
        ],
        out_specs=pl.BlockSpec((1, Ho, Wo, Cout), lambda n: (n, 0, 0, 0)),
        scratch_shapes=[
            pltpu.VMEM((H + 2, W + 2, Cin), MXU_DTYPE),        # zero-halo'd tile
            pltpu.VMEM((H * W, 9 * Cin), MXU_DTYPE),           # im2col slab
        ],
        compiler_params=pltpu.CompilerParams(
            dimension_semantics=("parallel",),
            vmem_limit_bytes=VMEM_LIMIT,
        ),
        cost_estimate=pl.CostEstimate(flops=flops, transcendentals=0,
                                      bytes_accessed=bytes_accessed),
    )(x_nhwc, w_flat, b_row)


# ----------------------------------------------------------------------------
# Kernel 2 (fallback only): standalone 2x2 max pool, stride 2.
# Reshape-based max (no strided sublane reads).  Not used when the pool is
# fused into the preceding conv, which is the case for standard VGG cfgs.
# ----------------------------------------------------------------------------
def _maxpool2x2_kernel(x_ref, o_ref):
    _, H, W, C = x_ref.shape
    ho, wo = H // 2, W // 2
    v = x_ref[0].reshape(ho, 2, wo, 2, C)
    o_ref[...] = jnp.max(jnp.max(v, axis=3), axis=1).reshape(1, ho, wo, C)


def maxpool2x2(x_nhwc):
    N, H, W, C = x_nhwc.shape
    return pl.pallas_call(
        _maxpool2x2_kernel,
        out_shape=jax.ShapeDtypeStruct((N, H // 2, W // 2, C), x_nhwc.dtype),
        grid=(N,),
        in_specs=[pl.BlockSpec((1, H, W, C), lambda n: (n, 0, 0, 0))],
        out_specs=pl.BlockSpec((1, H // 2, W // 2, C), lambda n: (n, 0, 0, 0)),
        compiler_params=pltpu.CompilerParams(
            dimension_semantics=("parallel",),
            vmem_limit_bytes=VMEM_LIMIT,
        ),
    )(x_nhwc)


# ----------------------------------------------------------------------------
# Kernel 3: tiled (M, N, K) matmul + bias (+ReLU) with f32 accumulator scratch
# ----------------------------------------------------------------------------
def _matmul_bias_kernel(x_ref, w_ref, b_ref, o_ref, acc_ref, *, relu):
    @pl.when(pl.program_id(2) == 0)
    def _():
        acc_ref[...] = jnp.zeros_like(acc_ref)

    acc_ref[...] += jnp.dot(x_ref[...], w_ref[...],
                            preferred_element_type=jnp.float32)

    @pl.when(pl.program_id(2) == pl.num_programs(2) - 1)
    def _():
        out = acc_ref[...] + b_ref[...]          # f32 bias
        if relu:
            out = jnp.maximum(out, 0.0)          # f32 epilogue (v5e friendly)
        o_ref[...] = out.astype(o_ref.dtype)


def pallas_linear(x, w_in_out, b, relu=False, out_dtype=jnp.float32,
                  tm=256, tn=512, tk=1024):
    """y = x @ w_in_out + b (+ReLU).  Pads M/N/K, feeds the MXU bf16.
    Large tn/tk defaults so the small-M inference path is weight-streaming
    with a collapsed K grid and maximal weight-block reuse."""
    M, K = x.shape
    K2, N = w_in_out.shape
    assert K == K2 and b.shape == (N,)
    tm = min(tm, _round_up(M, SUBLANE))
    tn = min(tn, _round_up(N, LANE))
    tk = min(tk, _round_up(K, LANE))
    Mp, Np, Kp = _round_up(M, tm), _round_up(N, tn), _round_up(K, tk)
    xp = _pad_to(x, (Mp, Kp)).astype(MXU_DTYPE)
    wp = _pad_to(w_in_out, (Kp, Np)).astype(MXU_DTYPE)
    bp = _pad_to(b.astype(jnp.float32), (Np,)).reshape(1, Np)
    grid = (Mp // tm, Np // tn, Kp // tk)
    kernel = functools.partial(_matmul_bias_kernel, relu=relu)
    flops = 2 * Mp * Np * Kp
    bytes_accessed = (Mp * Kp + Kp * Np) * 2 + Mp * Np * 4 + Np * 4
    out = pl.pallas_call(
        kernel,
        out_shape=jax.ShapeDtypeStruct((Mp, Np), out_dtype),
        grid=grid,
        in_specs=[
            pl.BlockSpec((tm, tk), lambda i, j, k: (i, k)),
            pl.BlockSpec((tk, tn), lambda i, j, k: (k, j)),
            pl.BlockSpec((1, tn), lambda i, j, k: (0, j)),
        ],
        out_specs=pl.BlockSpec((tm, tn), lambda i, j, k: (i, j)),
        scratch_shapes=[pltpu.VMEM((tm, tn), jnp.float32)],
        compiler_params=pltpu.CompilerParams(
            dimension_semantics=("parallel", "parallel", "arbitrary"),
            vmem_limit_bytes=VMEM_LIMIT,
        ),
        cost_estimate=pl.CostEstimate(flops=flops, transcendentals=0,
                                      bytes_accessed=bytes_accessed),
    )(xp, wp, bp)
    return out[:M, :N]


# ----------------------------------------------------------------------------
# Parameter init: xavier_normal_ with gain = calculate_gain('relu') = sqrt(2),
# zero biases — same scheme as VGG._initialize_weights('x_gaussian').
# ----------------------------------------------------------------------------
def _xavier_normal(key, shape, fan_in, fan_out, gain):
    std = gain * math.sqrt(2.0 / (fan_in + fan_out))
    return std * jax.random.normal(key, shape, dtype=jnp.float32)


def init_vgg_params(key, cfg, in_channels, in_linear, num_classes):
    gain = math.sqrt(2.0)  # nn.init.calculate_gain('relu')
    params = {"convs": [], "fcs": []}
    c_in = in_channels
    for v in cfg:
        if v == "M":
            continue
        key, sub = jax.random.split(key)
        w = _xavier_normal(sub, (v, c_in, 3, 3),
                           fan_in=c_in * 9, fan_out=v * 9, gain=gain)
        b = jnp.zeros((v,), jnp.float32)
        params["convs"].append((w, b))
        c_in = v
    fc_dims = [(in_linear, 512), (512, 512), (512, num_classes)]
    for (d_in, d_out) in fc_dims:
        key, sub = jax.random.split(key)
        w = _xavier_normal(sub, (d_out, d_in),
                           fan_in=d_in, fan_out=d_out, gain=gain)
        b = jnp.zeros((d_out,), jnp.float32)
        params["fcs"].append((w, b))
    return params


def prepare_params(params, feat_hw):
    """One-time conversion of torch-layout params into kernel-ready arrays:
    tap-major lane-padded bf16 conv weights flattened to (9*Cin, Cout), and FC
    weights transposed to (in, out) with the NCHW-flatten permutation folded
    into the first FC weight (no activation relayout at runtime)."""
    prepared = {"convs": [], "fcs": []}
    for (w, b) in params["convs"]:
        cout, cin, _, _ = w.shape
        cin_p, cout_p = _round_up(cin, LANE), _round_up(cout, LANE)
        # (Cout,Cin,3,3) -> (3,3,Cin,Cout) -> (9,Cin,Cout), zero-padded lanes,
        # then flattened tap-major to (9*Cin_p, Cout_p) for the single matmul.
        w_taps = jnp.transpose(w, (2, 3, 1, 0)).reshape(9, cin, cout)
        w_taps = _pad_to(w_taps, (9, cin_p, cout_p))
        w_flat = w_taps.reshape(9 * cin_p, cout_p).astype(MXU_DTYPE)
        b_row = _pad_to(b.astype(jnp.float32), (cout_p,)).reshape(1, cout_p)
        prepared["convs"].append((w_flat, b_row))
    c_last = params["convs"][-1][0].shape[0]
    hf, wf = feat_hw
    (w1, b1), (w2, b2), (w3, b3) = params["fcs"]
    # Fold NHWC-flatten -> NCHW-flatten reordering into the first FC weight.
    perm = jnp.transpose(jnp.arange(c_last * hf * wf).reshape(c_last, hf, wf),
                         (1, 2, 0)).reshape(-1)
    v1 = jnp.transpose(w1)[perm, :]
    prepared["fcs"] = [(v1, b1), (jnp.transpose(w2), b2), (jnp.transpose(w3), b3)]
    prepared["c_last"] = c_last
    return prepared


# ----------------------------------------------------------------------------
# Full forward pass (equivalent to VGG.forward, eval mode)
# ----------------------------------------------------------------------------
def vgg_forward(x_nchw, prepared, cfg):
    n = x_nchw.shape[0]
    # NCHW -> NHWC once; cast to bf16 once; pad channels to the lane width
    # (pad channels stay exactly 0 through conv/ReLU/pool).
    x = jnp.transpose(x_nchw, (0, 2, 3, 1)).astype(MXU_DTYPE)
    x = _pad_to(x, x.shape[:3] + (_round_up(x.shape[3], LANE),))
    conv_idx = 0
    i = 0
    while i < len(cfg):
        v = cfg[i]
        if v == "M":
            # Fallback only (pool not preceded by a conv) — not hit for
            # standard VGG cfgs, where the pool is fused into the conv.
            x = maxpool2x2(x)
            i += 1
        else:
            pool = (i + 1 < len(cfg) and cfg[i + 1] == "M")
            w_flat, b_row = prepared["convs"][conv_idx]
            x = conv3x3_relu_pool(x, w_flat, b_row, pool=pool)
            conv_idx += 1
            i += 2 if pool else 1
    # Flatten in NHWC order; NCHW flatten order is handled by the permuted W1.
    x = x[:, :, :, :prepared["c_last"]].reshape(n, -1)
    (v1, b1), (v2, b2), (v3, b3) = prepared["fcs"]
    x = pallas_linear(x, v1, b1, relu=True, out_dtype=MXU_DTYPE)
    x = pallas_linear(x, v2, b2, relu=True, out_dtype=MXU_DTYPE)   # Dropout: identity (eval)
    x = pallas_linear(x, v3, b3, relu=False, out_dtype=jnp.float32)  # Dropout: identity (eval)
    return x


# Pure-XLA reference (mirrors the PyTorch module exactly) for a sanity check.
def vgg_reference(x_nchw, params, cfg):
    x = x_nchw
    ci = 0
    for v in cfg:
        if v == "M":
            x = lax.reduce_window(x, -jnp.inf, lax.max,
                                  (1, 1, 2, 2), (1, 1, 2, 2), "VALID")
        else:
            w, b = params["convs"][ci]
            ci += 1
            x = lax.conv_general_dilated(
                x, w, (1, 1), ((1, 1), (1, 1)),
                dimension_numbers=("NCHW", "OIHW", "NCHW"))
            x = jnp.maximum(x + b.reshape(1, -1, 1, 1), 0.0)
    x = x.reshape(x.shape[0], -1)
    for i, (w, b) in enumerate(params["fcs"]):
        x = x @ w.T + b
        if i < 2:
            x = jnp.maximum(x, 0.0)
    return x


# ----------------------------------------------------------------------------
if __name__ == "__main__":
    # Tiny, self-consistent configuration:
    #   input (N=2, C=4, H=16, W=16), cfg [8,'M',16,'M'] -> features (2,16,4,4)
    #   -> in_linear = 16*4*4 = 256, num_classes = 10.
    cfg = [8, "M", 16, "M"]
    batch, in_ch, spatial = 2, 4, 16
    n_pool = sum(1 for v in cfg if v == "M")
    feat = spatial // (2 ** n_pool)
    c_last = [v for v in cfg if v != "M"][-1]
    in_linear, num_classes = c_last * feat * feat, 10

    key = jax.random.PRNGKey(0)
    key, xkey = jax.random.split(key)
    x = jax.random.normal(xkey, (batch, in_ch, spatial, spatial), jnp.float32)

    params = init_vgg_params(key, cfg, in_ch, in_linear, num_classes)
    prepared = prepare_params(params, (feat, feat))

    out = vgg_forward(x, prepared, cfg)
    out = jax.block_until_ready(out)
    assert out.shape == (batch, num_classes), out.shape
    assert out.dtype == jnp.float32

    # Sanity check vs an XLA reference (loose tolerance: bf16 activations and
    # bf16 MXU operands end-to-end).
    ref = vgg_reference(x, params, cfg)
    err = float(jnp.max(jnp.abs(out - ref)))
    scale = float(jnp.max(jnp.abs(ref))) + 1.0
    assert err <= 0.05 * scale, (err, scale)

    print("KERNEL_OK")
</pallas_src>

<mosaic_0001>
module attributes {stable_mosaic.version = 11 : i64} {
  func.func @_conv3x3_kernel(%arg0: i32, %arg1: memref<1x16x16x128xbf16, #tpu.memory_space<vmem>>, %arg2: memref<1152x128xbf16, #tpu.memory_space<vmem>>, %arg3: memref<1x128xf32, #tpu.memory_space<vmem>>, %arg4: memref<1x8x8x128xbf16, #tpu.memory_space<vmem>>, %arg5: memref<18x18x128xbf16, #tpu.memory_space<vmem>>, %arg6: memref<256x1152xbf16, #tpu.memory_space<vmem>>) attributes {dimension_semantics = [#tpu.dimension_semantics<parallel>], iteration_bounds = array<i64: 2>, scalar_prefetch = 0 : i64, scratch_operands = 2 : i64, tpu.core_type = #tpu.core_type<tc>, window_params = [{transform_indices = @transform_0, window_bounds = array<i64: 1, 16, 16, 128>}, {pipeline_mode = #tpu.pipeline_mode<synchronous>, transform_indices = @transform_1, window_bounds = array<i64: 1152, 128>}, {pipeline_mode = #tpu.pipeline_mode<synchronous>, transform_indices = @transform_2, window_bounds = array<i64: 1, 128>}, {transform_indices = @transform_3, window_bounds = array<i64: 1, 8, 8, 128>}]} {
    %c0_i32 = arith.constant 0 : i32
    %0 = arith.cmpi eq, %arg0, %c0_i32 : i32
    %1 = arith.extui %0 : i1 to i32
    %c0_i32_0 = arith.constant 0 : i32
    %2 = arith.cmpi ne, %1, %c0_i32_0 : i32
    scf.if %2 {
      %cst_55 = arith.constant 0.000000e+00 : bf16
      %47 = vector.broadcast %cst_55 : bf16 to vector<18x18x128xbf16>
      %c0_56 = arith.constant 0 : index
      %c0_57 = arith.constant 0 : index
      %c0_58 = arith.constant 0 : index
      %48 = vector.load %arg5[%c0_56, %c0_57, %c0_58] : memref<18x18x128xbf16, #tpu.memory_space<vmem>>, vector<18x18x128xbf16>
      tpu.vector_store %arg5[%c0_56, %c0_57, %c0_58], %47 {strides = array<i32>} : memref<18x18x128xbf16, #tpu.memory_space<vmem>>, vector<18x18x128xbf16>,
    } else {
    }
    %c0 = arith.constant 0 : index
    %c0_1 = arith.constant 0 : index
    %c0_2 = arith.constant 0 : index
    %c0_3 = arith.constant 0 : index
    %3 = vector.load %arg1[%c0, %c0_1, %c0_2, %c0_3] : memref<1x16x16x128xbf16, #tpu.memory_space<vmem>>, vector<1x16x16x128xbf16>
    %4 = vector.shape_cast %3 : vector<1x16x16x128xbf16> to vector<16x16x128xbf16>
    %c1 = arith.constant 1 : index
    %c1_4 = arith.constant 1 : index
    %c0_5 = arith.constant 0 : index
    %5 = vector.load %arg5[%c1, %c1_4, %c0_5] : memref<18x18x128xbf16, #tpu.memory_space<vmem>>, vector<16x16x128xbf16>
    tpu.vector_store %arg5[%c1, %c1_4, %c0_5], %4 {strides = array<i32>} : memref<18x18x128xbf16, #tpu.memory_space<vmem>>, vector<16x16x128xbf16>,
    %c0_6 = arith.constant 0 : index
    %c0_7 = arith.constant 0 : index
    %c0_8 = arith.constant 0 : index
    %6 = vector.load %arg5[%c0_6, %c0_7, %c0_8] : memref<18x18x128xbf16, #tpu.memory_space<vmem>>, vector<16x16x128xbf16>
    %7 = vector.shape_cast %6 : vector<16x16x128xbf16> to vector<256x128xbf16>
    %c0_9 = arith.constant 0 : index
    %c0_10 = arith.constant 0 : index
    %8 = vector.load %arg6[%c0_9, %c0_10] : memref<256x1152xbf16, #tpu.memory_space<vmem>>, vector<256x128xbf16>
    tpu.vector_store %arg6[%c0_9, %c0_10], %7 {strides = array<i32>} : memref<256x1152xbf16, #tpu.memory_space<vmem>>, vector<256x128xbf16>,
    %c0_11 = arith.constant 0 : index
    %c1_12 = arith.constant 1 : index
    %c0_13 = arith.constant 0 : index
    %9 = vector.load %arg5[%c0_11, %c1_12, %c0_13] : memref<18x18x128xbf16, #tpu.memory_space<vmem>>, vector<16x16x128xbf16>
    %10 = vector.shape_cast %9 : vector<16x16x128xbf16> to vector<256x128xbf16>
    %c0_14 = arith.constant 0 : index
    %c128 = arith.constant 128 : index
    %11 = vector.load %arg6[%c0_14, %c128] : memref<256x1152xbf16, #tpu.memory_space<vmem>>, vector<256x128xbf16>
    tpu.vector_store %arg6[%c0_14, %c128], %10 {strides = array<i32>} : memref<256x1152xbf16, #tpu.memory_space<vmem>>, vector<256x128xbf16>,
    %c0_15 = arith.constant 0 : index
    %c2 = arith.constant 2 : index
    %c0_16 = arith.constant 0 : index
    %12 = vector.load %arg5[%c0_15, %c2, %c0_16] : memref<18x18x128xbf16, #tpu.memory_space<vmem>>, vector<16x16x128xbf16>
    %13 = vector.shape_cast %12 : vector<16x16x128xbf16> to vector<256x128xbf16>
    %c0_17 = arith.constant 0 : index
    %c256 = arith.constant 256 : index
    %14 = vector.load %arg6[%c0_17, %c256] : memref<256x1152xbf16, #tpu.memory_space<vmem>>, vector<256x128xbf16>
    tpu.vector_store %arg6[%c0_17, %c256], %13 {strides = array<i32>} : memref<256x1152xbf16, #tpu.memory_space<vmem>>, vector<256x128xbf16>,
    %c1_18 = arith.constant 1 : index
    %c0_19 = arith.constant 0 : index
    %c0_20 = arith.constant 0 : index
    %15 = vector.load %arg5[%c1_18, %c0_19, %c0_20] : memref<18x18x128xbf16, #tpu.memory_space<vmem>>, vector<16x16x128xbf16>
    %16 = vector.shape_cast %15 : vector<16x16x128xbf16> to vector<256x128xbf16>
    %c0_21 = arith.constant 0 : index
    %c384 = arith.constant 384 : index
    %17 = vector.load %arg6[%c0_21, %c384] : memref<256x1152xbf16, #tpu.memory_space<vmem>>, vector<256x128xbf16>
    tpu.vector_store %arg6[%c0_21, %c384], %16 {strides = array<i32>} : memref<256x1152xbf16, #tpu.memory_space<vmem>>, vector<256x128xbf16>,
    %c1_22 = arith.constant 1 : index
    %c1_23 = arith.constant 1 : index
    %c0_24 = arith.constant 0 : index
    %18 = vector.load %arg5[%c1_22, %c1_23, %c0_24] : memref<18x18x128xbf16, #tpu.memory_space<vmem>>, vector<16x16x128xbf16>
    %19 = vector.shape_cast %18 : vector<16x16x128xbf16> to vector<256x128xbf16>
    %c0_25 = arith.constant 0 : index
    %c512 = arith.constant 512 : index
    %20 = vector.load %arg6[%c0_25, %c512] : memref<256x1152xbf16, #tpu.memory_space<vmem>>, vector<256x128xbf16>
    tpu.vector_store %arg6[%c0_25, %c512], %19 {strides = array<i32>} : memref<256x1152xbf16, #tpu.memory_space<vmem>>, vector<256x128xbf16>,
    %c1_26 = arith.constant 1 : index
    %c2_27 = arith.constant 2 : index
    %c0_28 = arith.constant 0 : index
    %21 = vector.load %arg5[%c1_26, %c2_27, %c0_28] : memref<18x18x128xbf16, #tpu.memory_space<vmem>>, vector<16x16x128xbf16>
    %22 = vector.shape_cast %21 : vector<16x16x128xbf16> to vector<256x128xbf16>
    %c0_29 = arith.constant 0 : index
    %c640 = arith.constant 640 : index
    %23 = vector.load %arg6[%c0_29, %c640] : memref<256x1152xbf16, #tpu.memory_space<vmem>>, vector<256x128xbf16>
    tpu.vector_store %arg6[%c0_29, %c640], %22 {strides = array<i32>} : memref<256x1152xbf16, #tpu.memory_space<vmem>>, vector<256x128xbf16>,
    %c2_30 = arith.constant 2 : index
    %c0_31 = arith.constant 0 : index
    %c0_32 = arith.constant 0 : index
    %24 = vector.load %arg5[%c2_30, %c0_31, %c0_32] : memref<18x18x128xbf16, #tpu.memory_space<vmem>>, vector<16x16x128xbf16>
    %25 = vector.shape_cast %24 : vector<16x16x128xbf16> to vector<256x128xbf16>
    %c0_33 = arith.constant 0 : index
    %c768 = arith.constant 768 : index
    %26 = vector.load %arg6[%c0_33, %c768] : memref<256x1152xbf16, #tpu.memory_space<vmem>>, vector<256x128xbf16>
    tpu.vector_store %arg6[%c0_33, %c768], %25 {strides = array<i32>} : memref<256x1152xbf16, #tpu.memory_space<vmem>>, vector<256x128xbf16>,
    %c2_34 = arith.constant 2 : index
    %c1_35 = arith.constant 1 : index
    %c0_36 = arith.constant 0 : index
    %27 = vector.load %arg5[%c2_34, %c1_35, %c0_36] : memref<18x18x128xbf16, #tpu.memory_space<vmem>>, vector<16x16x128xbf16>
    %28 = vector.shape_cast %27 : vector<16x16x128xbf16> to vector<256x128xbf16>
    %c0_37 = arith.constant 0 : index
    %c896 = arith.constant 896 : index
    %29 = vector.load %arg6[%c0_37, %c896] : memref<256x1152xbf16, #tpu.memory_space<vmem>>, vector<256x128xbf16>
    tpu.vector_store %arg6[%c0_37, %c896], %28 {strides = array<i32>} : memref<256x1152xbf16, #tpu.memory_space<vmem>>, vector<256x128xbf16>,
    %c2_38 = arith.constant 2 : index
    %c2_39 = arith.constant 2 : index
    %c0_40 = arith.constant 0 : index
    %30 = vector.load %arg5[%c2_38, %c2_39, %c0_40] : memref<18x18x128xbf16, #tpu.memory_space<vmem>>, vector<16x16x128xbf16>
    %31 = vector.shape_cast %30 : vector<16x16x128xbf16> to vector<256x128xbf16>
    %c0_41 = arith.constant 0 : index
    %c1024 = arith.constant 1024 : index
    %32 = vector.load %arg6[%c0_41, %c1024] : memref<256x1152xbf16, #tpu.memory_space<vmem>>, vector<256x128xbf16>
    tpu.vector_store %arg6[%c0_41, %c1024], %31 {strides = array<i32>} : memref<256x1152xbf16, #tpu.memory_space<vmem>>, vector<256x128xbf16>,
    %c0_42 = arith.constant 0 : index
    %c0_43 = arith.constant 0 : index
    %33 = vector.load %arg6[%c0_42, %c0_43] : memref<256x1152xbf16, #tpu.memory_space<vmem>>, vector<256x1152xbf16>
    %c0_44 = arith.constant 0 : index
    %c0_45 = arith.constant 0 : index
    %34 = vector.load %arg2[%c0_44, %c0_45] : memref<1152x128xbf16, #tpu.memory_space<vmem>>, vector<1152x128xbf16>
    %cst = arith.constant dense<0.000000e+00> : vector<256x128xf32>
    %35 = tpu.matmul %33, %34, %cst {dimension_numbers = #tpu.dot_dimension_numbers<[1], [0], [0], [1], [0, 0, 1, 1], [], []>} : vector<256x1152xbf16>, vector<1152x128xbf16>, vector<256x128xf32> -> vector<256x128xf32>
    %c0_46 = arith.constant 0 : index
    %c0_47 = arith.constant 0 : index
    %36 = vector.load %arg3[%c0_46, %c0_47] : memref<1x128xf32, #tpu.memory_space<vmem>>, vector<1x128xf32>
    %37 = vector.broadcast %36 : vector<1x128xf32> to vector<256x128xf32>
    %38 = arith.addf %35, %37 : vector<256x128xf32>
    %cst_48 = arith.constant 0.000000e+00 : f32
    %39 = vector.broadcast %cst_48 : f32 to vector<256x128xf32>
    %40 = arith.maximumf %38, %39 : vector<256x128xf32>
    %41 = vector.shape_cast %40 : vector<256x128xf32> to vector<8x2x8x2x128xf32>
    %cst_49 = arith.constant dense<0xFF800000> : vector<8x2x8x128xf32>
    %42 = vector.multi_reduction <maximumf>, %41, %cst_49 [3] : vector<8x2x8x2x128xf32> to vector<8x2x8x128xf32>
    %cst_50 = arith.constant dense<0xFF800000> : vector<8x8x128xf32>
    %43 = vector.multi_reduction <maximumf>, %42, %cst_50 [1] : vector<8x2x8x128xf32> to vector<8x8x128xf32>
    %44 = vector.shape_cast %43 : vector<8x8x128xf32> to vector<1x8x8x128xf32>
    %45 = arith.truncf %44 : vector<1x8x8x128xf32> to vector<1x8x8x128xbf16>
    %c0_51 = arith.constant 0 : index
    %c0_52 = arith.constant 0 : index
    %c0_53 = arith.constant 0 : index
    %c0_54 = arith.constant 0 : index
    %46 = vector.load %arg4[%c0_51, %c0_52, %c0_53, %c0_54] : memref<1x8x8x128xbf16, #tpu.memory_space<vmem>>, vector<1x8x8x128xbf16>
    tpu.vector_store %arg4[%c0_51, %c0_52, %c0_53, %c0_54], %45 {strides = array<i32>} : memref<1x8x8x128xbf16, #tpu.memory_space<vmem>>, vector<1x8x8x128xbf16>,
    return
  }
  func.func @transform_0(%arg0: i32) -> (i32, i32, i32, i32) {
    %c0_i32 = arith.constant 0 : i32
    %c0_i32_0 = arith.constant 0 : i32
    %c0_i32_1 = arith.constant 0 : i32
    %c0_i32_2 = arith.constant 0 : i32
    return %arg0, %c0_i32, %c0_i32_0, %c0_i32_1 : i32, i32, i32, i32
  }
  func.func @transform_1(%arg0: i32) -> (i32, i32) {
    %c0_i32 = arith.constant 0 : i32
    %c0_i32_0 = arith.constant 0 : i32
    %c0_i32_1 = arith.constant 0 : i32
    return %c0_i32, %c0_i32_0 : i32, i32
  }
  func.func @transform_2(%arg0: i32) -> (i32, i32) {
    %c0_i32 = arith.constant 0 : i32
    %c0_i32_0 = arith.constant 0 : i32
    %c0_i32_1 = arith.constant 0 : i32
    return %c0_i32, %c0_i32_0 : i32, i32
  }
  func.func @transform_3(%arg0: i32) -> (i32, i32, i32, i32) {
    %c0_i32 = arith.constant 0 : i32
    %c0_i32_0 = arith.constant 0 : i32
    %c0_i32_1 = arith.constant 0 : i32
    %c0_i32_2 = arith.constant 0 : i32
    return %arg0, %c0_i32, %c0_i32_0, %c0_i32_1 : i32, i32, i32, i32
  }
}

</mosaic_0001>

<llo_original>
// kernel: tpu_custom_call.1
$region0: #{tpu_custom_call.1}
  #allocation0 [shape = 'u32[]', space=smem, size = 0x4, offset = 0x4, fixed_abs, tag = 'smem constant byte address 0x4 - core index']
  #allocation1 [shape = 'u32[144,128]{1,0:T(1,128)}', space=vmem, size = 0x12000, scoped, tag = 'internal scratch']
  #allocation2 [shape = 'bf16[18,18,128]{2,1,0:T(8,128)(2,1)}', space=vmem, size = 0x1b000, scoped, tag = 'scratch operand']
  #allocation3 [shape = 'bf16[256,1152]{1,0:T(16,128)(2,1)}', space=vmem, size = 0x90000, scoped, tag = 'scratch operand']
  %s0 = inlined_call_operand.hbm [shape: bf16[2,16,16,128], index: 0, kind: input, shape index: {}]
  %s1 = inlined_call_operand.hbm [shape: bf16[1152,128], index: 1, kind: input, shape index: {}]
  %s2 = inlined_call_operand.vmem [shape: f32[1,128], index: 2, kind: input, shape index: {}]
  %s3 = inlined_call_operand.hbm [shape: bf16[2,8,8,128], index: 3, kind: output, shape index: {}]
  %s4 = sld [smem:[#allocation0]]
  $region57: #{tpu_custom_call.1} parent=0
    _
  %s6 = ssub.s32 1, %s4
  %s7 = scalar_select 0, %s6, %s4
  $region1: #{tpu_custom_call.1} parent=0
    #allocation4 [shape = 'u8[131072]{0}', space=vmem, size = 0x20000, scoped, tag = 'input window, operand 0']
    #allocation5 [shape = 's32[2]{0}', space=sflag, size = 0x8, scoped, tag = 'scoped memory for tpu_custom_call.1']
    #allocation6 [shape = 's32[2]{0}', space=sflag, size = 0x8, scoped, tag = 'scoped memory for tpu_custom_call.1']
    #allocation7 [shape = 'u8[294912]{0}', space=vmem, size = 0x48000, scoped, tag = 'input window, operand 1, single buffered']
    #allocation8 [shape = 's32[1]{0}', space=sflag, size = 0x4, scoped, tag = 'scoped memory for tpu_custom_call.1']
    #allocation9 [shape = 'u8[32768]{0}', space=vmem, size = 0x8000, scoped, tag = 'output window, operand 0']
    %8 = vsyncpa [#allocation5], 0
    %s9 = scalar_lea.sflag [#allocation5], 1
    %10 = vsyncpa %s9, 0
    %11 = vsyncpa [#allocation8], 0
    %12 = vsyncpa [#allocation6], 0
    %s13 = scalar_lea.sflag [#allocation6], 1
    %14 = vsyncpa %s13, 0
    loop: start=0, step=1, limit=4
    $region2: #{tpu_custom_call.1} parent=1 // loop_pre_header
      _
    $region3: #{tpu_custom_call.1} parent=1 // loop_header
      %s16 = sphi 0, %s20
      %p17 = scmp.ge.s32.totalorder %s16, 4
      %s26 = sphi 0, %s28
      %s29 = sphi 0, %s26
      %s30 = sphi 0, %s29
      %s46 = sphi 0, %s30
      %s50 = sphi 0, %s50
      %s52 = sphi 0, %s50
      %s53 = sphi 0, %s52
      %s67 = sphi 0, %s53
      %s71 = sphi 0, %s71
      %s73 = sphi 0, %s71
      %s74 = sphi 0, %s73
      %s88 = sphi 0, %s74
      %s94 = sphi 0, %s96
      %s97 = sphi 0, %s94
      %s98 = sphi 0, %s97
      %s114 = sphi 0, %s98
    $region4: #{tpu_custom_call.1} parent=1 // loop_header_branch
      %19 = sbr.rel (%p17) target = $region8
    $region5: #{tpu_custom_call.1} parent=1 // loop_body
      %s21 = ssub.s32 %s16, 1
      %s22 = ssub.s32 %s16, 2
      %s23 = sadd.s32 %s16, 1
      %s24 = ssub.s32 %s16, %s23
      %p25 = scmp.eq.s32.totalorder %s24, 0
      %s27 = sadd.s32 %s26, 1
      %s28 = scalar_select %p25, %s26, %s27
      %p31 = pneg %p25
      %p32 = scmp.eq.s32.totalorder %s16, 1
      %p33 = por %p31, %p32
      %p34 = scmp.ne.s32.totalorder %s26, %s29
      %p35 = scmp.eq.s32.totalorder %s16, 0
      %p36 = por %p34, %p35
      %p37 = scmp.ne.s32.totalorder %s26, %s29
      %p38 = scmp.eq.s32.totalorder %s21, 1
      %p39 = por %p37, %p38
      %p40 = scmp.ne.s32.totalorder %s29, %s30
      %p41 = scmp.eq.s32.totalorder %s21, 0
      %p42 = por %p40, %p41
      %p43 = scmp.ne.s32.totalorder %s29, %s30
      %p44 = scmp.eq.s32.totalorder %s22, 1
      %p45 = por %p43, %p44
      %p47 = scmp.ne.s32.totalorder %s30, %s46
      %p48 = scmp.eq.s32.totalorder %s22, 0
      %p49 = por %p47, %p48
      %s51 = sadd.s32 %s50, 1
      %p54 = scmp.eq.s32.totalorder %s16, 1
      %p55 = scmp.ne.s32.totalorder %s50, %s52
      %p56 = scmp.eq.s32.totalorder %s16, 0
      %p57 = por %p55, %p56
      %p58 = scmp.ne.s32.totalorder %s50, %s52
      %p59 = scmp.eq.s32.totalorder %s21, 1
      %p60 = por %p58, %p59
      %p61 = scmp.ne.s32.totalorder %s52, %s53
      %p62 = scmp.eq.s32.totalorder %s21, 0
      %p63 = por %p61, %p62
      %p64 = scmp.ne.s32.totalorder %s52, %s53
      %p65 = scmp.eq.s32.totalorder %s22, 1
      %p66 = por %p64, %p65
      %p68 = scmp.ne.s32.totalorder %s53, %s67
      %p69 = scmp.eq.s32.totalorder %s22, 0
      %p70 = por %p68, %p69
      %s72 = sadd.s32 %s71, 1
      %p75 = scmp.eq.s32.totalorder %s16, 1
      %p76 = scmp.ne.s32.totalorder %s71, %s73
      %p77 = scmp.eq.s32.totalorder %s16, 0
      %p78 = por %p76, %p77
      %p79 = scmp.ne.s32.totalorder %s71, %s73
      %p80 = scmp.eq.s32.totalorder %s21, 1
      %p81 = por %p79, %p80
      %p82 = scmp.ne.s32.totalorder %s73, %s74
      %p83 = scmp.eq.s32.totalorder %s21, 0
      %p84 = por %p82, %p83
      %p85 = scmp.ne.s32.totalorder %s73, %s74
      %p86 = scmp.eq.s32.totalorder %s22, 1
      %p87 = por %p85, %p86
      %p89 = scmp.ne.s32.totalorder %s74, %s88
      %p90 = scmp.eq.s32.totalorder %s22, 0
      %p91 = por %p89, %p90
      %s92 = ssub.s32 %s16, %s23
      %p93 = scmp.eq.s32.totalorder %s92, 0
      %s95 = sadd.s32 %s94, 1
      %s96 = scalar_select %p93, %s94, %s95
      %p99 = pneg %p93
      %p100 = scmp.eq.s32.totalorder %s16, 1
      %p101 = por %p99, %p100
      %p102 = scmp.ne.s32.totalorder %s94, %s97
      %p103 = scmp.eq.s32.totalorder %s16, 0
      %p104 = por %p102, %p103
      %p105 = scmp.ne.s32.totalorder %s94, %s97
      %p106 = scmp.eq.s32.totalorder %s21, 1
      %p107 = por %p105, %p106
      %p108 = scmp.ne.s32.totalorder %s97, %s98
      %p109 = scmp.eq.s32.totalorder %s21, 0
      %p110 = por %p108, %p109
      %p111 = scmp.ne.s32.totalorder %s97, %s98
      %p112 = scmp.eq.s32.totalorder %s22, 1
      %p113 = por %p111, %p112
      %p115 = scmp.ne.s32.totalorder %s98, %s114
      %p116 = scmp.eq.s32.totalorder %s22, 0
      %p117 = por %p115, %p116
      %p118 = scmp.le.s32.totalorder 1, %s16
      %p119 = scmp.lt.s32.totalorder %s16, 3
      %p120 = pnand %p118, %p119
      %p121 = pneg %p120
      // Predicated region
      $region9: #{tpu_custom_call.1} parent=5 // pred_check
        _
      $region10: #{tpu_custom_call.1} parent=5 // pred_check_branch
        %123 = sbr.rel (%p120) target = $region12
      $region11: #{tpu_custom_call.1} parent=5 // pred_region
        %s124 = ssub.s32 %s16, 1
        // Predicated region
        $region13: #{tpu_custom_call.1} parent=11 // pred_check
          %p125 = pneg %p63
        $region14: #{tpu_custom_call.1} parent=11 // pred_check_branch
          %127 = sbr.rel (%p125) target = $region16
        $region15: #{tpu_custom_call.1} parent=11 // pred_region
          %s129 = ssub.s32 9216, 9216
          %130 = vsyncadd [#allocation8], %s129
          %s131 = sshll.u32 [#allocation7], 4
          %s132 = int_to_ptr.vmem [resolvable:$true] %s131
          %137 = dma.hbm_to_vmem [thread:$0]  %s1, 9216, %s132, [#allocation8], 64, 64, 4
        $region16: #{tpu_custom_call.1} parent=11 // pred_fallthru
          _
        // Predicated region
        $region17: #{tpu_custom_call.1} parent=11 // pred_check
          %p138 = pneg %p84
        $region18: #{tpu_custom_call.1} parent=11 // pred_check_branch
          %140 = sbr.rel (%p138) target = $region20
        $region19: #{tpu_custom_call.1} parent=11 // pred_region
          _
        $region20: #{tpu_custom_call.1} parent=11 // pred_fallthru
          _
      $region12: #{tpu_custom_call.1} parent=5 // pred_fallthru
        _
      %p141 = scmp.lt.s32.totalorder %s16, 2
      // Predicated region
      $region21: #{tpu_custom_call.1} parent=5 // pred_check
        %p142 = pneg %p141
      $region22: #{tpu_custom_call.1} parent=5 // pred_check_branch
        %144 = sbr.rel (%p142) target = $region24
      $region23: #{tpu_custom_call.1} parent=5 // pred_region
        // Predicated region
        $region25: #{tpu_custom_call.1} parent=23 // pred_check
          %p145 = pneg %p36
        $region26: #{tpu_custom_call.1} parent=23 // pred_check_branch
          %147 = sbr.rel (%p145) target = $region28
        $region27: #{tpu_custom_call.1} parent=23 // pred_region
          %s148 = sand.u32 %s26, 1
          %s149 = scalar_lea.sflag [#allocation5], %s148
          %s150 = sand.u32 %s26, 1
          %s151 = smul.addr %s150, 128
          %s152 = scalar_lea.vmem [#allocation4], %s151
          %s154 = ssub.s32 2048, 2048
          %155 = vsyncadd %s149, %s154
          %s156 = smul.addr %s16, 32
          %s157 = smul.addr %s156, 64
          %s158 = scalar_lea.hbm %s0, %s157
          %s159 = sshll.u32 %s152, 4
          %s160 = int_to_ptr.vmem [resolvable:$true] %s159
          %165 = dma.hbm_to_vmem [thread:$0]  %s158, 2048, %s160, %s149, 64, 64, 4
        $region28: #{tpu_custom_call.1} parent=23 // pred_fallthru
          _
      $region24: #{tpu_custom_call.1} parent=5 // pred_fallthru
        _
      %p166 = scmp.le.s32.totalorder 1, %s16
      %p167 = scmp.lt.s32.totalorder %s16, 3
      %p168 = pnand %p166, %p167
      %p169 = pneg %p168
      // Predicated region
      $region29: #{tpu_custom_call.1} parent=5 // pred_check
        _
      $region30: #{tpu_custom_call.1} parent=5 // pred_check_branch
        %171 = sbr.rel (%p168) target = $region32
      $region31: #{tpu_custom_call.1} parent=5 // pred_region
        %s172 = ssub.s32 %s16, 1
        %s173 = sand.u32 %s29, 1
        %s174 = scalar_lea.sflag [#allocation5], %s173
        %s175 = sand.u32 %s29, 1
        %s176 = smul.addr %s175, 128
        %s177 = scalar_lea.vmem [#allocation4], %s176
        // Predicated region
        $region33: #{tpu_custom_call.1} parent=31 // pred_check
          %p178 = pneg %p42
        $region34: #{tpu_custom_call.1} parent=31 // pred_check_branch
          %180 = sbr.rel (%p178) target = $region36
        $region35: #{tpu_custom_call.1} parent=31 // pred_region
          %181 = dma.done %s174, 2048
        $region36: #{tpu_custom_call.1} parent=31 // pred_fallthru
          _
        // Predicated region
        $region37: #{tpu_custom_call.1} parent=31 // pred_check
          %p182 = pneg %p63
        $region38: #{tpu_custom_call.1} parent=31 // pred_check_branch
          %184 = sbr.rel (%p182) target = $region40
        $region39: #{tpu_custom_call.1} parent=31 // pred_region
          %185 = dma.done [#allocation8], 9216
        $region40: #{tpu_custom_call.1} parent=31 // pred_fallthru
          _
        %s186 = sand.u32 %s29, 1
        %s187 = scalar_lea.sflag [#allocation5], %s186
        %s188 = sand.u32 %s29, 1
        %s189 = smul.addr %s188, 128
        %s190 = scalar_lea.vmem [#allocation4], %s189
        %p191 = pneg %p42
        %p192 = pneg %p39
        %p193 = pneg %p63
        %p194 = pneg %p60
        %p195 = pneg %p84
        %p196 = pneg %p81
        %p197 = pneg %p110
        %p198 = pneg %p107
        %s199 = sand.u32 %s97, 1
        %s200 = scalar_lea.sflag [#allocation6], %s199
        %s201 = sand.u32 %s97, 1
        %s202 = smul.addr %s201, 32
        %s203 = scalar_lea.vmem [#allocation9], %s202
        %p205 = scmp.eq.s32.totalorder %s21, 0
        // Predicated region
        $region41: #{tpu_custom_call.1} parent=31 // pred_check
          %p206 = pneg %p205
        $region42: #{tpu_custom_call.1} parent=31 // pred_check_branch
          %208 = sbr.rel (%p206) target = $region44
        $region43: #{tpu_custom_call.1} parent=31 // pred_region
          %209 = vst [vmem:[#allocation2] sm:$0xf] 0
          %210 = vst [vmem:[#allocation2 + $0x4] sm:$0xf] 0
          %211 = vst [vmem:[#allocation2 + $0x8] sm:$0x1] 0
          %212 = vst [vmem:[#allocation2 + $0xc] sm:$0xf] 0
          %213 = vst [vmem:[#allocation2 + $0x10] sm:$0xf] 0
          %214 = vst [vmem:[#allocation2 + $0x14] sm:$0x1] 0
          %215 = vst [vmem:[#allocation2 + $0x18] sm:$0xf] 0
          %216 = vst [vmem:[#allocation2 + $0x1c] sm:$0xf] 0
          %217 = vst [vmem:[#allocation2 + $0x20] sm:$0x1] 0
          %218 = vst [vmem:[#allocation2 + $0x24] sm:$0xf] 0
          %219 = vst [vmem:[#allocation2 + $0x28] sm:$0xf] 0
          %220 = vst [vmem:[#allocation2 + $0x2c] sm:$0x1] 0
          %221 = vst [vmem:[#allocation2 + $0x30] sm:$0xf] 0
          %222 = vst [vmem:[#allocation2 + $0x34] sm:$0xf] 0
          %223 = vst [vmem:[#allocation2 + $0x38] sm:$0x1] 0
          %224 = vst [vmem:[#allocation2 + $0x3c] sm:$0xf] 0
          %225 = vst [vmem:[#allocation2 + $0x40] sm:$0xf] 0
          %226 = vst [vmem:[#allocation2 + $0x44] sm:$0x1] 0
          %227 = vst [vmem:[#allocation2 + $0x48] sm:$0xf] 0
          %228 = vst [vmem:[#allocation2 + $0x4c] sm:$0xf] 0
          %229 = vst [vmem:[#allocation2 + $0x50] sm:$0x1] 0
          %230 = vst [vmem:[#allocation2 + $0x54] sm:$0xf] 0
          %231 = vst [vmem:[#allocation2 + $0x58] sm:$0xf] 0
          %232 = vst [vmem:[#allocation2 + $0x5c] sm:$0x1] 0
          %233 = vst [vmem:[#allocation2 + $0x60] sm:$0xf] 0
          %234 = vst [vmem:[#allocation2 + $0x64] sm:$0xf] 0
          %235 = vst [vmem:[#allocation2 + $0x68] sm:$0x1] 0
          %236 = vst [vmem:[#allocation2 + $0x6c] sm:$0xf] 0
          %237 = vst [vmem:[#allocation2 + $0x70] sm:$0xf] 0
          %238 = vst [vmem:[#allocation2 + $0x74] sm:$0x1] 0
          %239 = vst [vmem:[#allocation2 + $0x78] sm:$0xf] 0
          %240 = vst [vmem:[#allocation2 + $0x7c] sm:$0xf] 0
          %241 = vst [vmem:[#allocation2 + $0x80] sm:$0x1] 0
          %242 = vst [vmem:[#allocation2 + $0x84] sm:$0xf] 0
          %243 = vst [vmem:[#allocation2 + $0x88] sm:$0xf] 0
          %244 = vst [vmem:[#allocation2 + $0x8c] sm:$0x1] 0
          %245 = vst [vmem:[#allocation2 + $0x90] sm:$0xf] 0
          %246 = vst [vmem:[#allocation2 + $0x94] sm:$0xf] 0
          %247 = vst [vmem:[#allocation2 + $0x98] sm:$0x1] 0
          %248 = vst [vmem:[#allocation2 + $0x9c] sm:$0xf] 0
          %249 = vst [vmem:[#allocation2 + $0xa0] sm:$0xf] 0
          %250 = vst [vmem:[#allocation2 + $0xa4] sm:$0x1] 0
          %251 = vst [vmem:[#allocation2 + $0xa8] sm:$0xf] 0
          %252 = vst [vmem:[#allocation2 + $0xac] sm:$0xf] 0
          %253 = vst [vmem:[#allocation2 + $0xb0] sm:$0x1] 0
          %254 = vst [vmem:[#allocation2 + $0xb4] sm:$0xf] 0
          %255 = vst [vmem:[#allocation2 + $0xb8] sm:$0xf] 0
          %256 = vst [vmem:[#allocation2 + $0xbc] sm:$0x1] 0
          %257 = vst [vmem:[#allocation2 + $0xc0] sm:$0xf] 0
          %258 = vst [vmem:[#allocation2 + $0xc4] sm:$0xf] 0
          %259 = vst [vmem:[#allocation2 + $0xc8] sm:$0x1] 0
          %260 = vst [vmem:[#allocation2 + $0xcc] sm:$0xf] 0
          %261 = vst [vmem:[#allocation2 + $0xd0] sm:$0xf] 0
          %262 = vst [vmem:[#allocation2 + $0xd4] sm:$0x1] 0
        $region44: #{tpu_custom_call.1} parent=31 // pred_fallthru
          _
        %v263 = vld [vmem:[%s177] sm:$0xf]
        %v264 = vld [vmem:[%s177 + $0x4] sm:$0xf]
        %v265 = vld [vmem:[%s177 + $0x8] sm:$0xf]
        %v266 = vld [vmem:[%s177 + $0xc] sm:$0xf]
        %v267 = vld [vmem:[%s177 + $0x10] sm:$0xf]
        %v268 = vld [vmem:[%s177 + $0x14] sm:$0xf]
        %v269 = vld [vmem:[%s177 + $0x18] sm:$0xf]
        %v270 = vld [vmem:[%s177 + $0x1c] sm:$0xf]
        %v271 = vld [vmem:[%s177 + $0x20] sm:$0xf]
        %v272 = vld [vmem:[%s177 + $0x24] sm:$0xf]
        %v273 = vld [vmem:[%s177 + $0x28] sm:$0xf]
        %v274 = vld [vmem:[%s177 + $0x2c] sm:$0xf]
        %v275 = vld [vmem:[%s177 + $0x30] sm:$0xf]
        %v276 = vld [vmem:[%s177 + $0x34] sm:$0xf]
        %v277 = vld [vmem:[%s177 + $0x38] sm:$0xf]
        %v278 = vld [vmem:[%s177 + $0x3c] sm:$0xf]
        %v279 = vld [vmem:[%s177 + $0x40] sm:$0xf]
        %v280 = vld [vmem:[%s177 + $0x44] sm:$0xf]
        %v281 = vld [vmem:[%s177 + $0x48] sm:$0xf]
        %v282 = vld [vmem:[%s177 + $0x4c] sm:$0xf]
        %v283 = vld [vmem:[%s177 + $0x50] sm:$0xf]
        %v284 = vld [vmem:[%s177 + $0x54] sm:$0xf]
        %v285 = vld [vmem:[%s177 + $0x58] sm:$0xf]
        %v286 = vld [vmem:[%s177 + $0x5c] sm:$0xf]
        %v287 = vld [vmem:[%s177 + $0x60] sm:$0xf]
        %v288 = vld [vmem:[%s177 + $0x64] sm:$0xf]
        %v289 = vld [vmem:[%s177 + $0x68] sm:$0xf]
        %v290 = vld [vmem:[%s177 + $0x6c] sm:$0xf]
        %v291 = vld [vmem:[%s177 + $0x70] sm:$0xf]
        %v292 = vld [vmem:[%s177 + $0x74] sm:$0xf]
        %v293 = vld [vmem:[%s177 + $0x78] sm:$0xf]
        %v294 = vld [vmem:[%s177 + $0x7c] sm:$0xf]
        %vm295 = vsmask.f32 256
        %vm296 = vsmask.f32 4368
        %vm297 = vmor %vm295, %vm296
        %v299 = vshrl.u32 %v263, 16
        %v301 = vrot.slane %v299, 7
        %v302 = vshll.u32 %v263, 16
        %v304 = vor.u32 %v301, %v302
        %v305 = vrot.slane %v301, 4
        %v307 = vshrl.u32 %v264, 16
        %v309 = vrot.slane %v307, 7
        %v310 = vshll.u32 %v264, 16
        %v312 = vor.u32 %v309, %v310
        %v313 = vsel %vm297, %v305, %v312
        %v314 = vrot.slane %v309, 4
        %v316 = vshrl.u32 %v265, 16
        %v318 = vrot.slane %v316, 7
        %v319 = vshll.u32 %v265, 16
        %v321 = vor.u32 %v318, %v319
        %v322 = vrot.slane %v318, 4
        %v324 = vshrl.u32 %v266, 16
        %v326 = vrot.slane %v324, 7
        %v327 = vshll.u32 %v266, 16
        %v329 = vor.u32 %v326, %v327
        %v330 = vsel %vm297, %v322, %v329
        %v331 = vrot.slane %v326, 4
        %v333 = vshrl.u32 %v267, 16
        %v335 = vrot.slane %v333, 7
        %v336 = vshll.u32 %v267, 16
        %v338 = vor.u32 %v335, %v336
        %v339 = vrot.slane %v335, 4
        %v341 = vshrl.u32 %v268, 16
        %v343 = vrot.slane %v341, 7
        %v344 = vshll.u32 %v268, 16
        %v346 = vor.u32 %v343, %v344
        %v347 = vsel %vm297, %v339, %v346
        %v348 = vrot.slane %v343, 4
        %v350 = vshrl.u32 %v269, 16
        %v352 = vrot.slane %v350, 7
        %v353 = vshll.u32 %v269, 16
        %v355 = vor.u32 %v352, %v353
        %v356 = vrot.slane %v352, 4
        %v358 = vshrl.u32 %v270, 16
        %v360 = vrot.slane %v358, 7
        %v361 = vshll.u32 %v270, 16
        %v363 = vor.u32 %v360, %v361
        %v364 = vsel %vm297, %v356, %v363
        %v365 = vrot.slane %v360, 4
        %v367 = vshrl.u32 %v271, 16
        %v369 = vrot.slane %v367, 7
        %v370 = vshll.u32 %v271, 16
        %v372 = vor.u32 %v369, %v370
        %v373 = vrot.slane %v369, 4
        %v375 = vshrl.u32 %v272, 16
        %v377 = vrot.slane %v375, 7
        %v378 = vshll.u32 %v272, 16
        %v380 = vor.u32 %v377, %v378
        %v381 = vsel %vm297, %v373, %v380
        %v382 = vrot.slane %v377, 4
        %v384 = vshrl.u32 %v273, 16
        %v386 = vrot.slane %v384, 7
        %v387 = vshll.u32 %v273, 16
        %v389 = vor.u32 %v386, %v387
        %v390 = vrot.slane %v386, 4
        %v392 = vshrl.u32 %v274, 16
        %v394 = vrot.slane %v392, 7
        %v395 = vshll.u32 %v274, 16
        %v397 = vor.u32 %v394, %v395
        %v398 = vsel %vm297, %v390, %v397
        %v399 = vrot.slane %v394, 4
        %v401 = vshrl.u32 %v275, 16
        %v403 = vrot.slane %v401, 7
        %v404 = vshll.u32 %v275, 16
        %v406 = vor.u32 %v403, %v404
        %v407 = vrot.slane %v403, 4
        %v409 = vshrl.u32 %v276, 16
        %v411 = vrot.slane %v409, 7
        %v412 = vshll.u32 %v276, 16
        %v414 = vor.u32 %v411, %v412
        %v415 = vsel %vm297, %v407, %v414
        %v416 = vrot.slane %v411, 4
        %v418 = vshrl.u32 %v277, 16
        %v420 = vrot.slane %v418, 7
        %v421 = vshll.u32 %v277, 16
        %v423 = vor.u32 %v420, %v421
        %v424 = vrot.slane %v420, 4
        %v426 = vshrl.u32 %v278, 16
        %v428 = vrot.slane %v426, 7
        %v429 = vshll.u32 %v278, 16
        %v431 = vor.u32 %v428, %v429
        %v432 = vsel %vm297, %v424, %v431
        %v433 = vrot.slane %v428, 4
        %v435 = vshrl.u32 %v279, 16
        %v437 = vrot.slane %v435, 7
        %v438 = vshll.u32 %v279, 16
        %v440 = vor.u32 %v437, %v438
        %v441 = vrot.slane %v437, 4
        %v443 = vshrl.u32 %v280, 16
        %v445 = vrot.slane %v443, 7
        %v446 = vshll.u32 %v280, 16
        %v448 = vor.u32 %v445, %v446
        %v449 = vsel %vm297, %v441, %v448
        %v450 = vrot.slane %v445, 4
        %v452 = vshrl.u32 %v281, 16
        %v454 = vrot.slane %v452, 7
        %v455 = vshll.u32 %v281, 16
        %v457 = vor.u32 %v454, %v455
        %v458 = vrot.slane %v454, 4
        %v460 = vshrl.u32 %v282, 16
        %v462 = vrot.slane %v460, 7
        %v463 = vshll.u32 %v282, 16
        %v465 = vor.u32 %v462, %v463
        %v466 = vsel %vm297, %v458, %v465
        %v467 = vrot.slane %v462, 4
        %v469 = vshrl.u32 %v283, 16
        %v471 = vrot.slane %v469, 7
        %v472 = vshll.u32 %v283, 16
        %v474 = vor.u32 %v471, %v472
        %v475 = vrot.slane %v471, 4
        %v477 = vshrl.u32 %v284, 16
        %v479 = vrot.slane %v477, 7
        %v480 = vshll.u32 %v284, 16
        %v482 = vor.u32 %v479, %v480
        %v483 = vsel %vm297, %v475, %v482
        %v484 = vrot.slane %v479, 4
        %v486 = vshrl.u32 %v285, 16
        %v488 = vrot.slane %v486, 7
        %v489 = vshll.u32 %v285, 16
        %v491 = vor.u32 %v488, %v489
        %v492 = vrot.slane %v488, 4
        %v494 = vshrl.u32 %v286, 16
        %v496 = vrot.slane %v494, 7
        %v497 = vshll.u32 %v286, 16
        %v499 = vor.u32 %v496, %v497
        %v500 = vsel %vm297, %v492, %v499
        %v501 = vrot.slane %v496, 4
        %v503 = vshrl.u32 %v287, 16
        %v505 = vrot.slane %v503, 7
        %v506 = vshll.u32 %v287, 16
        %v508 = vor.u32 %v505, %v506
        %v509 = vrot.slane %v505, 4
        %v511 = vshrl.u32 %v288, 16
        %v513 = vrot.slane %v511, 7
        %v514 = vshll.u32 %v288, 16
        %v516 = vor.u32 %v513, %v514
        %v517 = vsel %vm297, %v509, %v516
        %v518 = vrot.slane %v513, 4
        %v520 = vshrl.u32 %v289, 16
        %v522 = vrot.slane %v520, 7
        %v523 = vshll.u32 %v289, 16
        %v525 = vor.u32 %v522, %v523
        %v526 = vrot.slane %v522, 4
        %v528 = vshrl.u32 %v290, 16
        %v530 = vrot.slane %v528, 7
        %v531 = vshll.u32 %v290, 16
        %v533 = vor.u32 %v530, %v531
        %v534 = vsel %vm297, %v526, %v533
        %v535 = vrot.slane %v530, 4
        %v537 = vshrl.u32 %v291, 16
        %v539 = vrot.slane %v537, 7
        %v540 = vshll.u32 %v291, 16
        %v542 = vor.u32 %v539, %v540
        %v543 = vrot.slane %v539, 4
        %v545 = vshrl.u32 %v292, 16
        %v547 = vrot.slane %v545, 7
        %v548 = vshll.u32 %v292, 16
        %v550 = vor.u32 %v547, %v548
        %v551 = vsel %vm297, %v543, %v550
        %v552 = vrot.slane %v547, 4
        %v554 = vshrl.u32 %v293, 16
        %v556 = vrot.slane %v554, 7
        %v557 = vshll.u32 %v293, 16
        %v559 = vor.u32 %v556, %v557
        %v560 = vrot.slane %v556, 4
        %v562 = vshrl.u32 %v294, 16
        %v564 = vrot.slane %v562, 7
        %v565 = vshll.u32 %v294, 16
        %v567 = vor.u32 %v564, %v565
        %v568 = vsel %vm297, %v560, %v567
        %v569 = vrot.slane %v564, 4
        %s618 = scalar_lea.vmem [#allocation2], 12
        %vm619 = vcmask 1043456
        %vm620 = vsmask.f32 7938
        %vm621 = vmand %vm619, %vm620
        %v622 = vld [vmem:[%s618] sm:$0xf]
        %v623 = vsel %vm621, %v304, %v622
        %624 = vst [vmem:[%s618] sm:$0xf] %v623
        %625 = vst [vmem:[%s618 + $0x4] sm:$0xf] %v313
        %vm626 = vcmask 1040384
        %vm627 = vmand %vm626, %vm295
        %v628 = vld [vmem:[%s618 + $0x8] sm:$0x1]
        %v629 = vsel %vm627, %v314, %v628
        %630 = vst [vmem:[%s618 + $0x8] sm:$0x1] %v629
        %v631 = vld [vmem:[%s618 + $0xc] sm:$0xf]
        %v632 = vsel %vm621, %v321, %v631
        %633 = vst [vmem:[%s618 + $0xc] sm:$0xf] %v632
        %634 = vst [vmem:[%s618 + $0x10] sm:$0xf] %v330
        %v635 = vld [vmem:[%s618 + $0x14] sm:$0x1]
        %v636 = vsel %vm627, %v331, %v635
        %637 = vst [vmem:[%s618 + $0x14] sm:$0x1] %v636
        %v638 = vld [vmem:[%s618 + $0x18] sm:$0xf]
        %v639 = vsel %vm621, %v338, %v638
        %640 = vst [vmem:[%s618 + $0x18] sm:$0xf] %v639
        %641 = vst [vmem:[%s618 + $0x1c] sm:$0xf] %v347
        %v642 = vld [vmem:[%s618 + $0x20] sm:$0x1]
        %v643 = vsel %vm627, %v348, %v642
        %644 = vst [vmem:[%s618 + $0x20] sm:$0x1] %v643
        %v645 = vld [vmem:[%s618 + $0x24] sm:$0xf]
        %v646 = vsel %vm621, %v355, %v645
        %647 = vst [vmem:[%s618 + $0x24] sm:$0xf] %v646
        %648 = vst [vmem:[%s618 + $0x28] sm:$0xf] %v364
        %v649 = vld [vmem:[%s618 + $0x2c] sm:$0x1]
        %v650 = vsel %vm627, %v365, %v649
        %651 = vst [vmem:[%s618 + $0x2c] sm:$0x1] %v650
        %v652 = vld [vmem:[%s618 + $0x30] sm:$0xf]
        %v653 = vsel %vm621, %v372, %v652
        %654 = vst [vmem:[%s618 + $0x30] sm:$0xf] %v653
        %655 = vst [vmem:[%s618 + $0x34] sm:$0xf] %v381
        %v656 = vld [vmem:[%s618 + $0x38] sm:$0x1]
        %v657 = vsel %vm627, %v382, %v656
        %658 = vst [vmem:[%s618 + $0x38] sm:$0x1] %v657
        %v659 = vld [vmem:[%s618 + $0x3c] sm:$0xf]
        %v660 = vsel %vm621, %v389, %v659
        %661 = vst [vmem:[%s618 + $0x3c] sm:$0xf] %v660
        %662 = vst [vmem:[%s618 + $0x40] sm:$0xf] %v398
        %v663 = vld [vmem:[%s618 + $0x44] sm:$0x1]
        %v664 = vsel %vm627, %v399, %v663
        %665 = vst [vmem:[%s618 + $0x44] sm:$0x1] %v664
        %v666 = vld [vmem:[%s618 + $0x48] sm:$0xf]
        %v667 = vsel %vm621, %v406, %v666
        %668 = vst [vmem:[%s618 + $0x48] sm:$0xf] %v667
        %669 = vst [vmem:[%s618 + $0x4c] sm:$0xf] %v415
        %v670 = vld [vmem:[%s618 + $0x50] sm:$0x1]
        %v671 = vsel %vm627, %v416, %v670
        %672 = vst [vmem:[%s618 + $0x50] sm:$0x1] %v671
        %v673 = vld [vmem:[%s618 + $0x54] sm:$0xf]
        %v674 = vsel %vm621, %v423, %v673
        %675 = vst [vmem:[%s618 + $0x54] sm:$0xf] %v674
        %676 = vst [vmem:[%s618 + $0x58] sm:$0xf] %v432
        %v677 = vld [vmem:[%s618 + $0x5c] sm:$0x1]
        %v678 = vsel %vm627, %v433, %v677
        %679 = vst [vmem:[%s618 + $0x5c] sm:$0x1] %v678
        %v680 = vld [vmem:[%s618 + $0x60] sm:$0xf]
        %v681 = vsel %vm621, %v440, %v680
        %682 = vst [vmem:[%s618 + $0x60] sm:$0xf] %v681
        %683 = vst [vmem:[%s618 + $0x64] sm:$0xf] %v449
        %v684 = vld [vmem:[%s618 + $0x68] sm:$0x1]
        %v685 = vsel %vm627, %v450, %v684
        %686 = vst [vmem:[%s618 + $0x68] sm:$0x1] %v685
        %v687 = vld [vmem:[%s618 + $0x6c] sm:$0xf]
        %v688 = vsel %vm621, %v457, %v687
        %689 = vst [vmem:[%s618 + $0x6c] sm:$0xf] %v688
        %690 = vst [vmem:[%s618 + $0x70] sm:$0xf] %v466
        %v691 = vld [vmem:[%s618 + $0x74] sm:$0x1]
        %v692 = vsel %vm627, %v467, %v691
        %693 = vst [vmem:[%s618 + $0x74] sm:$0x1] %v692
        %v694 = vld [vmem:[%s618 + $0x78] sm:$0xf]
        %v695 = vsel %vm621, %v474, %v694
        %696 = vst [vmem:[%s618 + $0x78] sm:$0xf] %v695
        %697 = vst [vmem:[%s618 + $0x7c] sm:$0xf] %v483
        %v698 = vld [vmem:[%s618 + $0x80] sm:$0x1]
        %v699 = vsel %vm627, %v484, %v698
        %700 = vst [vmem:[%s618 + $0x80] sm:$0x1] %v699
        %v701 = vld [vmem:[%s618 + $0x84] sm:$0xf]
        %v702 = vsel %vm621, %v491, %v701
        %703 = vst [vmem:[%s618 + $0x84] sm:$0xf] %v702
        %704 = vst [vmem:[%s618 + $0x88] sm:$0xf] %v500
        %v705 = vld [vmem:[%s618 + $0x8c] sm:$0x1]
        %v706 = vsel %vm627, %v501, %v705
        %707 = vst [vmem:[%s618 + $0x8c] sm:$0x1] %v706
        %v708 = vld [vmem:[%s618 + $0x90] sm:$0xf]
        %v709 = vsel %vm621, %v508, %v708
        %710 = vst [vmem:[%s618 + $0x90] sm:$0xf] %v709
        %711 = vst [vmem:[%s618 + $0x94] sm:$0xf] %v517
        %v712 = vld [vmem:[%s618 + $0x98] sm:$0x1]
        %v713 = vsel %vm627, %v518, %v712
        %714 = vst [vmem:[%s618 + $0x98] sm:$0x1] %v713
        %v715 = vld [vmem:[%s618 + $0x9c] sm:$0xf]
        %v716 = vsel %vm621, %v525, %v715
        %717 = vst [vmem:[%s618 + $0x9c] sm:$0xf] %v716
        %718 = vst [vmem:[%s618 + $0xa0] sm:$0xf] %v534
        %v719 = vld [vmem:[%s618 + $0xa4] sm:$0x1]
        %v720 = vsel %vm627, %v535, %v719
        %721 = vst [vmem:[%s618 + $0xa4] sm:$0x1] %v720
        %v722 = vld [vmem:[%s618 + $0xa8] sm:$0xf]
        %v723 = vsel %vm621, %v542, %v722
        %724 = vst [vmem:[%s618 + $0xa8] sm:$0xf] %v723
        %725 = vst [vmem:[%s618 + $0xac] sm:$0xf] %v551
        %v726 = vld [vmem:[%s618 + $0xb0] sm:$0x1]
        %v727 = vsel %vm627, %v552, %v726
        %728 = vst [vmem:[%s618 + $0xb0] sm:$0x1] %v727
        %v729 = vld [vmem:[%s618 + $0xb4] sm:$0xf]
        %v730 = vsel %vm621, %v559, %v729
        %731 = vst [vmem:[%s618 + $0xb4] sm:$0xf] %v730
        %732 = vst [vmem:[%s618 + $0xb8] sm:$0xf] %v568
        %v733 = vld [vmem:[%s618 + $0xbc] sm:$0x1]
        %v734 = vsel %vm627, %v569, %v733
        %735 = vst [vmem:[%s618 + $0xbc] sm:$0x1] %v734
        %v736 = vld [vmem:[#allocation2] sm:$0xf]
        %v737 = vld [vmem:[#allocation2 + $0x4] sm:$0xf]
        %v738 = vld [vmem:[#allocation2 + $0xc] sm:$0xf]
        %v739 = vld [vmem:[#allocation2 + $0x10] sm:$0xf]
        %v740 = vld [vmem:[#allocation2 + $0x18] sm:$0xf]
        %v741 = vld [vmem:[#allocation2 + $0x1c] sm:$0xf]
        %v742 = vld [vmem:[#allocation2 + $0x24] sm:$0xf]
        %v743 = vld [vmem:[#allocation2 + $0x28] sm:$0xf]
        %v744 = vld [vmem:[#allocation2 + $0x30] sm:$0xf]
        %v745 = vld [vmem:[#allocation2 + $0x34] sm:$0xf]
        %v746 = vld [vmem:[#allocation2 + $0x3c] sm:$0xf]
        %v747 = vld [vmem:[#allocation2 + $0x40] sm:$0xf]
        %v748 = vld [vmem:[#allocation2 + $0x48] sm:$0xf]
        %v749 = vld [vmem:[#allocation2 + $0x4c] sm:$0xf]
        %v750 = vld [vmem:[#allocation2 + $0x54] sm:$0xf]
        %v751 = vld [vmem:[#allocation2 + $0x58] sm:$0xf]
        %v752 = vld [vmem:[#allocation2 + $0x60] sm:$0xf]
        %v753 = vld [vmem:[#allocation2 + $0x64] sm:$0xf]
        %v754 = vld [vmem:[#allocation2 + $0x6c] sm:$0xf]
        %v755 = vld [vmem:[#allocation2 + $0x70] sm:$0xf]
        %v756 = vld [vmem:[#allocation2 + $0x78] sm:$0xf]
        %v757 = vld [vmem:[#allocation2 + $0x7c] sm:$0xf]
        %v758 = vld [vmem:[#allocation2 + $0x84] sm:$0xf]
        %v759 = vld [vmem:[#allocation2 + $0x88] sm:$0xf]
        %v760 = vld [vmem:[#allocation2 + $0x90] sm:$0xf]
        %v761 = vld [vmem:[#allocation2 + $0x94] sm:$0xf]
        %v762 = vld [vmem:[#allocation2 + $0x9c] sm:$0xf]
        %v763 = vld [vmem:[#allocation2 + $0xa0] sm:$0xf]
        %v764 = vld [vmem:[#allocation2 + $0xa8] sm:$0xf]
        %v765 = vld [vmem:[#allocation2 + $0xac] sm:$0xf]
        %v766 = vld [vmem:[#allocation2 + $0xb4] sm:$0xf]
        %v767 = vld [vmem:[#allocation2 + $0xb8] sm:$0xf]
        %v800 = vunpack.c.l.b16 %v736
        %v801 = vunpack.c.l.b16 %v737
        %v802 = vunpack.c.l.b16 %v738
        %v803 = vunpack.c.l.b16 %v739
        %v804 = vunpack.c.l.b16 %v740
        %v805 = vunpack.c.l.b16 %v741
        %v806 = vunpack.c.l.b16 %v742
        %v807 = vunpack.c.l.b16 %v743
        %v808 = vunpack.c.l.b16 %v744
        %v809 = vunpack.c.l.b16 %v745
        %v810 = vunpack.c.l.b16 %v746
        %v811 = vunpack.c.l.b16 %v747
        %v812 = vunpack.c.l.b16 %v748
        %v813 = vunpack.c.l.b16 %v749
        %v814 = vunpack.c.l.b16 %v750
        %v815 = vunpack.c.l.b16 %v751
        %v816 = vunpack.c.l.b16 %v752
        %v817 = vunpack.c.l.b16 %v753
        %v818 = vunpack.c.l.b16 %v754
        %v819 = vunpack.c.l.b16 %v755
        %v820 = vunpack.c.l.b16 %v756
        %v821 = vunpack.c.l.b16 %v757
        %v822 = vunpack.c.l.b16 %v758
        %v823 = vunpack.c.l.b16 %v759
        %v824 = vunpack.c.l.b16 %v760
        %v825 = vunpack.c.l.b16 %v761
        %v826 = vunpack.c.l.b16 %v762
        %v827 = vunpack.c.l.b16 %v763
        %v828 = vunpack.c.l.b16 %v764
        %v829 = vunpack.c.l.b16 %v765
        %v830 = vunpack.c.l.b16 %v766
        %v831 = vunpack.c.l.b16 %v767
        %v832 = vpack.c.b16 %v801, %v800
        %v833 = vpack.c.b16 %v803, %v802
        %v834 = vpack.c.b16 %v805, %v804
        %v835 = vpack.c.b16 %v807, %v806
        %v836 = vpack.c.b16 %v809, %v808
        %v837 = vpack.c.b16 %v811, %v810
        %v838 = vpack.c.b16 %v813, %v812
        %v839 = vpack.c.b16 %v815, %v814
        %v840 = vpack.c.b16 %v817, %v816
        %v841 = vpack.c.b16 %v819, %v818
        %v842 = vpack.c.b16 %v821, %v820
        %v843 = vpack.c.b16 %v823, %v822
        %v844 = vpack.c.b16 %v825, %v824
        %v845 = vpack.c.b16 %v827, %v826
        %v846 = vpack.c.b16 %v829, %v828
        %v847 = vpack.c.b16 %v831, %v830
        %864 = vst [vmem:[#allocation3] sm:$0xff] %v832
        %865 = vst [vmem:[#allocation3 + $0x48] sm:$0xff] %v833
        %866 = vst [vmem:[#allocation3 + $0x90] sm:$0xff] %v834
        %867 = vst [vmem:[#allocation3 + $0xd8] sm:$0xff] %v835
        %868 = vst [vmem:[#allocation3 + $0x120] sm:$0xff] %v836
        %869 = vst [vmem:[#allocation3 + $0x168] sm:$0xff] %v837
        %870 = vst [vmem:[#allocation3 + $0x1b0] sm:$0xff] %v838
        %871 = vst [vmem:[#allocation3 + $0x1f8] sm:$0xff] %v839
        %872 = vst [vmem:[#allocation3 + $0x240] sm:$0xff] %v840
        %873 = vst [vmem:[#allocation3 + $0x288] sm:$0xff] %v841
        %874 = vst [vmem:[#allocation3 + $0x2d0] sm:$0xff] %v842
        %875 = vst [vmem:[#allocation3 + $0x318] sm:$0xff] %v843
        %876 = vst [vmem:[#allocation3 + $0x360] sm:$0xff] %v844
        %877 = vst [vmem:[#allocation3 + $0x3a8] sm:$0xff] %v845
        %878 = vst [vmem:[#allocation3 + $0x3f0] sm:$0xff] %v846
        %879 = vst [vmem:[#allocation3 + $0x438] sm:$0xff] %v847
        %v880 = vld [vmem:[#allocation2] sm:$0xf]
        %v881 = vld [vmem:[#allocation2 + $0x4] sm:$0xf]
        %v882 = vld [vmem:[#allocation2 + $0x8] sm:$0x1]
        %v883 = vld [vmem:[#allocation2 + $0xc] sm:$0xf]
        %v884 = vld [vmem:[#allocation2 + $0x10] sm:$0xf]
        %v885 = vld [vmem:[#allocation2 + $0x14] sm:$0x1]
        %v886 = vld [vmem:[#allocation2 + $0x18] sm:$0xf]
        %v887 = vld [vmem:[#allocation2 + $0x1c] sm:$0xf]
        %v888 = vld [vmem:[#allocation2 + $0x20] sm:$0x1]
        %v889 = vld [vmem:[#allocation2 + $0x24] sm:$0xf]
        %v890 = vld [vmem:[#allocation2 + $0x28] sm:$0xf]
        %v891 = vld [vmem:[#allocation2 + $0x2c] sm:$0x1]
        %v892 = vld [vmem:[#allocation2 + $0x30] sm:$0xf]
        %v893 = vld [vmem:[#allocation2 + $0x34] sm:$0xf]
        %v894 = vld [vmem:[#allocation2 + $0x38] sm:$0x1]
        %v895 = vld [vmem:[#allocation2 + $0x3c] sm:$0xf]
        %v896 = vld [vmem:[#allocation2 + $0x40] sm:$0xf]
        %v897 = vld [vmem:[#allocation2 + $0x44] sm:$0x1]
        %v898 = vld [vmem:[#allocation2 + $0x48] sm:$0xf]
        %v899 = vld [vmem:[#allocation2 + $0x4c] sm:$0xf]
        %v900 = vld [vmem:[#allocation2 + $0x50] sm:$0x1]
        %v901 = vld [vmem:[#allocation2 + $0x54] sm:$0xf]
        %v902 = vld [vmem:[#allocation2 + $0x58] sm:$0xf]
        %v903 = vld [vmem:[#allocation2 + $0x5c] sm:$0x1]
        %v904 = vld [vmem:[#allocation2 + $0x60] sm:$0xf]
        %v905 = vld [vmem:[#allocation2 + $0x64] sm:$0xf]
        %v906 = vld [vmem:[#allocation2 + $0x68] sm:$0x1]
        %v907 = vld [vmem:[#allocation2 + $0x6c] sm:$0xf]
        %v908 = vld [vmem:[#allocation2 + $0x70] sm:$0xf]
        %v909 = vld [vmem:[#allocation2 + $0x74] sm:$0x1]
        %v910 = vld [vmem:[#allocation2 + $0x78] sm:$0xf]
        %v911 = vld [vmem:[#allocation2 + $0x7c] sm:$0xf]
        %v912 = vld [vmem:[#allocation2 + $0x80] sm:$0x1]
        %v913 = vld [vmem:[#allocation2 + $0x84] sm:$0xf]
        %v914 = vld [vmem:[#allocation2 + $0x88] sm:$0xf]
        %v915 = vld [vmem:[#allocation2 + $0x8c] sm:$0x1]
        %v916 = vld [vmem:[#allocation2 + $0x90] sm:$0xf]
        %v917 = vld [vmem:[#allocation2 + $0x94] sm:$0xf]
        %v918 = vld [vmem:[#allocation2 + $0x98] sm:$0x1]
        %v919 = vld [vmem:[#allocation2 + $0x9c] sm:$0xf]
        %v920 = vld [vmem:[#allocation2 + $0xa0] sm:$0xf]
        %v921 = vld [vmem:[#allocation2 + $0xa4] sm:$0x1]
        %v922 = vld [vmem:[#allocation2 + $0xa8] sm:$0xf]
        %v923 = vld [vmem:[#allocation2 + $0xac] sm:$0xf]
        %v924 = vld [vmem:[#allocation2 + $0xb0] sm:$0x1]
        %v925 = vld [vmem:[#allocation2 + $0xb4] sm:$0xf]
        %v926 = vld [vmem:[#allocation2 + $0xb8] sm:$0xf]
        %v927 = vld [vmem:[#allocation2 + $0xbc] sm:$0x1]
        %vm928 = vsmask.f32 3328
        %vm929 = vsmask.f32 7440
        %vm930 = vmor %vm928, %vm929
        %v932 = vshrl.u32 %v880, 16
        %v934 = vrot.slane %v932, 4
        %v935 = vshll.u32 %v880, 16
        %v937 = vrot.slane %v935, 5
        %v938 = vor.u32 %v934, %v937
        %v939 = vrot.slane %v938, 4
        %v941 = vshll.u32 %v881, 16
        %v943 = vrot.slane %v941, 5
        %v944 = vsel %vm930, %v939, %v943
        %v945 = vshrl.u32 %v881, 16
        %v947 = vrot.slane %v945, 4
        %v948 = vor.u32 %v947, %v943
        %v949 = vrot.slane %v948, 4
        %v951 = vshll.u32 %v882, 16
        %v953 = vrot.slane %v951, 5
        %v954 = vsel %vm930, %v949, %v953
        %v956 = vshrl.u32 %v883, 16
        %v958 = vrot.slane %v956, 4
        %v959 = vshll.u32 %v883, 16
        %v961 = vrot.slane %v959, 5
        %v962 = vor.u32 %v958, %v961
        %v963 = vrot.slane %v962, 4
        %v965 = vshll.u32 %v884, 16
        %v967 = vrot.slane %v965, 5
        %v968 = vsel %vm930, %v963, %v967
        %v969 = vshrl.u32 %v884, 16
        %v971 = vrot.slane %v969, 4
        %v972 = vor.u32 %v971, %v967
        %v973 = vrot.slane %v972, 4
        %v975 = vshll.u32 %v885, 16
        %v977 = vrot.slane %v975, 5
        %v978 = vsel %vm930, %v973, %v977
        %v980 = vshrl.u32 %v886, 16
        %v982 = vrot.slane %v980, 4
        %v983 = vshll.u32 %v886, 16
        %v985 = vrot.slane %v983, 5
        %v986 = vor.u32 %v982, %v985
        %v987 = vrot.slane %v986, 4
        %v989 = vshll.u32 %v887, 16
        %v991 = vrot.slane %v989, 5
        %v992 = vsel %vm930, %v987, %v991
        %v993 = vshrl.u32 %v887, 16
        %v995 = vrot.slane %v993, 4
        %v996 = vor.u32 %v995, %v991
        %v997 = vrot.slane %v996, 4
        %v999 = vshll.u32 %v888, 16
        %v1001 = vrot.slane %v999, 5
        %v1002 = vsel %vm930, %v997, %v1001
        %v1004 = vshrl.u32 %v889, 16
        %v1006 = vrot.slane %v1004, 4
        %v1007 = vshll.u32 %v889, 16
        %v1009 = vrot.slane %v1007, 5
        %v1010 = vor.u32 %v1006, %v1009
        %v1011 = vrot.slane %v1010, 4
        %v1013 = vshll.u32 %v890, 16
        %v1015 = vrot.slane %v1013, 5
        %v1016 = vsel %vm930, %v1011, %v1015
        %v1017 = vshrl.u32 %v890, 16
        %v1019 = vrot.slane %v1017, 4
        %v1020 = vor.u32 %v1019, %v1015
        %v1021 = vrot.slane %v1020, 4
        %v1023 = vshll.u32 %v891, 16
        %v1025 = vrot.slane %v1023, 5
        %v1026 = vsel %vm930, %v1021, %v1025
        %v1028 = vshrl.u32 %v892, 16
        %v1030 = vrot.slane %v1028, 4
        %v1031 = vshll.u32 %v892, 16
        %v1033 = vrot.slane %v1031, 5
        %v1034 = vor.u32 %v1030, %v1033
        %v1035 = vrot.slane %v1034, 4
        %v1037 = vshll.u32 %v893, 16
        %v1039 = vrot.slane %v1037, 5
        %v1040 = vsel %vm930, %v1035, %v1039
        %v1041 = vshrl.u32 %v893, 16
        %v1043 = vrot.slane %v1041, 4
        %v1044 = vor.u32 %v1043, %v1039
        %v1045 = vrot.slane %v1044, 4
        %v1047 = vshll.u32 %v894, 16
        %v1049 = vrot.slane %v1047, 5
        %v1050 = vsel %vm930, %v1045, %v1049
        %v1052 = vshrl.u32 %v895, 16
        %v1054 = vrot.slane %v1052, 4
        %v1055 = vshll.u32 %v895, 16
        %v1057 = vrot.slane %v1055, 5
        %v1058 = vor.u32 %v1054, %v1057
        %v1059 = vrot.slane %v1058, 4
        %v1061 = vshll.u32 %v896, 16
        %v1063 = vrot.slane %v1061, 5
        %v1064 = vsel %vm930, %v1059, %v1063
        %v1065 = vshrl.u32 %v896, 16
        %v1067 = vrot.slane %v1065, 4
        %v1068 = vor.u32 %v1067, %v1063
        %v1069 = vrot.slane %v1068, 4
        %v1071 = vshll.u32 %v897, 16
        %v1073 = vrot.slane %v1071, 5
        %v1074 = vsel %vm930, %v1069, %v1073
        %v1076 = vshrl.u32 %v898, 16
        %v1078 = vrot.slane %v1076, 4
        %v1079 = vshll.u32 %v898, 16
        %v1081 = vrot.slane %v1079, 5
        %v1082 = vor.u32 %v1078, %v1081
        %v1083 = vrot.slane %v1082, 4
        %v1085 = vshll.u32 %v899, 16
        %v1087 = vrot.slane %v1085, 5
        %v1088 = vsel %vm930, %v1083, %v1087
        %v1089 = vshrl.u32 %v899, 16
        %v1091 = vrot.slane %v1089, 4
        %v1092 = vor.u32 %v1091, %v1087
        %v1093 = vrot.slane %v1092, 4
        %v1095 = vshll.u32 %v900, 16
        %v1097 = vrot.slane %v1095, 5
        %v1098 = vsel %vm930, %v1093, %v1097
        %v1100 = vshrl.u32 %v901, 16
        %v1102 = vrot.slane %v1100, 4
        %v1103 = vshll.u32 %v901, 16
        %v1105 = vrot.slane %v1103, 5
        %v1106 = vor.u32 %v1102, %v1105
        %v1107 = vrot.slane %v1106, 4
        %v1109 = vshll.u32 %v902, 16
        %v1111 = vrot.slane %v1109, 5
        %v1112 = vsel %vm930, %v1107, %v1111
        %v1113 = vshrl.u32 %v902, 16
        %v1115 = vrot.slane %v1113, 4
        %v1116 = vor.u32 %v1115, %v1111
        %v1117 = vrot.slane %v1116, 4
        %v1119 = vshll.u32 %v903, 16
        %v1121 = vrot.slane %v1119, 5
        %v1122 = vsel %vm930, %v1117, %v1121
        %v1124 = vshrl.u32 %v904, 16
        %v1126 = vrot.slane %v1124, 4
        %v1127 = vshll.u32 %v904, 16
        %v1129 = vrot.slane %v1127, 5
        %v1130 = vor.u32 %v1126, %v1129
        %v1131 = vrot.slane %v1130, 4
        %v1133 = vshll.u32 %v905, 16
        %v1135 = vrot.slane %v1133, 5
        %v1136 = vsel %vm930, %v1131, %v1135
        %v1137 = vshrl.u32 %v905, 16
        %v1139 = vrot.slane %v1137, 4
        %v1140 = vor.u32 %v1139, %v1135
        %v1141 = vrot.slane %v1140, 4
        %v1143 = vshll.u32 %v906, 16
        %v1145 = vrot.slane %v1143, 5
        %v1146 = vsel %vm930, %v1141, %v1145
        %v1148 = vshrl.u32 %v907, 16
        %v1150 = vrot.slane %v1148, 4
        %v1151 = vshll.u32 %v907, 16
        %v1153 = vrot.slane %v1151, 5
        %v1154 = vor.u32 %v1150, %v1153
        %v1155 = vrot.slane %v1154, 4
        %v1157 = vshll.u32 %v908, 16
        %v1159 = vrot.slane %v1157, 5
        %v1160 = vsel %vm930, %v1155, %v1159
        %v1161 = vshrl.u32 %v908, 16
        %v1163 = vrot.slane %v1161, 4
        %v1164 = vor.u32 %v1163, %v1159
        %v1165 = vrot.slane %v1164, 4
        %v1167 = vshll.u32 %v909, 16
        %v1169 = vrot.slane %v1167, 5
        %v1170 = vsel %vm930, %v1165, %v1169
        %v1172 = vshrl.u32 %v910, 16
        %v1174 = vrot.slane %v1172, 4
        %v1175 = vshll.u32 %v910, 16
        %v1177 = vrot.slane %v1175, 5
        %v1178 = vor.u32 %v1174, %v1177
        %v1179 = vrot.slane %v1178, 4
        %v1181 = vshll.u32 %v911, 16
        %v1183 = vrot.slane %v1181, 5
        %v1184 = vsel %vm930, %v1179, %v1183
        %v1185 = vshrl.u32 %v911, 16
        %v1187 = vrot.slane %v1185, 4
        %v1188 = vor.u32 %v1187, %v1183
        %v1189 = vrot.slane %v1188, 4
        %v1191 = vshll.u32 %v912, 16
        %v1193 = vrot.slane %v1191, 5
        %v1194 = vsel %vm930, %v1189, %v1193
        %v1196 = vshrl.u32 %v913, 16
        %v1198 = vrot.slane %v1196, 4
        %v1199 = vshll.u32 %v913, 16
        %v1201 = vrot.slane %v1199, 5
        %v1202 = vor.u32 %v1198, %v1201
        %v1203 = vrot.slane %v1202, 4
        %v1205 = vshll.u32 %v914, 16
        %v1207 = vrot.slane %v1205, 5
        %v1208 = vsel %vm930, %v1203, %v1207
        %v1209 = vshrl.u32 %v914, 16
        %v1211 = vrot.slane %v1209, 4
        %v1212 = vor.u32 %v1211, %v1207
        %v1213 = vrot.slane %v1212, 4
        %v1215 = vshll.u32 %v915, 16
        %v1217 = vrot.slane %v1215, 5
        %v1218 = vsel %vm930, %v1213, %v1217
        %v1220 = vshrl.u32 %v916, 16
        %v1222 = vrot.slane %v1220, 4
        %v1223 = vshll.u32 %v916, 16
        %v1225 = vrot.slane %v1223, 5
        %v1226 = vor.u32 %v1222, %v1225
        %v1227 = vrot.slane %v1226, 4
        %v1229 = vshll.u32 %v917, 16
        %v1231 = vrot.slane %v1229, 5
        %v1232 = vsel %vm930, %v1227, %v1231
        %v1233 = vshrl.u32 %v917, 16
        %v1235 = vrot.slane %v1233, 4
        %v1236 = vor.u32 %v1235, %v1231
        %v1237 = vrot.slane %v1236, 4
        %v1239 = vshll.u32 %v918, 16
        %v1241 = vrot.slane %v1239, 5
        %v1242 = vsel %vm930, %v1237, %v1241
        %v1244 = vshrl.u32 %v919, 16
        %v1246 = vrot.slane %v1244, 4
        %v1247 = vshll.u32 %v919, 16
        %v1249 = vrot.slane %v1247, 5
        %v1250 = vor.u32 %v1246, %v1249
        %v1251 = vrot.slane %v1250, 4
        %v1253 = vshll.u32 %v920, 16
        %v1255 = vrot.slane %v1253, 5
        %v1256 = vsel %vm930, %v1251, %v1255
        %v1257 = vshrl.u32 %v920, 16
        %v1259 = vrot.slane %v1257, 4
        %v1260 = vor.u32 %v1259, %v1255
        %v1261 = vrot.slane %v1260, 4
        %v1263 = vshll.u32 %v921, 16
        %v1265 = vrot.slane %v1263, 5
        %v1266 = vsel %vm930, %v1261, %v1265
        %v1268 = vshrl.u32 %v922, 16
        %v1270 = vrot.slane %v1268, 4
        %v1271 = vshll.u32 %v922, 16
        %v1273 = vrot.slane %v1271, 5
        %v1274 = vor.u32 %v1270, %v1273
        %v1275 = vrot.slane %v1274, 4
        %v1277 = vshll.u32 %v923, 16
        %v1279 = vrot.slane %v1277, 5
        %v1280 = vsel %vm930, %v1275, %v1279
        %v1281 = vshrl.u32 %v923, 16
        %v1283 = vrot.slane %v1281, 4
        %v1284 = vor.u32 %v1283, %v1279
        %v1285 = vrot.slane %v1284, 4
        %v1287 = vshll.u32 %v924, 16
        %v1289 = vrot.slane %v1287, 5
        %v1290 = vsel %vm930, %v1285, %v1289
        %v1292 = vshrl.u32 %v925, 16
        %v1294 = vrot.slane %v1292, 4
        %v1295 = vshll.u32 %v925, 16
        %v1297 = vrot.slane %v1295, 5
        %v1298 = vor.u32 %v1294, %v1297
        %v1299 = vrot.slane %v1298, 4
        %v1301 = vshll.u32 %v926, 16
        %v1303 = vrot.slane %v1301, 5
        %v1304 = vsel %vm930, %v1299, %v1303
        %v1305 = vshrl.u32 %v926, 16
        %v1307 = vrot.slane %v1305, 4
        %v1308 = vor.u32 %v1307, %v1303
        %v1309 = vrot.slane %v1308, 4
        %v1311 = vshll.u32 %v927, 16
        %v1313 = vrot.slane %v1311, 5
        %v1314 = vsel %vm930, %v1309, %v1313
        %v1315 = vunpack.c.l.b16 %v944
        %v1316 = vunpack.c.l.b16 %v954
        %v1317 = vunpack.c.l.b16 %v968
        %v1318 = vunpack.c.l.b16 %v978
        %v1319 = vunpack.c.l.b16 %v992
        %v1320 = vunpack.c.l.b16 %v1002
        %v1321 = vunpack.c.l.b16 %v1016
        %v1322 = vunpack.c.l.b16 %v1026
        %v1323 = vunpack.c.l.b16 %v1040
        %v1324 = vunpack.c.l.b16 %v1050
        %v1325 = vunpack.c.l.b16 %v1064
        %v1326 = vunpack.c.l.b16 %v1074
        %v1327 = vunpack.c.l.b16 %v1088
        %v1328 = vunpack.c.l.b16 %v1098
        %v1329 = vunpack.c.l.b16 %v1112
        %v1330 = vunpack.c.l.b16 %v1122
        %v1331 = vunpack.c.l.b16 %v1136
        %v1332 = vunpack.c.l.b16 %v1146
        %v1333 = vunpack.c.l.b16 %v1160
        %v1334 = vunpack.c.l.b16 %v1170
        %v1335 = vunpack.c.l.b16 %v1184
        %v1336 = vunpack.c.l.b16 %v1194
        %v1337 = vunpack.c.l.b16 %v1208
        %v1338 = vunpack.c.l.b16 %v1218
        %v1339 = vunpack.c.l.b16 %v1232
        %v1340 = vunpack.c.l.b16 %v1242
        %v1341 = vunpack.c.l.b16 %v1256
        %v1342 = vunpack.c.l.b16 %v1266
        %v1343 = vunpack.c.l.b16 %v1280
        %v1344 = vunpack.c.l.b16 %v1290
        %v1345 = vunpack.c.l.b16 %v1304
        %v1346 = vunpack.c.l.b16 %v1314
        %v1347 = vpack.c.b16 %v1316, %v1315
        %v1348 = vpack.c.b16 %v1318, %v1317
        %v1349 = vpack.c.b16 %v1320, %v1319
        %v1350 = vpack.c.b16 %v1322, %v1321
        %v1351 = vpack.c.b16 %v1324, %v1323
        %v1352 = vpack.c.b16 %v1326, %v1325
        %v1353 = vpack.c.b16 %v1328, %v1327
        %v1354 = vpack.c.b16 %v1330, %v1329
        %v1355 = vpack.c.b16 %v1332, %v1331
        %v1356 = vpack.c.b16 %v1334, %v1333
        %v1357 = vpack.c.b16 %v1336, %v1335
        %v1358 = vpack.c.b16 %v1338, %v1337
        %v1359 = vpack.c.b16 %v1340, %v1339
        %v1360 = vpack.c.b16 %v1342, %v1341
        %v1361 = vpack.c.b16 %v1344, %v1343
        %v1362 = vpack.c.b16 %v1346, %v1345
        %1379 = vst [vmem:[#allocation3 + $0x8] sm:$0xff] %v1347
        %1380 = vst [vmem:[#allocation3 + $0x50] sm:$0xff] %v1348
        %1381 = vst [vmem:[#allocation3 + $0x98] sm:$0xff] %v1349
        %1382 = vst [vmem:[#allocation3 + $0xe0] sm:$0xff] %v1350
        %1383 = vst [vmem:[#allocation3 + $0x128] sm:$0xff] %v1351
        %1384 = vst [vmem:[#allocation3 + $0x170] sm:$0xff] %v1352
        %1385 = vst [vmem:[#allocation3 + $0x1b8] sm:$0xff] %v1353
        %1386 = vst [vmem:[#allocation3 + $0x200] sm:$0xff] %v1354
        %1387 = vst [vmem:[#allocation3 + $0x248] sm:$0xff] %v1355
        %1388 = vst [vmem:[#allocation3 + $0x290] sm:$0xff] %v1356
        %1389 = vst [vmem:[#allocation3 + $0x2d8] sm:$0xff] %v1357
        %1390 = vst [vmem:[#allocation3 + $0x320] sm:$0xff] %v1358
        %1391 = vst [vmem:[#allocation3 + $0x368] sm:$0xff] %v1359
        %1392 = vst [vmem:[#allocation3 + $0x3b0] sm:$0xff] %v1360
        %1393 = vst [vmem:[#allocation3 + $0x3f8] sm:$0xff] %v1361
        %1394 = vst [vmem:[#allocation3 + $0x440] sm:$0xff] %v1362
        %v1395 = vld [vmem:[#allocation2] sm:$0xe]
        %v1396 = vld [vmem:[#allocation2 + $0x4] sm:$0xf]
        %v1397 = vld [vmem:[#allocation2 + $0x8] sm:$0x1]
        %v1398 = vld [vmem:[#allocation2 + $0xc] sm:$0xe]
        %v1399 = vld [vmem:[#allocation2 + $0x10] sm:$0xf]
        %v1400 = vld [vmem:[#allocation2 + $0x14] sm:$0x1]
        %v1401 = vld [vmem:[#allocation2 + $0x18] sm:$0xe]
        %v1402 = vld [vmem:[#allocation2 + $0x1c] sm:$0xf]
        %v1403 = vld [vmem:[#allocation2 + $0x20] sm:$0x1]
        %v1404 = vld [vmem:[#allocation2 + $0x24] sm:$0xe]
        %v1405 = vld [vmem:[#allocation2 + $0x28] sm:$0xf]
        %v1406 = vld [vmem:[#allocation2 + $0x2c] sm:$0x1]
        %v1407 = vld [vmem:[#allocation2 + $0x30] sm:$0xe]
        %v1408 = vld [vmem:[#allocation2 + $0x34] sm:$0xf]
        %v1409 = vld [vmem:[#allocation2 + $0x38] sm:$0x1]
        %v1410 = vld [vmem:[#allocation2 + $0x3c] sm:$0xe]
        %v1411 = vld [vmem:[#allocation2 + $0x40] sm:$0xf]
        %v1412 = vld [vmem:[#allocation2 + $0x44] sm:$0x1]
        %v1413 = vld [vmem:[#allocation2 + $0x48] sm:$0xe]
        %v1414 = vld [vmem:[#allocation2 + $0x4c] sm:$0xf]
        %v1415 = vld [vmem:[#allocation2 + $0x50] sm:$0x1]
        %v1416 = vld [vmem:[#allocation2 + $0x54] sm:$0xe]
        %v1417 = vld [vmem:[#allocation2 + $0x58] sm:$0xf]
        %v1418 = vld [vmem:[#allocation2 + $0x5c] sm:$0x1]
        %v1419 = vld [vmem:[#allocation2 + $0x60] sm:$0xe]
        %v1420 = vld [vmem:[#allocation2 + $0x64] sm:$0xf]
        %v1421 = vld [vmem:[#allocation2 + $0x68] sm:$0x1]
        %v1422 = vld [vmem:[#allocation2 + $0x6c] sm:$0xe]
        %v1423 = vld [vmem:[#allocation2 + $0x70] sm:$0xf]
        %v1424 = vld [vmem:[#allocation2 + $0x74] sm:$0x1]
        %v1425 = vld [vmem:[#allocation2 + $0x78] sm:$0xe]
        %v1426 = vld [vmem:[#allocation2 + $0x7c] sm:$0xf]
        %v1427 = vld [vmem:[#allocation2 + $0x80] sm:$0x1]
        %v1428 = vld [vmem:[#allocation2 + $0x84] sm:$0xe]
        %v1429 = vld [vmem:[#allocation2 + $0x88] sm:$0xf]
        %v1430 = vld [vmem:[#allocation2 + $0x8c] sm:$0x1]
        %v1431 = vld [vmem:[#allocation2 + $0x90] sm:$0xe]
        %v1432 = vld [vmem:[#allocation2 + $0x94] sm:$0xf]
        %v1433 = vld [vmem:[#allocation2 + $0x98] sm:$0x1]
        %v1434 = vld [vmem:[#allocation2 + $0x9c] sm:$0xe]
        %v1435 = vld [vmem:[#allocation2 + $0xa0] sm:$0xf]
        %v1436 = vld [vmem:[#allocation2 + $0xa4] sm:$0x1]
        %v1437 = vld [vmem:[#allocation2 + $0xa8] sm:$0xe]
        %v1438 = vld [vmem:[#allocation2 + $0xac] sm:$0xf]
        %v1439 = vld [vmem:[#allocation2 + $0xb0] sm:$0x1]
        %v1440 = vld [vmem:[#allocation2 + $0xb4] sm:$0xe]
        %v1441 = vld [vmem:[#allocation2 + $0xb8] sm:$0xf]
        %v1442 = vld [vmem:[#allocation2 + $0xbc] sm:$0x1]
        %vm1491 = vcmask 1042432
        %vm1492 = vcmask 1046532
        %vm1493 = vmor %vm1491, %vm1492
        %v1494 = vrot.slane %v1395, 5
        %v1495 = vrot.slane %v1494, 4
        %v1496 = vrot.slane %v1396, 5
        %v1497 = vsel %vm1493, %v1495, %v1496
        %v1498 = vrot.slane %v1496, 4
        %v1499 = vrot.slane %v1397, 5
        %v1500 = vsel %vm1493, %v1498, %v1499
        %v1501 = vrot.slane %v1398, 5
        %v1502 = vrot.slane %v1501, 4
        %v1503 = vrot.slane %v1399, 5
        %v1504 = vsel %vm1493, %v1502, %v1503
        %v1505 = vrot.slane %v1503, 4
        %v1506 = vrot.slane %v1400, 5
        %v1507 = vsel %vm1493, %v1505, %v1506
        %v1508 = vrot.slane %v1401, 5
        %v1509 = vrot.slane %v1508, 4
        %v1510 = vrot.slane %v1402, 5
        %v1511 = vsel %vm1493, %v1509, %v1510
        %v1512 = vrot.slane %v1510, 4
        %v1513 = vrot.slane %v1403, 5
        %v1514 = vsel %vm1493, %v1512, %v1513
        %v1515 = vrot.slane %v1404, 5
        %v1516 = vrot.slane %v1515, 4
        %v1517 = vrot.slane %v1405, 5
        %v1518 = vsel %vm1493, %v1516, %v1517
        %v1519 = vrot.slane %v1517, 4
        %v1520 = vrot.slane %v1406, 5
        %v1521 = vsel %vm1493, %v1519, %v1520
        %v1522 = vrot.slane %v1407, 5
        %v1523 = vrot.slane %v1522, 4
        %v1524 = vrot.slane %v1408, 5
        %v1525 = vsel %vm1493, %v1523, %v1524
        %v1526 = vrot.slane %v1524, 4
        %v1527 = vrot.slane %v1409, 5
        %v1528 = vsel %vm1493, %v1526, %v1527
        %v1529 = vrot.slane %v1410, 5
        %v1530 = vrot.slane %v1529, 4
        %v1531 = vrot.slane %v1411, 5
        %v1532 = vsel %vm1493, %v1530, %v1531
        %v1533 = vrot.slane %v1531, 4
        %v1534 = vrot.slane %v1412, 5
        %v1535 = vsel %vm1493, %v1533, %v1534
        %v1536 = vrot.slane %v1413, 5
        %v1537 = vrot.slane %v1536, 4
        %v1538 = vrot.slane %v1414, 5
        %v1539 = vsel %vm1493, %v1537, %v1538
        %v1540 = vrot.slane %v1538, 4
        %v1541 = vrot.slane %v1415, 5
        %v1542 = vsel %vm1493, %v1540, %v1541
        %v1543 = vrot.slane %v1416, 5
        %v1544 = vrot.slane %v1543, 4
        %v1545 = vrot.slane %v1417, 5
        %v1546 = vsel %vm1493, %v1544, %v1545
        %v1547 = vrot.slane %v1545, 4
        %v1548 = vrot.slane %v1418, 5
        %v1549 = vsel %vm1493, %v1547, %v1548
        %v1550 = vrot.slane %v1419, 5
        %v1551 = vrot.slane %v1550, 4
        %v1552 = vrot.slane %v1420, 5
        %v1553 = vsel %vm1493, %v1551, %v1552
        %v1554 = vrot.slane %v1552, 4
        %v1555 = vrot.slane %v1421, 5
        %v1556 = vsel %vm1493, %v1554, %v1555
        %v1557 = vrot.slane %v1422, 5
        %v1558 = vrot.slane %v1557, 4
        %v1559 = vrot.slane %v1423, 5
        %v1560 = vsel %vm1493, %v1558, %v1559
        %v1561 = vrot.slane %v1559, 4
        %v1562 = vrot.slane %v1424, 5
        %v1563 = vsel %vm1493, %v1561, %v1562
        %v1564 = vrot.slane %v1425, 5
        %v1565 = vrot.slane %v1564, 4
        %v1566 = vrot.slane %v1426, 5
        %v1567 = vsel %vm1493, %v1565, %v1566
        %v1568 = vrot.slane %v1566, 4
        %v1569 = vrot.slane %v1427, 5
        %v1570 = vsel %vm1493, %v1568, %v1569
        %v1571 = vrot.slane %v1428, 5
        %v1572 = vrot.slane %v1571, 4
        %v1573 = vrot.slane %v1429, 5
        %v1574 = vsel %vm1493, %v1572, %v1573
        %v1575 = vrot.slane %v1573, 4
        %v1576 = vrot.slane %v1430, 5
        %v1577 = vsel %vm1493, %v1575, %v1576
        %v1578 = vrot.slane %v1431, 5
        %v1579 = vrot.slane %v1578, 4
        %v1580 = vrot.slane %v1432, 5
        %v1581 = vsel %vm1493, %v1579, %v1580
        %v1582 = vrot.slane %v1580, 4
        %v1583 = vrot.slane %v1433, 5
        %v1584 = vsel %vm1493, %v1582, %v1583
        %v1585 = vrot.slane %v1434, 5
        %v1586 = vrot.slane %v1585, 4
        %v1587 = vrot.slane %v1435, 5
        %v1588 = vsel %vm1493, %v1586, %v1587
        %v1589 = vrot.slane %v1587, 4
        %v1590 = vrot.slane %v1436, 5
        %v1591 = vsel %vm1493, %v1589, %v1590
        %v1592 = vrot.slane %v1437, 5
        %v1593 = vrot.slane %v1592, 4
        %v1594 = vrot.slane %v1438, 5
        %v1595 = vsel %vm1493, %v1593, %v1594
        %v1596 = vrot.slane %v1594, 4
        %v1597 = vrot.slane %v1439, 5
        %v1598 = vsel %vm1493, %v1596, %v1597
        %v1599 = vrot.slane %v1440, 5
        %v1600 = vrot.slane %v1599, 4
        %v1601 = vrot.slane %v1441, 5
        %v1602 = vsel %vm1493, %v1600, %v1601
        %v1603 = vrot.slane %v1601, 4
        %v1604 = vrot.slane %v1442, 5
        %v1605 = vsel %vm1493, %v1603, %v1604
        %v1606 = vunpack.c.l.b16 %v1497
        %v1607 = vunpack.c.l.b16 %v1500
        %v1608 = vunpack.c.l.b16 %v1504
        %v1609 = vunpack.c.l.b16 %v1507
        %v1610 = vunpack.c.l.b16 %v1511
        %v1611 = vunpack.c.l.b16 %v1514
        %v1612 = vunpack.c.l.b16 %v1518
        %v1613 = vunpack.c.l.b16 %v1521
        %v1614 = vunpack.c.l.b16 %v1525
        %v1615 = vunpack.c.l.b16 %v1528
        %v1616 = vunpack.c.l.b16 %v1532
        %v1617 = vunpack.c.l.b16 %v1535
        %v1618 = vunpack.c.l.b16 %v1539
        %v1619 = vunpack.c.l.b16 %v1542
        %v1620 = vunpack.c.l.b16 %v1546
        %v1621 = vunpack.c.l.b16 %v1549
        %v1622 = vunpack.c.l.b16 %v1553
        %v1623 = vunpack.c.l.b16 %v1556
        %v1624 = vunpack.c.l.b16 %v1560
        %v1625 = vunpack.c.l.b16 %v1563
        %v1626 = vunpack.c.l.b16 %v1567
        %v1627 = vunpack.c.l.b16 %v1570
        %v1628 = vunpack.c.l.b16 %v1574
        %v1629 = vunpack.c.l.b16 %v1577
        %v1630 = vunpack.c.l.b16 %v1581
        %v1631 = vunpack.c.l.b16 %v1584
        %v1632 = vunpack.c.l.b16 %v1588
        %v1633 = vunpack.c.l.b16 %v1591
        %v1634 = vunpack.c.l.b16 %v1595
        %v1635 = vunpack.c.l.b16 %v1598
        %v1636 = vunpack.c.l.b16 %v1602
        %v1637 = vunpack.c.l.b16 %v1605
        %v1638 = vpack.c.b16 %v1607, %v1606
        %v1639 = vpack.c.b16 %v1609, %v1608
        %v1640 = vpack.c.b16 %v1611, %v1610
        %v1641 = vpack.c.b16 %v1613, %v1612
        %v1642 = vpack.c.b16 %v1615, %v1614
        %v1643 = vpack.c.b16 %v1617, %v1616
        %v1644 = vpack.c.b16 %v1619, %v1618
        %v1645 = vpack.c.b16 %v1621, %v1620
        %v1646 = vpack.c.b16 %v1623, %v1622
        %v1647 = vpack.c.b16 %v1625, %v1624
        %v1648 = vpack.c.b16 %v1627, %v1626
        %v1649 = vpack.c.b16 %v1629, %v1628
        %v1650 = vpack.c.b16 %v1631, %v1630
        %v1651 = vpack.c.b16 %v1633, %v1632
        %v1652 = vpack.c.b16 %v1635, %v1634
        %v1653 = vpack.c.b16 %v1637, %v1636
        %1670 = vst [vmem:[#allocation3 + $0x10] sm:$0xff] %v1638
        %1671 = vst [vmem:[#allocation3 + $0x58] sm:$0xff] %v1639
        %1672 = vst [vmem:[#allocation3 + $0xa0] sm:$0xff] %v1640
        %1673 = vst [vmem:[#allocation3 + $0xe8] sm:$0xff] %v1641
        %1674 = vst [vmem:[#allocation3 + $0x130] sm:$0xff] %v1642
        %1675 = vst [vmem:[#allocation3 + $0x178] sm:$0xff] %v1643
        %1676 = vst [vmem:[#allocation3 + $0x1c0] sm:$0xff] %v1644
        %1677 = vst [vmem:[#allocation3 + $0x208] sm:$0xff] %v1645
        %1678 = vst [vmem:[#allocation3 + $0x250] sm:$0xff] %v1646
        %1679 = vst [vmem:[#allocation3 + $0x298] sm:$0xff] %v1647
        %1680 = vst [vmem:[#allocation3 + $0x2e0] sm:$0xff] %v1648
        %1681 = vst [vmem:[#allocation3 + $0x328] sm:$0xff] %v1649
        %1682 = vst [vmem:[#allocation3 + $0x370] sm:$0xff] %v1650
        %1683 = vst [vmem:[#allocation3 + $0x3b8] sm:$0xff] %v1651
        %1684 = vst [vmem:[#allocation3 + $0x400] sm:$0xff] %v1652
        %1685 = vst [vmem:[#allocation3 + $0x448] sm:$0xff] %v1653
        %v1686 = vld [vmem:[%s618] sm:$0xf]
        %v1687 = vld [vmem:[%s618 + $0x4] sm:$0xf]
        %v1688 = vld [vmem:[%s618 + $0xc] sm:$0xf]
        %v1689 = vld [vmem:[%s618 + $0x10] sm:$0xf]
        %v1690 = vld [vmem:[%s618 + $0x18] sm:$0xf]
        %v1691 = vld [vmem:[%s618 + $0x1c] sm:$0xf]
        %v1692 = vld [vmem:[%s618 + $0x24] sm:$0xf]
        %v1693 = vld [vmem:[%s618 + $0x28] sm:$0xf]
        %v1694 = vld [vmem:[%s618 + $0x30] sm:$0xf]
        %v1695 = vld [vmem:[%s618 + $0x34] sm:$0xf]
        %v1696 = vld [vmem:[%s618 + $0x3c] sm:$0xf]
        %v1697 = vld [vmem:[%s618 + $0x40] sm:$0xf]
        %v1698 = vld [vmem:[%s618 + $0x48] sm:$0xf]
        %v1699 = vld [vmem:[%s618 + $0x4c] sm:$0xf]
        %v1700 = vld [vmem:[%s618 + $0x54] sm:$0xf]
        %v1701 = vld [vmem:[%s618 + $0x58] sm:$0xf]
        %v1702 = vld [vmem:[%s618 + $0x60] sm:$0xf]
        %v1703 = vld [vmem:[%s618 + $0x64] sm:$0xf]
        %v1704 = vld [vmem:[%s618 + $0x6c] sm:$0xf]
        %v1705 = vld [vmem:[%s618 + $0x70] sm:$0xf]
        %v1706 = vld [vmem:[%s618 + $0x78] sm:$0xf]
        %v1707 = vld [vmem:[%s618 + $0x7c] sm:$0xf]
        %v1708 = vld [vmem:[%s618 + $0x84] sm:$0xf]
        %v1709 = vld [vmem:[%s618 + $0x88] sm:$0xf]
        %v1710 = vld [vmem:[%s618 + $0x90] sm:$0xf]
        %v1711 = vld [vmem:[%s618 + $0x94] sm:$0xf]
        %v1712 = vld [vmem:[%s618 + $0x9c] sm:$0xf]
        %v1713 = vld [vmem:[%s618 + $0xa0] sm:$0xf]
        %v1714 = vld [vmem:[%s618 + $0xa8] sm:$0xf]
        %v1715 = vld [vmem:[%s618 + $0xac] sm:$0xf]
        %v1716 = vld [vmem:[%s618 + $0xb4] sm:$0xf]
        %v1717 = vld [vmem:[%s618 + $0xb8] sm:$0xf]
        %v1750 = vunpack.c.l.b16 %v1686
        %v1751 = vunpack.c.l.b16 %v1687
        %v1752 = vunpack.c.l.b16 %v1688
        %v1753 = vunpack.c.l.b16 %v1689
        %v1754 = vunpack.c.l.b16 %v1690
        %v1755 = vunpack.c.l.b16 %v1691
        %v1756 = vunpack.c.l.b16 %v1692
        %v1757 = vunpack.c.l.b16 %v1693
        %v1758 = vunpack.c.l.b16 %v1694
        %v1759 = vunpack.c.l.b16 %v1695
        %v1760 = vunpack.c.l.b16 %v1696
        %v1761 = vunpack.c.l.b16 %v1697
        %v1762 = vunpack.c.l.b16 %v1698
        %v1763 = vunpack.c.l.b16 %v1699
        %v1764 = vunpack.c.l.b16 %v1700
        %v1765 = vunpack.c.l.b16 %v1701
        %v1766 = vunpack.c.l.b16 %v1702
        %v1767 = vunpack.c.l.b16 %v1703
        %v1768 = vunpack.c.l.b16 %v1704
        %v1769 = vunpack.c.l.b16 %v1705
        %v1770 = vunpack.c.l.b16 %v1706
        %v1771 = vunpack.c.l.b16 %v1707
        %v1772 = vunpack.c.l.b16 %v1708
        %v1773 = vunpack.c.l.b16 %v1709
        %v1774 = vunpack.c.l.b16 %v1710
        %v1775 = vunpack.c.l.b16 %v1711
        %v1776 = vunpack.c.l.b16 %v1712
        %v1777 = vunpack.c.l.b16 %v1713
        %v1778 = vunpack.c.l.b16 %v1714
        %v1779 = vunpack.c.l.b16 %v1715
        %v1780 = vunpack.c.l.b16 %v1716
        %v1781 = vunpack.c.l.b16 %v1717
        %v1782 = vpack.c.b16 %v1751, %v1750
        %v1783 = vpack.c.b16 %v1753, %v1752
        %v1784 = vpack.c.b16 %v1755, %v1754
        %v1785 = vpack.c.b16 %v1757, %v1756
        %v1786 = vpack.c.b16 %v1759, %v1758
        %v1787 = vpack.c.b16 %v1761, %v1760
        %v1788 = vpack.c.b16 %v1763, %v1762
        %v1789 = vpack.c.b16 %v1765, %v1764
        %v1790 = vpack.c.b16 %v1767, %v1766
        %v1791 = vpack.c.b16 %v1769, %v1768
        %v1792 = vpack.c.b16 %v1771, %v1770
        %v1793 = vpack.c.b16 %v1773, %v1772
        %v1794 = vpack.c.b16 %v1775, %v1774
        %v1795 = vpack.c.b16 %v1777, %v1776
        %v1796 = vpack.c.b16 %v1779, %v1778
        %v1797 = vpack.c.b16 %v1781, %v1780
        %1814 = vst [vmem:[#allocation3 + $0x18] sm:$0xff] %v1782
        %1815 = vst [vmem:[#allocation3 + $0x60] sm:$0xff] %v1783
        %1816 = vst [vmem:[#allocation3 + $0xa8] sm:$0xff] %v1784
        %1817 = vst [vmem:[#allocation3 + $0xf0] sm:$0xff] %v1785
        %1818 = vst [vmem:[#allocation3 + $0x138] sm:$0xff] %v1786
        %1819 = vst [vmem:[#allocation3 + $0x180] sm:$0xff] %v1787
        %1820 = vst [vmem:[#allocation3 + $0x1c8] sm:$0xff] %v1788
        %1821 = vst [vmem:[#allocation3 + $0x210] sm:$0xff] %v1789
        %1822 = vst [vmem:[#allocation3 + $0x258] sm:$0xff] %v1790
        %1823 = vst [vmem:[#allocation3 + $0x2a0] sm:$0xff] %v1791
        %1824 = vst [vmem:[#allocation3 + $0x2e8] sm:$0xff] %v1792
        %1825 = vst [vmem:[#allocation3 + $0x330] sm:$0xff] %v1793
        %1826 = vst [vmem:[#allocation3 + $0x378] sm:$0xff] %v1794
        %1827 = vst [vmem:[#allocation3 + $0x3c0] sm:$0xff] %v1795
        %1828 = vst [vmem:[#allocation3 + $0x408] sm:$0xff] %v1796
        %1829 = vst [vmem:[#allocation3 + $0x450] sm:$0xff] %v1797
        %v1830 = vld [vmem:[%s618] sm:$0xf]
        %v1831 = vld [vmem:[%s618 + $0x4] sm:$0xf]
        %v1832 = vld [vmem:[%s618 + $0x8] sm:$0x1]
        %v1833 = vld [vmem:[%s618 + $0xc] sm:$0xf]
        %v1834 = vld [vmem:[%s618 + $0x10] sm:$0xf]
        %v1835 = vld [vmem:[%s618 + $0x14] sm:$0x1]
        %v1836 = vld [vmem:[%s618 + $0x18] sm:$0xf]
        %v1837 = vld [vmem:[%s618 + $0x1c] sm:$0xf]
        %v1838 = vld [vmem:[%s618 + $0x20] sm:$0x1]
        %v1839 = vld [vmem:[%s618 + $0x24] sm:$0xf]
        %v1840 = vld [vmem:[%s618 + $0x28] sm:$0xf]
        %v1841 = vld [vmem:[%s618 + $0x2c] sm:$0x1]
        %v1842 = vld [vmem:[%s618 + $0x30] sm:$0xf]
        %v1843 = vld [vmem:[%s618 + $0x34] sm:$0xf]
        %v1844 = vld [vmem:[%s618 + $0x38] sm:$0x1]
        %v1845 = vld [vmem:[%s618 + $0x3c] sm:$0xf]
        %v1846 = vld [vmem:[%s618 + $0x40] sm:$0xf]
        %v1847 = vld [vmem:[%s618 + $0x44] sm:$0x1]
        %v1848 = vld [vmem:[%s618 + $0x48] sm:$0xf]
        %v1849 = vld [vmem:[%s618 + $0x4c] sm:$0xf]
        %v1850 = vld [vmem:[%s618 + $0x50] sm:$0x1]
        %v1851 = vld [vmem:[%s618 + $0x54] sm:$0xf]
        %v1852 = vld [vmem:[%s618 + $0x58] sm:$0xf]
        %v1853 = vld [vmem:[%s618 + $0x5c] sm:$0x1]
        %v1854 = vld [vmem:[%s618 + $0x60] sm:$0xf]
        %v1855 = vld [vmem:[%s618 + $0x64] sm:$0xf]
        %v1856 = vld [vmem:[%s618 + $0x68] sm:$0x1]
        %v1857 = vld [vmem:[%s618 + $0x6c] sm:$0xf]
        %v1858 = vld [vmem:[%s618 + $0x70] sm:$0xf]
        %v1859 = vld [vmem:[%s618 + $0x74] sm:$0x1]
        %v1860 = vld [vmem:[%s618 + $0x78] sm:$0xf]
        %v1861 = vld [vmem:[%s618 + $0x7c] sm:$0xf]
        %v1862 = vld [vmem:[%s618 + $0x80] sm:$0x1]
        %v1863 = vld [vmem:[%s618 + $0x84] sm:$0xf]
        %v1864 = vld [vmem:[%s618 + $0x88] sm:$0xf]
        %v1865 = vld [vmem:[%s618 + $0x8c] sm:$0x1]
        %v1866 = vld [vmem:[%s618 + $0x90] sm:$0xf]
        %v1867 = vld [vmem:[%s618 + $0x94] sm:$0xf]
        %v1868 = vld [vmem:[%s618 + $0x98] sm:$0x1]
        %v1869 = vld [vmem:[%s618 + $0x9c] sm:$0xf]
        %v1870 = vld [vmem:[%s618 + $0xa0] sm:$0xf]
        %v1871 = vld [vmem:[%s618 + $0xa4] sm:$0x1]
        %v1872 = vld [vmem:[%s618 + $0xa8] sm:$0xf]
        %v1873 = vld [vmem:[%s618 + $0xac] sm:$0xf]
        %v1874 = vld [vmem:[%s618 + $0xb0] sm:$0x1]
        %v1875 = vld [vmem:[%s618 + $0xb4] sm:$0xf]
        %v1876 = vld [vmem:[%s618 + $0xb8] sm:$0xf]
        %v1877 = vld [vmem:[%s618 + $0xbc] sm:$0x1]
        %v1879 = vshrl.u32 %v1830, 16
        %v1881 = vrot.slane %v1879, 4
        %v1882 = vshll.u32 %v1830, 16
        %v1884 = vrot.slane %v1882, 5
        %v1885 = vor.u32 %v1881, %v1884
        %v1886 = vrot.slane %v1885, 4
        %v1888 = vshll.u32 %v1831, 16
        %v1890 = vrot.slane %v1888, 5
        %v1891 = vsel %vm930, %v1886, %v1890
        %v1892 = vshrl.u32 %v1831, 16
        %v1894 = vrot.slane %v1892, 4
        %v1895 = vor.u32 %v1894, %v1890
        %v1896 = vrot.slane %v1895, 4
        %v1898 = vshll.u32 %v1832, 16
        %v1900 = vrot.slane %v1898, 5
        %v1901 = vsel %vm930, %v1896, %v1900
        %v1903 = vshrl.u32 %v1833, 16
        %v1905 = vrot.slane %v1903, 4
        %v1906 = vshll.u32 %v1833, 16
        %v1908 = vrot.slane %v1906, 5
        %v1909 = vor.u32 %v1905, %v1908
        %v1910 = vrot.slane %v1909, 4
        %v1912 = vshll.u32 %v1834, 16
        %v1914 = vrot.slane %v1912, 5
        %v1915 = vsel %vm930, %v1910, %v1914
        %v1916 = vshrl.u32 %v1834, 16
        %v1918 = vrot.slane %v1916, 4
        %v1919 = vor.u32 %v1918, %v1914
        %v1920 = vrot.slane %v1919, 4
        %v1922 = vshll.u32 %v1835, 16
        %v1924 = vrot.slane %v1922, 5
        %v1925 = vsel %vm930, %v1920, %v1924
        %v1927 = vshrl.u32 %v1836, 16
        %v1929 = vrot.slane %v1927, 4
        %v1930 = vshll.u32 %v1836, 16
        %v1932 = vrot.slane %v1930, 5
        %v1933 = vor.u32 %v1929, %v1932
        %v1934 = vrot.slane %v1933, 4
        %v1936 = vshll.u32 %v1837, 16
        %v1938 = vrot.slane %v1936, 5
        %v1939 = vsel %vm930, %v1934, %v1938
        %v1940 = vshrl.u32 %v1837, 16
        %v1942 = vrot.slane %v1940, 4
        %v1943 = vor.u32 %v1942, %v1938
        %v1944 = vrot.slane %v1943, 4
        %v1946 = vshll.u32 %v1838, 16
        %v1948 = vrot.slane %v1946, 5
        %v1949 = vsel %vm930, %v1944, %v1948
        %v1951 = vshrl.u32 %v1839, 16
        %v1953 = vrot.slane %v1951, 4
        %v1954 = vshll.u32 %v1839, 16
        %v1956 = vrot.slane %v1954, 5
        %v1957 = vor.u32 %v1953, %v1956
        %v1958 = vrot.slane %v1957, 4
        %v1960 = vshll.u32 %v1840, 16
        %v1962 = vrot.slane %v1960, 5
        %v1963 = vsel %vm930, %v1958, %v1962
        %v1964 = vshrl.u32 %v1840, 16
        %v1966 = vrot.slane %v1964, 4
        %v1967 = vor.u32 %v1966, %v1962
        %v1968 = vrot.slane %v1967, 4
        %v1970 = vshll.u32 %v1841, 16
        %v1972 = vrot.slane %v1970, 5
        %v1973 = vsel %vm930, %v1968, %v1972
        %v1975 = vshrl.u32 %v1842, 16
        %v1977 = vrot.slane %v1975, 4
        %v1978 = vshll.u32 %v1842, 16
        %v1980 = vrot.slane %v1978, 5
        %v1981 = vor.u32 %v1977, %v1980
        %v1982 = vrot.slane %v1981, 4
        %v1984 = vshll.u32 %v1843, 16
        %v1986 = vrot.slane %v1984, 5
        %v1987 = vsel %vm930, %v1982, %v1986
        %v1988 = vshrl.u32 %v1843, 16
        %v1990 = vrot.slane %v1988, 4
        %v1991 = vor.u32 %v1990, %v1986
        %v1992 = vrot.slane %v1991, 4
        %v1994 = vshll.u32 %v1844, 16
        %v1996 = vrot.slane %v1994, 5
        %v1997 = vsel %vm930, %v1992, %v1996
        %v1999 = vshrl.u32 %v1845, 16
        %v2001 = vrot.slane %v1999, 4
        %v2002 = vshll.u32 %v1845, 16
        %v2004 = vrot.slane %v2002, 5
        %v2005 = vor.u32 %v2001, %v2004
        %v2006 = vrot.slane %v2005, 4
        %v2008 = vshll.u32 %v1846, 16
        %v2010 = vrot.slane %v2008, 5
        %v2011 = vsel %vm930, %v2006, %v2010
        %v2012 = vshrl.u32 %v1846, 16
        %v2014 = vrot.slane %v2012, 4
        %v2015 = vor.u32 %v2014, %v2010
        %v2016 = vrot.slane %v2015, 4
        %v2018 = vshll.u32 %v1847, 16
        %v2020 = vrot.slane %v2018, 5
        %v2021 = vsel %vm930, %v2016, %v2020
        %v2023 = vshrl.u32 %v1848, 16
        %v2025 = vrot.slane %v2023, 4
        %v2026 = vshll.u32 %v1848, 16
        %v2028 = vrot.slane %v2026, 5
        %v2029 = vor.u32 %v2025, %v2028
        %v2030 = vrot.slane %v2029, 4
        %v2032 = vshll.u32 %v1849, 16
        %v2034 = vrot.slane %v2032, 5
        %v2035 = vsel %vm930, %v2030, %v2034
        %v2036 = vshrl.u32 %v1849, 16
        %v2038 = vrot.slane %v2036, 4
        %v2039 = vor.u32 %v2038, %v2034
        %v2040 = vrot.slane %v2039, 4
        %v2042 = vshll.u32 %v1850, 16
        %v2044 = vrot.slane %v2042, 5
        %v2045 = vsel %vm930, %v2040, %v2044
        %v2047 = vshrl.u32 %v1851, 16
        %v2049 = vrot.slane %v2047, 4
        %v2050 = vshll.u32 %v1851, 16
        %v2052 = vrot.slane %v2050, 5
        %v2053 = vor.u32 %v2049, %v2052
        %v2054 = vrot.slane %v2053, 4
        %v2056 = vshll.u32 %v1852, 16
        %v2058 = vrot.slane %v2056, 5
        %v2059 = vsel %vm930, %v2054, %v2058
        %v2060 = vshrl.u32 %v1852, 16
        %v2062 = vrot.slane %v2060, 4
        %v2063 = vor.u32 %v2062, %v2058
        %v2064 = vrot.slane %v2063, 4
        %v2066 = vshll.u32 %v1853, 16
        %v2068 = vrot.slane %v2066, 5
        %v2069 = vsel %vm930, %v2064, %v2068
        %v2071 = vshrl.u32 %v1854, 16
        %v2073 = vrot.slane %v2071, 4
        %v2074 = vshll.u32 %v1854, 16
        %v2076 = vrot.slane %v2074, 5
        %v2077 = vor.u32 %v2073, %v2076
        %v2078 = vrot.slane %v2077, 4
        %v2080 = vshll.u32 %v1855, 16
        %v2082 = vrot.slane %v2080, 5
        %v2083 = vsel %vm930, %v2078, %v2082
        %v2084 = vshrl.u32 %v1855, 16
        %v2086 = vrot.slane %v2084, 4
        %v2087 = vor.u32 %v2086, %v2082
        %v2088 = vrot.slane %v2087, 4
        %v2090 = vshll.u32 %v1856, 16
        %v2092 = vrot.slane %v2090, 5
        %v2093 = vsel %vm930, %v2088, %v2092
        %v2095 = vshrl.u32 %v1857, 16
        %v2097 = vrot.slane %v2095, 4
        %v2098 = vshll.u32 %v1857, 16
        %v2100 = vrot.slane %v2098, 5
        %v2101 = vor.u32 %v2097, %v2100
        %v2102 = vrot.slane %v2101, 4
        %v2104 = vshll.u32 %v1858, 16
        %v2106 = vrot.slane %v2104, 5
        %v2107 = vsel %vm930, %v2102, %v2106
        %v2108 = vshrl.u32 %v1858, 16
        %v2110 = vrot.slane %v2108, 4
        %v2111 = vor.u32 %v2110, %v2106
        %v2112 = vrot.slane %v2111, 4
        %v2114 = vshll.u32 %v1859, 16
        %v2116 = vrot.slane %v2114, 5
        %v2117 = vsel %vm930, %v2112, %v2116
        %v2119 = vshrl.u32 %v1860, 16
        %v2121 = vrot.slane %v2119, 4
        %v2122 = vshll.u32 %v1860, 16
        %v2124 = vrot.slane %v2122, 5
        %v2125 = vor.u32 %v2121, %v2124
        %v2126 = vrot.slane %v2125, 4
        %v2128 = vshll.u32 %v1861, 16
        %v2130 = vrot.slane %v2128, 5
        %v2131 = vsel %vm930, %v2126, %v2130
        %v2132 = vshrl.u32 %v1861, 16
        %v2134 = vrot.slane %v2132, 4
        %v2135 = vor.u32 %v2134, %v2130
        %v2136 = vrot.slane %v2135, 4
        %v2138 = vshll.u32 %v1862, 16
        %v2140 = vrot.slane %v2138, 5
        %v2141 = vsel %vm930, %v2136, %v2140
        %v2143 = vshrl.u32 %v1863, 16
        %v2145 = vrot.slane %v2143, 4
        %v2146 = vshll.u32 %v1863, 16
        %v2148 = vrot.slane %v2146, 5
        %v2149 = vor.u32 %v2145, %v2148
        %v2150 = vrot.slane %v2149, 4
        %v2152 = vshll.u32 %v1864, 16
        %v2154 = vrot.slane %v2152, 5
        %v2155 = vsel %vm930, %v2150, %v2154
        %v2156 = vshrl.u32 %v1864, 16
        %v2158 = vrot.slane %v2156, 4
        %v2159 = vor.u32 %v2158, %v2154
        %v2160 = vrot.slane %v2159, 4
        %v2162 = vshll.u32 %v1865, 16
        %v2164 = vrot.slane %v2162, 5
        %v2165 = vsel %vm930, %v2160, %v2164
        %v2167 = vshrl.u32 %v1866, 16
        %v2169 = vrot.slane %v2167, 4
        %v2170 = vshll.u32 %v1866, 16
        %v2172 = vrot.slane %v2170, 5
        %v2173 = vor.u32 %v2169, %v2172
        %v2174 = vrot.slane %v2173, 4
        %v2176 = vshll.u32 %v1867, 16
        %v2178 = vrot.slane %v2176, 5
        %v2179 = vsel %vm930, %v2174, %v2178
        %v2180 = vshrl.u32 %v1867, 16
        %v2182 = vrot.slane %v2180, 4
        %v2183 = vor.u32 %v2182, %v2178
        %v2184 = vrot.slane %v2183, 4
        %v2186 = vshll.u32 %v1868, 16
        %v2188 = vrot.slane %v2186, 5
        %v2189 = vsel %vm930, %v2184, %v2188
        %v2191 = vshrl.u32 %v1869, 16
        %v2193 = vrot.slane %v2191, 4
        %v2194 = vshll.u32 %v1869, 16
        %v2196 = vrot.slane %v2194, 5
        %v2197 = vor.u32 %v2193, %v2196
        %v2198 = vrot.slane %v2197, 4
        %v2200 = vshll.u32 %v1870, 16
        %v2202 = vrot.slane %v2200, 5
        %v2203 = vsel %vm930, %v2198, %v2202
        %v2204 = vshrl.u32 %v1870, 16
        %v2206 = vrot.slane %v2204, 4
        %v2207 = vor.u32 %v2206, %v2202
        %v2208 = vrot.slane %v2207, 4
        %v2210 = vshll.u32 %v1871, 16
        %v2212 = vrot.slane %v2210, 5
        %v2213 = vsel %vm930, %v2208, %v2212
        %v2215 = vshrl.u32 %v1872, 16
        %v2217 = vrot.slane %v2215, 4
        %v2218 = vshll.u32 %v1872, 16
        %v2220 = vrot.slane %v2218, 5
        %v2221 = vor.u32 %v2217, %v2220
        %v2222 = vrot.slane %v2221, 4
        %v2224 = vshll.u32 %v1873, 16
        %v2226 = vrot.slane %v2224, 5
        %v2227 = vsel %vm930, %v2222, %v2226
        %v2228 = vshrl.u32 %v1873, 16
        %v2230 = vrot.slane %v2228, 4
        %v2231 = vor.u32 %v2230, %v2226
        %v2232 = vrot.slane %v2231, 4
        %v2234 = vshll.u32 %v1874, 16
        %v2236 = vrot.slane %v2234, 5
        %v2237 = vsel %vm930, %v2232, %v2236
        %v2239 = vshrl.u32 %v1875, 16
        %v2241 = vrot.slane %v2239, 4
        %v2242 = vshll.u32 %v1875, 16
        %v2244 = vrot.slane %v2242, 5
        %v2245 = vor.u32 %v2241, %v2244
        %v2246 = vrot.slane %v2245, 4
        %v2248 = vshll.u32 %v1876, 16
        %v2250 = vrot.slane %v2248, 5
        %v2251 = vsel %vm930, %v2246, %v2250
        %v2252 = vshrl.u32 %v1876, 16
        %v2254 = vrot.slane %v2252, 4
        %v2255 = vor.u32 %v2254, %v2250
        %v2256 = vrot.slane %v2255, 4
        %v2258 = vshll.u32 %v1877, 16
        %v2260 = vrot.slane %v2258, 5
        %v2261 = vsel %vm930, %v2256, %v2260
        %v2262 = vunpack.c.l.b16 %v1891
        %v2263 = vunpack.c.l.b16 %v1901
        %v2264 = vunpack.c.l.b16 %v1915
        %v2265 = vunpack.c.l.b16 %v1925
        %v2266 = vunpack.c.l.b16 %v1939
        %v2267 = vunpack.c.l.b16 %v1949
        %v2268 = vunpack.c.l.b16 %v1963
        %v2269 = vunpack.c.l.b16 %v1973
        %v2270 = vunpack.c.l.b16 %v1987
        %v2271 = vunpack.c.l.b16 %v1997
        %v2272 = vunpack.c.l.b16 %v2011
        %v2273 = vunpack.c.l.b16 %v2021
        %v2274 = vunpack.c.l.b16 %v2035
        %v2275 = vunpack.c.l.b16 %v2045
        %v2276 = vunpack.c.l.b16 %v2059
        %v2277 = vunpack.c.l.b16 %v2069
        %v2278 = vunpack.c.l.b16 %v2083
        %v2279 = vunpack.c.l.b16 %v2093
        %v2280 = vunpack.c.l.b16 %v2107
        %v2281 = vunpack.c.l.b16 %v2117
        %v2282 = vunpack.c.l.b16 %v2131
        %v2283 = vunpack.c.l.b16 %v2141
        %v2284 = vunpack.c.l.b16 %v2155
        %v2285 = vunpack.c.l.b16 %v2165
        %v2286 = vunpack.c.l.b16 %v2179
        %v2287 = vunpack.c.l.b16 %v2189
        %v2288 = vunpack.c.l.b16 %v2203
        %v2289 = vunpack.c.l.b16 %v2213
        %v2290 = vunpack.c.l.b16 %v2227
        %v2291 = vunpack.c.l.b16 %v2237
        %v2292 = vunpack.c.l.b16 %v2251
        %v2293 = vunpack.c.l.b16 %v2261
        %v2294 = vpack.c.b16 %v2263, %v2262
        %v2295 = vpack.c.b16 %v2265, %v2264
        %v2296 = vpack.c.b16 %v2267, %v2266
        %v2297 = vpack.c.b16 %v2269, %v2268
        %v2298 = vpack.c.b16 %v2271, %v2270
        %v2299 = vpack.c.b16 %v2273, %v2272
        %v2300 = vpack.c.b16 %v2275, %v2274
        %v2301 = vpack.c.b16 %v2277, %v2276
        %v2302 = vpack.c.b16 %v2279, %v2278
        %v2303 = vpack.c.b16 %v2281, %v2280
        %v2304 = vpack.c.b16 %v2283, %v2282
        %v2305 = vpack.c.b16 %v2285, %v2284
        %v2306 = vpack.c.b16 %v2287, %v2286
        %v2307 = vpack.c.b16 %v2289, %v2288
        %v2308 = vpack.c.b16 %v2291, %v2290
        %v2309 = vpack.c.b16 %v2293, %v2292
        %2326 = vst [vmem:[#allocation3 + $0x20] sm:$0xff] %v2294
        %2327 = vst [vmem:[#allocation3 + $0x68] sm:$0xff] %v2295
        %2328 = vst [vmem:[#allocation3 + $0xb0] sm:$0xff] %v2296
        %2329 = vst [vmem:[#allocation3 + $0xf8] sm:$0xff] %v2297
        %2330 = vst [vmem:[#allocation3 + $0x140] sm:$0xff] %v2298
        %2331 = vst [vmem:[#allocation3 + $0x188] sm:$0xff] %v2299
        %2332 = vst [vmem:[#allocation3 + $0x1d0] sm:$0xff] %v2300
        %2333 = vst [vmem:[#allocation3 + $0x218] sm:$0xff] %v2301
        %2334 = vst [vmem:[#allocation3 + $0x260] sm:$0xff] %v2302
        %2335 = vst [vmem:[#allocation3 + $0x2a8] sm:$0xff] %v2303
        %2336 = vst [vmem:[#allocation3 + $0x2f0] sm:$0xff] %v2304
        %2337 = vst [vmem:[#allocation3 + $0x338] sm:$0xff] %v2305
        %2338 = vst [vmem:[#allocation3 + $0x380] sm:$0xff] %v2306
        %2339 = vst [vmem:[#allocation3 + $0x3c8] sm:$0xff] %v2307
        %2340 = vst [vmem:[#allocation3 + $0x410] sm:$0xff] %v2308
        %2341 = vst [vmem:[#allocation3 + $0x458] sm:$0xff] %v2309
        %v2342 = vld [vmem:[%s618] sm:$0xe]
        %v2343 = vld [vmem:[%s618 + $0x4] sm:$0xf]
        %v2344 = vld [vmem:[%s618 + $0x8] sm:$0x1]
        %v2345 = vld [vmem:[%s618 + $0xc] sm:$0xe]
        %v2346 = vld [vmem:[%s618 + $0x10] sm:$0xf]
        %v2347 = vld [vmem:[%s618 + $0x14] sm:$0x1]
        %v2348 = vld [vmem:[%s618 + $0x18] sm:$0xe]
        %v2349 = vld [vmem:[%s618 + $0x1c] sm:$0xf]
        %v2350 = vld [vmem:[%s618 + $0x20] sm:$0x1]
        %v2351 = vld [vmem:[%s618 + $0x24] sm:$0xe]
        %v2352 = vld [vmem:[%s618 + $0x28] sm:$0xf]
        %v2353 = vld [vmem:[%s618 + $0x2c] sm:$0x1]
        %v2354 = vld [vmem:[%s618 + $0x30] sm:$0xe]
        %v2355 = vld [vmem:[%s618 + $0x34] sm:$0xf]
        %v2356 = vld [vmem:[%s618 + $0x38] sm:$0x1]
        %v2357 = vld [vmem:[%s618 + $0x3c] sm:$0xe]
        %v2358 = vld [vmem:[%s618 + $0x40] sm:$0xf]
        %v2359 = vld [vmem:[%s618 + $0x44] sm:$0x1]
        %v2360 = vld [vmem:[%s618 + $0x48] sm:$0xe]
        %v2361 = vld [vmem:[%s618 + $0x4c] sm:$0xf]
        %v2362 = vld [vmem:[%s618 + $0x50] sm:$0x1]
        %v2363 = vld [vmem:[%s618 + $0x54] sm:$0xe]
        %v2364 = vld [vmem:[%s618 + $0x58] sm:$0xf]
        %v2365 = vld [vmem:[%s618 + $0x5c] sm:$0x1]
        %v2366 = vld [vmem:[%s618 + $0x60] sm:$0xe]
        %v2367 = vld [vmem:[%s618 + $0x64] sm:$0xf]
        %v2368 = vld [vmem:[%s618 + $0x68] sm:$0x1]
        %v2369 = vld [vmem:[%s618 + $0x6c] sm:$0xe]
        %v2370 = vld [vmem:[%s618 + $0x70] sm:$0xf]
        %v2371 = vld [vmem:[%s618 + $0x74] sm:$0x1]
        %v2372 = vld [vmem:[%s618 + $0x78] sm:$0xe]
        %v2373 = vld [vmem:[%s618 + $0x7c] sm:$0xf]
        %v2374 = vld [vmem:[%s618 + $0x80] sm:$0x1]
        %v2375 = vld [vmem:[%s618 + $0x84] sm:$0xe]
        %v2376 = vld [vmem:[%s618 + $0x88] sm:$0xf]
        %v2377 = vld [vmem:[%s618 + $0x8c] sm:$0x1]
        %v2378 = vld [vmem:[%s618 + $0x90] sm:$0xe]
        %v2379 = vld [vmem:[%s618 + $0x94] sm:$0xf]
        %v2380 = vld [vmem:[%s618 + $0x98] sm:$0x1]
        %v2381 = vld [vmem:[%s618 + $0x9c] sm:$0xe]
        %v2382 = vld [vmem:[%s618 + $0xa0] sm:$0xf]
        %v2383 = vld [vmem:[%s618 + $0xa4] sm:$0x1]
        %v2384 = vld [vmem:[%s618 + $0xa8] sm:$0xe]
        %v2385 = vld [vmem:[%s618 + $0xac] sm:$0xf]
        %v2386 = vld [vmem:[%s618 + $0xb0] sm:$0x1]
        %v2387 = vld [vmem:[%s618 + $0xb4] sm:$0xe]
        %v2388 = vld [vmem:[%s618 + $0xb8] sm:$0xf]
        %v2389 = vld [vmem:[%s618 + $0xbc] sm:$0x1]
        %v2438 = vrot.slane %v2342, 5
        %v2439 = vrot.slane %v2438, 4
        %v2440 = vrot.slane %v2343, 5
        %v2441 = vsel %vm1493, %v2439, %v2440
        %v2442 = vrot.slane %v2440, 4
        %v2443 = vrot.slane %v2344, 5
        %v2444 = vsel %vm1493, %v2442, %v2443
        %v2445 = vrot.slane %v2345, 5
        %v2446 = vrot.slane %v2445, 4
        %v2447 = vrot.slane %v2346, 5
        %v2448 = vsel %vm1493, %v2446, %v2447
        %v2449 = vrot.slane %v2447, 4
        %v2450 = vrot.slane %v2347, 5
        %v2451 = vsel %vm1493, %v2449, %v2450
        %v2452 = vrot.slane %v2348, 5
        %v2453 = vrot.slane %v2452, 4
        %v2454 = vrot.slane %v2349, 5
        %v2455 = vsel %vm1493, %v2453, %v2454
        %v2456 = vrot.slane %v2454, 4
        %v2457 = vrot.slane %v2350, 5
        %v2458 = vsel %vm1493, %v2456, %v2457
        %v2459 = vrot.slane %v2351, 5
        %v2460 = vrot.slane %v2459, 4
        %v2461 = vrot.slane %v2352, 5
        %v2462 = vsel %vm1493, %v2460, %v2461
        %v2463 = vrot.slane %v2461, 4
        %v2464 = vrot.slane %v2353, 5
        %v2465 = vsel %vm1493, %v2463, %v2464
        %v2466 = vrot.slane %v2354, 5
        %v2467 = vrot.slane %v2466, 4
        %v2468 = vrot.slane %v2355, 5
        %v2469 = vsel %vm1493, %v2467, %v2468
        %v2470 = vrot.slane %v2468, 4
        %v2471 = vrot.slane %v2356, 5
        %v2472 = vsel %vm1493, %v2470, %v2471
        %v2473 = vrot.slane %v2357, 5
        %v2474 = vrot.slane %v2473, 4
        %v2475 = vrot.slane %v2358, 5
        %v2476 = vsel %vm1493, %v2474, %v2475
        %v2477 = vrot.slane %v2475, 4
        %v2478 = vrot.slane %v2359, 5
        %v2479 = vsel %vm1493, %v2477, %v2478
        %v2480 = vrot.slane %v2360, 5
        %v2481 = vrot.slane %v2480, 4
        %v2482 = vrot.slane %v2361, 5
        %v2483 = vsel %vm1493, %v2481, %v2482
        %v2484 = vrot.slane %v2482, 4
        %v2485 = vrot.slane %v2362, 5
        %v2486 = vsel %vm1493, %v2484, %v2485
        %v2487 = vrot.slane %v2363, 5
        %v2488 = vrot.slane %v2487, 4
        %v2489 = vrot.slane %v2364, 5
        %v2490 = vsel %vm1493, %v2488, %v2489
        %v2491 = vrot.slane %v2489, 4
        %v2492 = vrot.slane %v2365, 5
        %v2493 = vsel %vm1493, %v2491, %v2492
        %v2494 = vrot.slane %v2366, 5
        %v2495 = vrot.slane %v2494, 4
        %v2496 = vrot.slane %v2367, 5
        %v2497 = vsel %vm1493, %v2495, %v2496
        %v2498 = vrot.slane %v2496, 4
        %v2499 = vrot.slane %v2368, 5
        %v2500 = vsel %vm1493, %v2498, %v2499
        %v2501 = vrot.slane %v2369, 5
        %v2502 = vrot.slane %v2501, 4
        %v2503 = vrot.slane %v2370, 5
        %v2504 = vsel %vm1493, %v2502, %v2503
        %v2505 = vrot.slane %v2503, 4
        %v2506 = vrot.slane %v2371, 5
        %v2507 = vsel %vm1493, %v2505, %v2506
        %v2508 = vrot.slane %v2372, 5
        %v2509 = vrot.slane %v2508, 4
        %v2510 = vrot.slane %v2373, 5
        %v2511 = vsel %vm1493, %v2509, %v2510
        %v2512 = vrot.slane %v2510, 4
        %v2513 = vrot.slane %v2374, 5
        %v2514 = vsel %vm1493, %v2512, %v2513
        %v2515 = vrot.slane %v2375, 5
        %v2516 = vrot.slane %v2515, 4
        %v2517 = vrot.slane %v2376, 5
        %v2518 = vsel %vm1493, %v2516, %v2517
        %v2519 = vrot.slane %v2517, 4
        %v2520 = vrot.slane %v2377, 5
        %v2521 = vsel %vm1493, %v2519, %v2520
        %v2522 = vrot.slane %v2378, 5
        %v2523 = vrot.slane %v2522, 4
        %v2524 = vrot.slane %v2379, 5
        %v2525 = vsel %vm1493, %v2523, %v2524
        %v2526 = vrot.slane %v2524, 4
        %v2527 = vrot.slane %v2380, 5
        %v2528 = vsel %vm1493, %v2526, %v2527
        %v2529 = vrot.slane %v2381, 5
        %v2530 = vrot.slane %v2529, 4
        %v2531 = vrot.slane %v2382, 5
        %v2532 = vsel %vm1493, %v2530, %v2531
        %v2533 = vrot.slane %v2531, 4
        %v2534 = vrot.slane %v2383, 5
        %v2535 = vsel %vm1493, %v2533, %v2534
        %v2536 = vrot.slane %v2384, 5
        %v2537 = vrot.slane %v2536, 4
        %v2538 = vrot.slane %v2385, 5
        %v2539 = vsel %vm1493, %v2537, %v2538
        %v2540 = vrot.slane %v2538, 4
        %v2541 = vrot.slane %v2386, 5
        %v2542 = vsel %vm1493, %v2540, %v2541
        %v2543 = vrot.slane %v2387, 5
        %v2544 = vrot.slane %v2543, 4
        %v2545 = vrot.slane %v2388, 5
        %v2546 = vsel %vm1493, %v2544, %v2545
        %v2547 = vrot.slane %v2545, 4
        %v2548 = vrot.slane %v2389, 5
        %v2549 = vsel %vm1493, %v2547, %v2548
        %v2550 = vunpack.c.l.b16 %v2441
        %v2551 = vunpack.c.l.b16 %v2444
        %v2552 = vunpack.c.l.b16 %v2448
        %v2553 = vunpack.c.l.b16 %v2451
        %v2554 = vunpack.c.l.b16 %v2455
        %v2555 = vunpack.c.l.b16 %v2458
        %v2556 = vunpack.c.l.b16 %v2462
        %v2557 = vunpack.c.l.b16 %v2465
        %v2558 = vunpack.c.l.b16 %v2469
        %v2559 = vunpack.c.l.b16 %v2472
        %v2560 = vunpack.c.l.b16 %v2476
        %v2561 = vunpack.c.l.b16 %v2479
        %v2562 = vunpack.c.l.b16 %v2483
        %v2563 = vunpack.c.l.b16 %v2486
        %v2564 = vunpack.c.l.b16 %v2490
        %v2565 = vunpack.c.l.b16 %v2493
        %v2566 = vunpack.c.l.b16 %v2497
        %v2567 = vunpack.c.l.b16 %v2500
        %v2568 = vunpack.c.l.b16 %v2504
        %v2569 = vunpack.c.l.b16 %v2507
        %v2570 = vunpack.c.l.b16 %v2511
        %v2571 = vunpack.c.l.b16 %v2514
        %v2572 = vunpack.c.l.b16 %v2518
        %v2573 = vunpack.c.l.b16 %v2521
        %v2574 = vunpack.c.l.b16 %v2525
        %v2575 = vunpack.c.l.b16 %v2528
        %v2576 = vunpack.c.l.b16 %v2532
        %v2577 = vunpack.c.l.b16 %v2535
        %v2578 = vunpack.c.l.b16 %v2539
        %v2579 = vunpack.c.l.b16 %v2542
        %v2580 = vunpack.c.l.b16 %v2546
        %v2581 = vunpack.c.l.b16 %v2549
        %v2582 = vpack.c.b16 %v2551, %v2550
        %v2583 = vpack.c.b16 %v2553, %v2552
        %v2584 = vpack.c.b16 %v2555, %v2554
        %v2585 = vpack.c.b16 %v2557, %v2556
        %v2586 = vpack.c.b16 %v2559, %v2558
        %v2587 = vpack.c.b16 %v2561, %v2560
        %v2588 = vpack.c.b16 %v2563, %v2562
        %v2589 = vpack.c.b16 %v2565, %v2564
        %v2590 = vpack.c.b16 %v2567, %v2566
        %v2591 = vpack.c.b16 %v2569, %v2568
        %v2592 = vpack.c.b16 %v2571, %v2570
        %v2593 = vpack.c.b16 %v2573, %v2572
        %v2594 = vpack.c.b16 %v2575, %v2574
        %v2595 = vpack.c.b16 %v2577, %v2576
        %v2596 = vpack.c.b16 %v2579, %v2578
        %v2597 = vpack.c.b16 %v2581, %v2580
        %2614 = vst [vmem:[#allocation3 + $0x28] sm:$0xff] %v2582
        %2615 = vst [vmem:[#allocation3 + $0x70] sm:$0xff] %v2583
        %2616 = vst [vmem:[#allocation3 + $0xb8] sm:$0xff] %v2584
        %2617 = vst [vmem:[#allocation3 + $0x100] sm:$0xff] %v2585
        %2618 = vst [vmem:[#allocation3 + $0x148] sm:$0xff] %v2586
        %2619 = vst [vmem:[#allocation3 + $0x190] sm:$0xff] %v2587
        %2620 = vst [vmem:[#allocation3 + $0x1d8] sm:$0xff] %v2588
        %2621 = vst [vmem:[#allocation3 + $0x220] sm:$0xff] %v2589
        %2622 = vst [vmem:[#allocation3 + $0x268] sm:$0xff] %v2590
        %2623 = vst [vmem:[#allocation3 + $0x2b0] sm:$0xff] %v2591
        %2624 = vst [vmem:[#allocation3 + $0x2f8] sm:$0xff] %v2592
        %2625 = vst [vmem:[#allocation3 + $0x340] sm:$0xff] %v2593
        %2626 = vst [vmem:[#allocation3 + $0x388] sm:$0xff] %v2594
        %2627 = vst [vmem:[#allocation3 + $0x3d0] sm:$0xff] %v2595
        %2628 = vst [vmem:[#allocation3 + $0x418] sm:$0xff] %v2596
        %2629 = vst [vmem:[#allocation3 + $0x460] sm:$0xff] %v2597
        %s2630 = scalar_lea.vmem [#allocation2], 24
        %v2631 = vld [vmem:[%s2630] sm:$0xf]
        %v2632 = vld [vmem:[%s2630 + $0x4] sm:$0xf]
        %v2633 = vld [vmem:[%s2630 + $0xc] sm:$0xf]
        %v2634 = vld [vmem:[%s2630 + $0x10] sm:$0xf]
        %v2635 = vld [vmem:[%s2630 + $0x18] sm:$0xf]
        %v2636 = vld [vmem:[%s2630 + $0x1c] sm:$0xf]
        %v2637 = vld [vmem:[%s2630 + $0x24] sm:$0xf]
        %v2638 = vld [vmem:[%s2630 + $0x28] sm:$0xf]
        %v2639 = vld [vmem:[%s2630 + $0x30] sm:$0xf]
        %v2640 = vld [vmem:[%s2630 + $0x34] sm:$0xf]
        %v2641 = vld [vmem:[%s2630 + $0x3c] sm:$0xf]
        %v2642 = vld [vmem:[%s2630 + $0x40] sm:$0xf]
        %v2643 = vld [vmem:[%s2630 + $0x48] sm:$0xf]
        %v2644 = vld [vmem:[%s2630 + $0x4c] sm:$0xf]
        %v2645 = vld [vmem:[%s2630 + $0x54] sm:$0xf]
        %v2646 = vld [vmem:[%s2630 + $0x58] sm:$0xf]
        %v2647 = vld [vmem:[%s2630 + $0x60] sm:$0xf]
        %v2648 = vld [vmem:[%s2630 + $0x64] sm:$0xf]
        %v2649 = vld [vmem:[%s2630 + $0x6c] sm:$0xf]
        %v2650 = vld [vmem:[%s2630 + $0x70] sm:$0xf]
        %v2651 = vld [vmem:[%s2630 + $0x78] sm:$0xf]
        %v2652 = vld [vmem:[%s2630 + $0x7c] sm:$0xf]
        %v2653 = vld [vmem:[%s2630 + $0x84] sm:$0xf]
        %v2654 = vld [vmem:[%s2630 + $0x88] sm:$0xf]
        %v2655 = vld [vmem:[%s2630 + $0x90] sm:$0xf]
        %v2656 = vld [vmem:[%s2630 + $0x94] sm:$0xf]
        %v2657 = vld [vmem:[%s2630 + $0x9c] sm:$0xf]
        %v2658 = vld [vmem:[%s2630 + $0xa0] sm:$0xf]
        %v2659 = vld [vmem:[%s2630 + $0xa8] sm:$0xf]
        %v2660 = vld [vmem:[%s2630 + $0xac] sm:$0xf]
        %v2661 = vld [vmem:[%s2630 + $0xb4] sm:$0xf]
        %v2662 = vld [vmem:[%s2630 + $0xb8] sm:$0xf]
        %v2695 = vunpack.c.l.b16 %v2631
        %v2696 = vunpack.c.l.b16 %v2632
        %v2697 = vunpack.c.l.b16 %v2633
        %v2698 = vunpack.c.l.b16 %v2634
        %v2699 = vunpack.c.l.b16 %v2635
        %v2700 = vunpack.c.l.b16 %v2636
        %v2701 = vunpack.c.l.b16 %v2637
        %v2702 = vunpack.c.l.b16 %v2638
        %v2703 = vunpack.c.l.b16 %v2639
        %v2704 = vunpack.c.l.b16 %v2640
        %v2705 = vunpack.c.l.b16 %v2641
        %v2706 = vunpack.c.l.b16 %v2642
        %v2707 = vunpack.c.l.b16 %v2643
        %v2708 = vunpack.c.l.b16 %v2644
        %v2709 = vunpack.c.l.b16 %v2645
        %v2710 = vunpack.c.l.b16 %v2646
        %v2711 = vunpack.c.l.b16 %v2647
        %v2712 = vunpack.c.l.b16 %v2648
        %v2713 = vunpack.c.l.b16 %v2649
        %v2714 = vunpack.c.l.b16 %v2650
        %v2715 = vunpack.c.l.b16 %v2651
        %v2716 = vunpack.c.l.b16 %v2652
        %v2717 = vunpack.c.l.b16 %v2653
        %v2718 = vunpack.c.l.b16 %v2654
        %v2719 = vunpack.c.l.b16 %v2655
        %v2720 = vunpack.c.l.b16 %v2656
        %v2721 = vunpack.c.l.b16 %v2657
        %v2722 = vunpack.c.l.b16 %v2658
        %v2723 = vunpack.c.l.b16 %v2659
        %v2724 = vunpack.c.l.b16 %v2660
        %v2725 = vunpack.c.l.b16 %v2661
        %v2726 = vunpack.c.l.b16 %v2662
        %v2727 = vpack.c.b16 %v2696, %v2695
        %v2728 = vpack.c.b16 %v2698, %v2697
        %v2729 = vpack.c.b16 %v2700, %v2699
        %v2730 = vpack.c.b16 %v2702, %v2701
        %v2731 = vpack.c.b16 %v2704, %v2703
        %v2732 = vpack.c.b16 %v2706, %v2705
        %v2733 = vpack.c.b16 %v2708, %v2707
        %v2734 = vpack.c.b16 %v2710, %v2709
        %v2735 = vpack.c.b16 %v2712, %v2711
        %v2736 = vpack.c.b16 %v2714, %v2713
        %v2737 = vpack.c.b16 %v2716, %v2715
        %v2738 = vpack.c.b16 %v2718, %v2717
        %v2739 = vpack.c.b16 %v2720, %v2719
        %v2740 = vpack.c.b16 %v2722, %v2721
        %v2741 = vpack.c.b16 %v2724, %v2723
        %v2742 = vpack.c.b16 %v2726, %v2725
        %2759 = vst [vmem:[#allocation3 + $0x30] sm:$0xff] %v2727
        %2760 = vst [vmem:[#allocation3 + $0x78] sm:$0xff] %v2728
        %2761 = vst [vmem:[#allocation3 + $0xc0] sm:$0xff] %v2729
        %2762 = vst [vmem:[#allocation3 + $0x108] sm:$0xff] %v2730
        %2763 = vst [vmem:[#allocation3 + $0x150] sm:$0xff] %v2731
        %2764 = vst [vmem:[#allocation3 + $0x198] sm:$0xff] %v2732
        %2765 = vst [vmem:[#allocation3 + $0x1e0] sm:$0xff] %v2733
        %2766 = vst [vmem:[#allocation3 + $0x228] sm:$0xff] %v2734
        %2767 = vst [vmem:[#allocation3 + $0x270] sm:$0xff] %v2735
        %2768 = vst [vmem:[#allocation3 + $0x2b8] sm:$0xff] %v2736
        %2769 = vst [vmem:[#allocation3 + $0x300] sm:$0xff] %v2737
        %2770 = vst [vmem:[#allocation3 + $0x348] sm:$0xff] %v2738
        %2771 = vst [vmem:[#allocation3 + $0x390] sm:$0xff] %v2739
        %2772 = vst [vmem:[#allocation3 + $0x3d8] sm:$0xff] %v2740
        %2773 = vst [vmem:[#allocation3 + $0x420] sm:$0xff] %v2741
        %2774 = vst [vmem:[#allocation3 + $0x468] sm:$0xff] %v2742
        %v2775 = vld [vmem:[%s2630] sm:$0xf]
        %v2776 = vld [vmem:[%s2630 + $0x4] sm:$0xf]
        %v2777 = vld [vmem:[%s2630 + $0x8] sm:$0x1]
        %v2778 = vld [vmem:[%s2630 + $0xc] sm:$0xf]
        %v2779 = vld [vmem:[%s2630 + $0x10] sm:$0xf]
        %v2780 = vld [vmem:[%s2630 + $0x14] sm:$0x1]
        %v2781 = vld [vmem:[%s2630 + $0x18] sm:$0xf]
        %v2782 = vld [vmem:[%s2630 + $0x1c] sm:$0xf]
        %v2783 = vld [vmem:[%s2630 + $0x20] sm:$0x1]
        %v2784 = vld [vmem:[%s2630 + $0x24] sm:$0xf]
        %v2785 = vld [vmem:[%s2630 + $0x28] sm:$0xf]
        %v2786 = vld [vmem:[%s2630 + $0x2c] sm:$0x1]
        %v2787 = vld [vmem:[%s2630 + $0x30] sm:$0xf]
        %v2788 = vld [vmem:[%s2630 + $0x34] sm:$0xf]
        %v2789 = vld [vmem:[%s2630 + $0x38] sm:$0x1]
        %v2790 = vld [vmem:[%s2630 + $0x3c] sm:$0xf]
        %v2791 = vld [vmem:[%s2630 + $0x40] sm:$0xf]
        %v2792 = vld [vmem:[%s2630 + $0x44] sm:$0x1]
        %v2793 = vld [vmem:[%s2630 + $0x48] sm:$0xf]
        %v2794 = vld [vmem:[%s2630 + $0x4c] sm:$0xf]
        %v2795 = vld [vmem:[%s2630 + $0x50] sm:$0x1]
        %v2796 = vld [vmem:[%s2630 + $0x54] sm:$0xf]
        %v2797 = vld [vmem:[%s2630 + $0x58] sm:$0xf]
        %v2798 = vld [vmem:[%s2630 + $0x5c] sm:$0x1]
        %v2799 = vld [vmem:[%s2630 + $0x60] sm:$0xf]
        %v2800 = vld [vmem:[%s2630 + $0x64] sm:$0xf]
        %v2801 = vld [vmem:[%s2630 + $0x68] sm:$0x1]
        %v2802 = vld [vmem:[%s2630 + $0x6c] sm:$0xf]
        %v2803 = vld [vmem:[%s2630 + $0x70] sm:$0xf]
        %v2804 = vld [vmem:[%s2630 + $0x74] sm:$0x1]
        %v2805 = vld [vmem:[%s2630 + $0x78] sm:$0xf]
        %v2806 = vld [vmem:[%s2630 + $0x7c] sm:$0xf]
        %v2807 = vld [vmem:[%s2630 + $0x80] sm:$0x1]
        %v2808 = vld [vmem:[%s2630 + $0x84] sm:$0xf]
        %v2809 = vld [vmem:[%s2630 + $0x88] sm:$0xf]
        %v2810 = vld [vmem:[%s2630 + $0x8c] sm:$0x1]
        %v2811 = vld [vmem:[%s2630 + $0x90] sm:$0xf]
        %v2812 = vld [vmem:[%s2630 + $0x94] sm:$0xf]
        %v2813 = vld [vmem:[%s2630 + $0x98] sm:$0x1]
        %v2814 = vld [vmem:[%s2630 + $0x9c] sm:$0xf]
        %v2815 = vld [vmem:[%s2630 + $0xa0] sm:$0xf]
        %v2816 = vld [vmem:[%s2630 + $0xa4] sm:$0x1]
        %v2817 = vld [vmem:[%s2630 + $0xa8] sm:$0xf]
        %v2818 = vld [vmem:[%s2630 + $0xac] sm:$0xf]
        %v2819 = vld [vmem:[%s2630 + $0xb0] sm:$0x1]
        %v2820 = vld [vmem:[%s2630 + $0xb4] sm:$0xf]
        %v2821 = vld [vmem:[%s2630 + $0xb8] sm:$0xf]
        %v2822 = vld [vmem:[%s2630 + $0xbc] sm:$0x1]
        %v2824 = vshrl.u32 %v2775, 16
        %v2826 = vrot.slane %v2824, 4
        %v2827 = vshll.u32 %v2775, 16
        %v2829 = vrot.slane %v2827, 5
        %v2830 = vor.u32 %v2826, %v2829
        %v2831 = vrot.slane %v2830, 4
        %v2833 = vshll.u32 %v2776, 16
        %v2835 = vrot.slane %v2833, 5
        %v2836 = vsel %vm930, %v2831, %v2835
        %v2837 = vshrl.u32 %v2776, 16
        %v2839 = vrot.slane %v2837, 4
        %v2840 = vor.u32 %v2839, %v2835
        %v2841 = vrot.slane %v2840, 4
        %v2843 = vshll.u32 %v2777, 16
        %v2845 = vrot.slane %v2843, 5
        %v2846 = vsel %vm930, %v2841, %v2845
        %v2848 = vshrl.u32 %v2778, 16
        %v2850 = vrot.slane %v2848, 4
        %v2851 = vshll.u32 %v2778, 16
        %v2853 = vrot.slane %v2851, 5
        %v2854 = vor.u32 %v2850, %v2853
        %v2855 = vrot.slane %v2854, 4
        %v2857 = vshll.u32 %v2779, 16
        %v2859 = vrot.slane %v2857, 5
        %v2860 = vsel %vm930, %v2855, %v2859
        %v2861 = vshrl.u32 %v2779, 16
        %v2863 = vrot.slane %v2861, 4
        %v2864 = vor.u32 %v2863, %v2859
        %v2865 = vrot.slane %v2864, 4
        %v2867 = vshll.u32 %v2780, 16
        %v2869 = vrot.slane %v2867, 5
        %v2870 = vsel %vm930, %v2865, %v2869
        %v2872 = vshrl.u32 %v2781, 16
        %v2874 = vrot.slane %v2872, 4
        %v2875 = vshll.u32 %v2781, 16
        %v2877 = vrot.slane %v2875, 5
        %v2878 = vor.u32 %v2874, %v2877
        %v2879 = vrot.slane %v2878, 4
        %v2881 = vshll.u32 %v2782, 16
        %v2883 = vrot.slane %v2881, 5
        %v2884 = vsel %vm930, %v2879, %v2883
        %v2885 = vshrl.u32 %v2782, 16
        %v2887 = vrot.slane %v2885, 4
        %v2888 = vor.u32 %v2887, %v2883
        %v2889 = vrot.slane %v2888, 4
        %v2891 = vshll.u32 %v2783, 16
        %v2893 = vrot.slane %v2891, 5
        %v2894 = vsel %vm930, %v2889, %v2893
        %v2896 = vshrl.u32 %v2784, 16
        %v2898 = vrot.slane %v2896, 4
        %v2899 = vshll.u32 %v2784, 16
        %v2901 = vrot.slane %v2899, 5
        %v2902 = vor.u32 %v2898, %v2901
        %v2903 = vrot.slane %v2902, 4
        %v2905 = vshll.u32 %v2785, 16
        %v2907 = vrot.slane %v2905, 5
        %v2908 = vsel %vm930, %v2903, %v2907
        %v2909 = vshrl.u32 %v2785, 16
        %v2911 = vrot.slane %v2909, 4
        %v2912 = vor.u32 %v2911, %v2907
        %v2913 = vrot.slane %v2912, 4
        %v2915 = vshll.u32 %v2786, 16
        %v2917 = vrot.slane %v2915, 5
        %v2918 = vsel %vm930, %v2913, %v2917
        %v2920 = vshrl.u32 %v2787, 16
        %v2922 = vrot.slane %v2920, 4
        %v2923 = vshll.u32 %v2787, 16
        %v2925 = vrot.slane %v2923, 5
        %v2926 = vor.u32 %v2922, %v2925
        %v2927 = vrot.slane %v2926, 4
        %v2929 = vshll.u32 %v2788, 16
        %v2931 = vrot.slane %v2929, 5
        %v2932 = vsel %vm930, %v2927, %v2931
        %v2933 = vshrl.u32 %v2788, 16
        %v2935 = vrot.slane %v2933, 4
        %v2936 = vor.u32 %v2935, %v2931
        %v2937 = vrot.slane %v2936, 4
        %v2939 = vshll.u32 %v2789, 16
        %v2941 = vrot.slane %v2939, 5
        %v2942 = vsel %vm930, %v2937, %v2941
        %v2944 = vshrl.u32 %v2790, 16
        %v2946 = vrot.slane %v2944, 4
        %v2947 = vshll.u32 %v2790, 16
        %v2949 = vrot.slane %v2947, 5
        %v2950 = vor.u32 %v2946, %v2949
        %v2951 = vrot.slane %v2950, 4
        %v2953 = vshll.u32 %v2791, 16
        %v2955 = vrot.slane %v2953, 5
        %v2956 = vsel %vm930, %v2951, %v2955
        %v2957 = vshrl.u32 %v2791, 16
        %v2959 = vrot.slane %v2957, 4
        %v2960 = vor.u32 %v2959, %v2955
        %v2961 = vrot.slane %v2960, 4
        %v2963 = vshll.u32 %v2792, 16
        %v2965 = vrot.slane %v2963, 5
        %v2966 = vsel %vm930, %v2961, %v2965
        %v2968 = vshrl.u32 %v2793, 16
        %v2970 = vrot.slane %v2968, 4
        %v2971 = vshll.u32 %v2793, 16
        %v2973 = vrot.slane %v2971, 5
        %v2974 = vor.u32 %v2970, %v2973
        %v2975 = vrot.slane %v2974, 4
        %v2977 = vshll.u32 %v2794, 16
        %v2979 = vrot.slane %v2977, 5
        %v2980 = vsel %vm930, %v2975, %v2979
        %v2981 = vshrl.u32 %v2794, 16
        %v2983 = vrot.slane %v2981, 4
        %v2984 = vor.u32 %v2983, %v2979
        %v2985 = vrot.slane %v2984, 4
        %v2987 = vshll.u32 %v2795, 16
        %v2989 = vrot.slane %v2987, 5
        %v2990 = vsel %vm930, %v2985, %v2989
        %v2992 = vshrl.u32 %v2796, 16
        %v2994 = vrot.slane %v2992, 4
        %v2995 = vshll.u32 %v2796, 16
        %v2997 = vrot.slane %v2995, 5
        %v2998 = vor.u32 %v2994, %v2997
        %v2999 = vrot.slane %v2998, 4
        %v3001 = vshll.u32 %v2797, 16
        %v3003 = vrot.slane %v3001, 5
        %v3004 = vsel %vm930, %v2999, %v3003
        %v3005 = vshrl.u32 %v2797, 16
        %v3007 = vrot.slane %v3005, 4
        %v3008 = vor.u32 %v3007, %v3003
        %v3009 = vrot.slane %v3008, 4
        %v3011 = vshll.u32 %v2798, 16
        %v3013 = vrot.slane %v3011, 5
        %v3014 = vsel %vm930, %v3009, %v3013
        %v3016 = vshrl.u32 %v2799, 16
        %v3018 = vrot.slane %v3016, 4
        %v3019 = vshll.u32 %v2799, 16
        %v3021 = vrot.slane %v3019, 5
        %v3022 = vor.u32 %v3018, %v3021
        %v3023 = vrot.slane %v3022, 4
        %v3025 = vshll.u32 %v2800, 16
        %v3027 = vrot.slane %v3025, 5
        %v3028 = vsel %vm930, %v3023, %v3027
        %v3029 = vshrl.u32 %v2800, 16
        %v3031 = vrot.slane %v3029, 4
        %v3032 = vor.u32 %v3031, %v3027
        %v3033 = vrot.slane %v3032, 4
        %v3035 = vshll.u32 %v2801, 16
        %v3037 = vrot.slane %v3035, 5
        %v3038 = vsel %vm930, %v3033, %v3037
        %v3040 = vshrl.u32 %v2802, 16
        %v3042 = vrot.slane %v3040, 4
        %v3043 = vshll.u32 %v2802, 16
        %v3045 = vrot.slane %v3043, 5
        %v3046 = vor.u32 %v3042, %v3045
        %v3047 = vrot.slane %v3046, 4
        %v3049 = vshll.u32 %v2803, 16
        %v3051 = vrot.slane %v3049, 5
        %v3052 = vsel %vm930, %v3047, %v3051
        %v3053 = vshrl.u32 %v2803, 16
        %v3055 = vrot.slane %v3053, 4
        %v3056 = vor.u32 %v3055, %v3051
        %v3057 = vrot.slane %v3056, 4
        %v3059 = vshll.u32 %v2804, 16
        %v3061 = vrot.slane %v3059, 5
        %v3062 = vsel %vm930, %v3057, %v3061
        %v3064 = vshrl.u32 %v2805, 16
        %v3066 = vrot.slane %v3064, 4
        %v3067 = vshll.u32 %v2805, 16
        %v3069 = vrot.slane %v3067, 5
        %v3070 = vor.u32 %v3066, %v3069
        %v3071 = vrot.slane %v3070, 4
        %v3073 = vshll.u32 %v2806, 16
        %v3075 = vrot.slane %v3073, 5
        %v3076 = vsel %vm930, %v3071, %v3075
        %v3077 = vshrl.u32 %v2806, 16
        %v3079 = vrot.slane %v3077, 4
        %v3080 = vor.u32 %v3079, %v3075
        %v3081 = vrot.slane %v3080, 4
        %v3083 = vshll.u32 %v2807, 16
        %v3085 = vrot.slane %v3083, 5
        %v3086 = vsel %vm930, %v3081, %v3085
        %v3088 = vshrl.u32 %v2808, 16
        %v3090 = vrot.slane %v3088, 4
        %v3091 = vshll.u32 %v2808, 16
        %v3093 = vrot.slane %v3091, 5
        %v3094 = vor.u32 %v3090, %v3093
        %v3095 = vrot.slane %v3094, 4
        %v3097 = vshll.u32 %v2809, 16
        %v3099 = vrot.slane %v3097, 5
        %v3100 = vsel %vm930, %v3095, %v3099
        %v3101 = vshrl.u32 %v2809, 16
        %v3103 = vrot.slane %v3101, 4
        %v3104 = vor.u32 %v3103, %v3099
        %v3105 = vrot.slane %v3104, 4
        %v3107 = vshll.u32 %v2810, 16
        %v3109 = vrot.slane %v3107, 5
        %v3110 = vsel %vm930, %v3105, %v3109
        %v3112 = vshrl.u32 %v2811, 16
        %v3114 = vrot.slane %v3112, 4
        %v3115 = vshll.u32 %v2811, 16
        %v3117 = vrot.slane %v3115, 5
        %v3118 = vor.u32 %v3114, %v3117
        %v3119 = vrot.slane %v3118, 4
        %v3121 = vshll.u32 %v2812, 16
        %v3123 = vrot.slane %v3121, 5
        %v3124 = vsel %vm930, %v3119, %v3123
        %v3125 = vshrl.u32 %v2812, 16
        %v3127 = vrot.slane %v3125, 4
        %v3128 = vor.u32 %v3127, %v3123
        %v3129 = vrot.slane %v3128, 4
        %v3131 = vshll.u32 %v2813, 16
        %v3133 = vrot.slane %v3131, 5
        %v3134 = vsel %vm930, %v3129, %v3133
        %v3136 = vshrl.u32 %v2814, 16
        %v3138 = vrot.slane %v3136, 4
        %v3139 = vshll.u32 %v2814, 16
        %v3141 = vrot.slane %v3139, 5
        %v3142 = vor.u32 %v3138, %v3141
        %v3143 = vrot.slane %v3142, 4
        %v3145 = vshll.u32 %v2815, 16
        %v3147 = vrot.slane %v3145, 5
        %v3148 = vsel %vm930, %v3143, %v3147
        %v3149 = vshrl.u32 %v2815, 16
        %v3151 = vrot.slane %v3149, 4
        %v3152 = vor.u32 %v3151, %v3147
        %v3153 = vrot.slane %v3152, 4
        %v3155 = vshll.u32 %v2816, 16
        %v3157 = vrot.slane %v3155, 5
        %v3158 = vsel %vm930, %v3153, %v3157
        %v3160 = vshrl.u32 %v2817, 16
        %v3162 = vrot.slane %v3160, 4
        %v3163 = vshll.u32 %v2817, 16
        %v3165 = vrot.slane %v3163, 5
        %v3166 = vor.u32 %v3162, %v3165
        %v3167 = vrot.slane %v3166, 4
        %v3169 = vshll.u32 %v2818, 16
        %v3171 = vrot.slane %v3169, 5
        %v3172 = vsel %vm930, %v3167, %v3171
        %v3173 = vshrl.u32 %v2818, 16
        %v3175 = vrot.slane %v3173, 4
        %v3176 = vor.u32 %v3175, %v3171
        %v3177 = vrot.slane %v3176, 4
        %v3179 = vshll.u32 %v2819, 16
        %v3181 = vrot.slane %v3179, 5
        %v3182 = vsel %vm930, %v3177, %v3181
        %v3184 = vshrl.u32 %v2820, 16
        %v3186 = vrot.slane %v3184, 4
        %v3187 = vshll.u32 %v2820, 16
        %v3189 = vrot.slane %v3187, 5
        %v3190 = vor.u32 %v3186, %v3189
        %v3191 = vrot.slane %v3190, 4
        %v3193 = vshll.u32 %v2821, 16
        %v3195 = vrot.slane %v3193, 5
        %v3196 = vsel %vm930, %v3191, %v3195
        %v3197 = vshrl.u32 %v2821, 16
        %v3199 = vrot.slane %v3197, 4
        %v3200 = vor.u32 %v3199, %v3195
        %v3201 = vrot.slane %v3200, 4
        %v3203 = vshll.u32 %v2822, 16
        %v3205 = vrot.slane %v3203, 5
        %v3206 = vsel %vm930, %v3201, %v3205
        %v3207 = vunpack.c.l.b16 %v2836
        %v3208 = vunpack.c.l.b16 %v2846
        %v3209 = vunpack.c.l.b16 %v2860
        %v3210 = vunpack.c.l.b16 %v2870
        %v3211 = vunpack.c.l.b16 %v2884
        %v3212 = vunpack.c.l.b16 %v2894
        %v3213 = vunpack.c.l.b16 %v2908
        %v3214 = vunpack.c.l.b16 %v2918
        %v3215 = vunpack.c.l.b16 %v2932
        %v3216 = vunpack.c.l.b16 %v2942
        %v3217 = vunpack.c.l.b16 %v2956
        %v3218 = vunpack.c.l.b16 %v2966
        %v3219 = vunpack.c.l.b16 %v2980
        %v3220 = vunpack.c.l.b16 %v2990
        %v3221 = vunpack.c.l.b16 %v3004
        %v3222 = vunpack.c.l.b16 %v3014
        %v3223 = vunpack.c.l.b16 %v3028
        %v3224 = vunpack.c.l.b16 %v3038
        %v3225 = vunpack.c.l.b16 %v3052
        %v3226 = vunpack.c.l.b16 %v3062
        %v3227 = vunpack.c.l.b16 %v3076
        %v3228 = vunpack.c.l.b16 %v3086
        %v3229 = vunpack.c.l.b16 %v3100
        %v3230 = vunpack.c.l.b16 %v3110
        %v3231 = vunpack.c.l.b16 %v3124
        %v3232 = vunpack.c.l.b16 %v3134
        %v3233 = vunpack.c.l.b16 %v3148
        %v3234 = vunpack.c.l.b16 %v3158
        %v3235 = vunpack.c.l.b16 %v3172
        %v3236 = vunpack.c.l.b16 %v3182
        %v3237 = vunpack.c.l.b16 %v3196
        %v3238 = vunpack.c.l.b16 %v3206
        %v3239 = vpack.c.b16 %v3208, %v3207
        %v3240 = vpack.c.b16 %v3210, %v3209
        %v3241 = vpack.c.b16 %v3212, %v3211
        %v3242 = vpack.c.b16 %v3214, %v3213
        %v3243 = vpack.c.b16 %v3216, %v3215
        %v3244 = vpack.c.b16 %v3218, %v3217
        %v3245 = vpack.c.b16 %v3220, %v3219
        %v3246 = vpack.c.b16 %v3222, %v3221
        %v3247 = vpack.c.b16 %v3224, %v3223
        %v3248 = vpack.c.b16 %v3226, %v3225
        %v3249 = vpack.c.b16 %v3228, %v3227
        %v3250 = vpack.c.b16 %v3230, %v3229
        %v3251 = vpack.c.b16 %v3232, %v3231
        %v3252 = vpack.c.b16 %v3234, %v3233
        %v3253 = vpack.c.b16 %v3236, %v3235
        %v3254 = vpack.c.b16 %v3238, %v3237
        %3271 = vst [vmem:[#allocation3 + $0x38] sm:$0xff] %v3239
        %3272 = vst [vmem:[#allocation3 + $0x80] sm:$0xff] %v3240
        %3273 = vst [vmem:[#allocation3 + $0xc8] sm:$0xff] %v3241
        %3274 = vst [vmem:[#allocation3 + $0x110] sm:$0xff] %v3242
        %3275 = vst [vmem:[#allocation3 + $0x158] sm:$0xff] %v3243
        %3276 = vst [vmem:[#allocation3 + $0x1a0] sm:$0xff] %v3244
        %3277 = vst [vmem:[#allocation3 + $0x1e8] sm:$0xff] %v3245
        %3278 = vst [vmem:[#allocation3 + $0x230] sm:$0xff] %v3246
        %3279 = vst [vmem:[#allocation3 + $0x278] sm:$0xff] %v3247
        %3280 = vst [vmem:[#allocation3 + $0x2c0] sm:$0xff] %v3248
        %3281 = vst [vmem:[#allocation3 + $0x308] sm:$0xff] %v3249
        %3282 = vst [vmem:[#allocation3 + $0x350] sm:$0xff] %v3250
        %3283 = vst [vmem:[#allocation3 + $0x398] sm:$0xff] %v3251
        %3284 = vst [vmem:[#allocation3 + $0x3e0] sm:$0xff] %v3252
        %3285 = vst [vmem:[#allocation3 + $0x428] sm:$0xff] %v3253
        %3286 = vst [vmem:[#allocation3 + $0x470] sm:$0xff] %v3254
        %v3287 = vld [vmem:[%s2630] sm:$0xe]
        %v3288 = vld [vmem:[%s2630 + $0x4] sm:$0xf]
        %v3289 = vld [vmem:[%s2630 + $0x8] sm:$0x1]
        %v3290 = vld [vmem:[%s2630 + $0xc] sm:$0xe]
        %v3291 = vld [vmem:[%s2630 + $0x10] sm:$0xf]
        %v3292 = vld [vmem:[%s2630 + $0x14] sm:$0x1]
        %v3293 = vld [vmem:[%s2630 + $0x18] sm:$0xe]
        %v3294 = vld [vmem:[%s2630 + $0x1c] sm:$0xf]
        %v3295 = vld [vmem:[%s2630 + $0x20] sm:$0x1]
        %v3296 = vld [vmem:[%s2630 + $0x24] sm:$0xe]
        %v3297 = vld [vmem:[%s2630 + $0x28] sm:$0xf]
        %v3298 = vld [vmem:[%s2630 + $0x2c] sm:$0x1]
        %v3299 = vld [vmem:[%s2630 + $0x30] sm:$0xe]
        %v3300 = vld [vmem:[%s2630 + $0x34] sm:$0xf]
        %v3301 = vld [vmem:[%s2630 + $0x38] sm:$0x1]
        %v3302 = vld [vmem:[%s2630 + $0x3c] sm:$0xe]
        %v3303 = vld [vmem:[%s2630 + $0x40] sm:$0xf]
        %v3304 = vld [vmem:[%s2630 + $0x44] sm:$0x1]
        %v3305 = vld [vmem:[%s2630 + $0x48] sm:$0xe]
        %v3306 = vld [vmem:[%s2630 + $0x4c] sm:$0xf]
        %v3307 = vld [vmem:[%s2630 + $0x50] sm:$0x1]
        %v3308 = vld [vmem:[%s2630 + $0x54] sm:$0xe]
        %v3309 = vld [vmem:[%s2630 + $0x58] sm:$0xf]
        %v3310 = vld [vmem:[%s2630 + $0x5c] sm:$0x1]
        %v3311 = vld [vmem:[%s2630 + $0x60] sm:$0xe]
        %v3312 = vld [vmem:[%s2630 + $0x64] sm:$0xf]
        %v3313 = vld [vmem:[%s2630 + $0x68] sm:$0x1]
        %v3314 = vld [vmem:[%s2630 + $0x6c] sm:$0xe]
        %v3315 = vld [vmem:[%s2630 + $0x70] sm:$0xf]
        %v3316 = vld [vmem:[%s2630 + $0x74] sm:$0x1]
        %v3317 = vld [vmem:[%s2630 + $0x78] sm:$0xe]
        %v3318 = vld [vmem:[%s2630 + $0x7c] sm:$0xf]
        %v3319 = vld [vmem:[%s2630 + $0x80] sm:$0x1]
        %v3320 = vld [vmem:[%s2630 + $0x84] sm:$0xe]
        %v3321 = vld [vmem:[%s2630 + $0x88] sm:$0xf]
        %v3322 = vld [vmem:[%s2630 + $0x8c] sm:$0x1]
        %v3323 = vld [vmem:[%s2630 + $0x90] sm:$0xe]
        %v3324 = vld [vmem:[%s2630 + $0x94] sm:$0xf]
        %v3325 = vld [vmem:[%s2630 + $0x98] sm:$0x1]
        %v3326 = vld [vmem:[%s2630 + $0x9c] sm:$0xe]
        %v3327 = vld [vmem:[%s2630 + $0xa0] sm:$0xf]
        %v3328 = vld [vmem:[%s2630 + $0xa4] sm:$0x1]
        %v3329 = vld [vmem:[%s2630 + $0xa8] sm:$0xe]
        %v3330 = vld [vmem:[%s2630 + $0xac] sm:$0xf]
        %v3331 = vld [vmem:[%s2630 + $0xb0] sm:$0x1]
        %v3332 = vld [vmem:[%s2630 + $0xb4] sm:$0xe]
        %v3333 = vld [vmem:[%s2630 + $0xb8] sm:$0xf]
        %v3334 = vld [vmem:[%s2630 + $0xbc] sm:$0x1]
        %v3383 = vrot.slane %v3287, 5
        %v3384 = vrot.slane %v3383, 4
        %v3385 = vrot.slane %v3288, 5
        %v3386 = vsel %vm1493, %v3384, %v3385
        %v3387 = vrot.slane %v3385, 4
        %v3388 = vrot.slane %v3289, 5
        %v3389 = vsel %vm1493, %v3387, %v3388
        %v3390 = vrot.slane %v3290, 5
        %v3391 = vrot.slane %v3390, 4
        %v3392 = vrot.slane %v3291, 5
        %v3393 = vsel %vm1493, %v3391, %v3392
        %v3394 = vrot.slane %v3392, 4
        %v3395 = vrot.slane %v3292, 5
        %v3396 = vsel %vm1493, %v3394, %v3395
        %v3397 = vrot.slane %v3293, 5
        %v3398 = vrot.slane %v3397, 4
        %v3399 = vrot.slane %v3294, 5
        %v3400 = vsel %vm1493, %v3398, %v3399
        %v3401 = vrot.slane %v3399, 4
        %v3402 = vrot.slane %v3295, 5
        %v3403 = vsel %vm1493, %v3401, %v3402
        %v3404 = vrot.slane %v3296, 5
        %v3405 = vrot.slane %v3404, 4
        %v3406 = vrot.slane %v3297, 5
        %v3407 = vsel %vm1493, %v3405, %v3406
        %v3408 = vrot.slane %v3406, 4
        %v3409 = vrot.slane %v3298, 5
        %v3410 = vsel %vm1493, %v3408, %v3409
        %v3411 = vrot.slane %v3299, 5
        %v3412 = vrot.slane %v3411, 4
        %v3413 = vrot.slane %v3300, 5
        %v3414 = vsel %vm1493, %v3412, %v3413
        %v3415 = vrot.slane %v3413, 4
        %v3416 = vrot.slane %v3301, 5
        %v3417 = vsel %vm1493, %v3415, %v3416
        %v3418 = vrot.slane %v3302, 5
        %v3419 = vrot.slane %v3418, 4
        %v3420 = vrot.slane %v3303, 5
        %v3421 = vsel %vm1493, %v3419, %v3420
        %v3422 = vrot.slane %v3420, 4
        %v3423 = vrot.slane %v3304, 5
        %v3424 = vsel %vm1493, %v3422, %v3423
        %v3425 = vrot.slane %v3305, 5
        %v3426 = vrot.slane %v3425, 4
        %v3427 = vrot.slane %v3306, 5
        %v3428 = vsel %vm1493, %v3426, %v3427
        %v3429 = vrot.slane %v3427, 4
        %v3430 = vrot.slane %v3307, 5
        %v3431 = vsel %vm1493, %v3429, %v3430
        %v3432 = vrot.slane %v3308, 5
        %v3433 = vrot.slane %v3432, 4
        %v3434 = vrot.slane %v3309, 5
        %v3435 = vsel %vm1493, %v3433, %v3434
        %v3436 = vrot.slane %v3434, 4
        %v3437 = vrot.slane %v3310, 5
        %v3438 = vsel %vm1493, %v3436, %v3437
        %v3439 = vrot.slane %v3311, 5
        %v3440 = vrot.slane %v3439, 4
        %v3441 = vrot.slane %v3312, 5
        %v3442 = vsel %vm1493, %v3440, %v3441
        %v3443 = vrot.slane %v3441, 4
        %v3444 = vrot.slane %v3313, 5
        %v3445 = vsel %vm1493, %v3443, %v3444
        %v3446 = vrot.slane %v3314, 5
        %v3447 = vrot.slane %v3446, 4
        %v3448 = vrot.slane %v3315, 5
        %v3449 = vsel %vm1493, %v3447, %v3448
        %v3450 = vrot.slane %v3448, 4
        %v3451 = vrot.slane %v3316, 5
        %v3452 = vsel %vm1493, %v3450, %v3451
        %v3453 = vrot.slane %v3317, 5
        %v3454 = vrot.slane %v3453, 4
        %v3455 = vrot.slane %v3318, 5
        %v3456 = vsel %vm1493, %v3454, %v3455
        %v3457 = vrot.slane %v3455, 4
        %v3458 = vrot.slane %v3319, 5
        %v3459 = vsel %vm1493, %v3457, %v3458
        %v3460 = vrot.slane %v3320, 5
        %v3461 = vrot.slane %v3460, 4
        %v3462 = vrot.slane %v3321, 5
        %v3463 = vsel %vm1493, %v3461, %v3462
        %v3464 = vrot.slane %v3462, 4
        %v3465 = vrot.slane %v3322, 5
        %v3466 = vsel %vm1493, %v3464, %v3465
        %v3467 = vrot.slane %v3323, 5
        %v3468 = vrot.slane %v3467, 4
        %v3469 = vrot.slane %v3324, 5
        %v3470 = vsel %vm1493, %v3468, %v3469
        %v3471 = vrot.slane %v3469, 4
        %v3472 = vrot.slane %v3325, 5
        %v3473 = vsel %vm1493, %v3471, %v3472
        %v3474 = vrot.slane %v3326, 5
        %v3475 = vrot.slane %v3474, 4
        %v3476 = vrot.slane %v3327, 5
        %v3477 = vsel %vm1493, %v3475, %v3476
        %v3478 = vrot.slane %v3476, 4
        %v3479 = vrot.slane %v3328, 5
        %v3480 = vsel %vm1493, %v3478, %v3479
        %v3481 = vrot.slane %v3329, 5
        %v3482 = vrot.slane %v3481, 4
        %v3483 = vrot.slane %v3330, 5
        %v3484 = vsel %vm1493, %v3482, %v3483
        %v3485 = vrot.slane %v3483, 4
        %v3486 = vrot.slane %v3331, 5
        %v3487 = vsel %vm1493, %v3485, %v3486
        %v3488 = vrot.slane %v3332, 5
        %v3489 = vrot.slane %v3488, 4
        %v3490 = vrot.slane %v3333, 5
        %v3491 = vsel %vm1493, %v3489, %v3490
        %v3492 = vrot.slane %v3490, 4
        %v3493 = vrot.slane %v3334, 5
        %v3494 = vsel %vm1493, %v3492, %v3493
        %v3495 = vunpack.c.l.b16 %v3386
        %v3496 = vunpack.c.l.b16 %v3389
        %v3497 = vunpack.c.l.b16 %v3393
        %v3498 = vunpack.c.l.b16 %v3396
        %v3499 = vunpack.c.l.b16 %v3400
        %v3500 = vunpack.c.l.b16 %v3403
        %v3501 = vunpack.c.l.b16 %v3407
        %v3502 = vunpack.c.l.b16 %v3410
        %v3503 = vunpack.c.l.b16 %v3414
        %v3504 = vunpack.c.l.b16 %v3417
        %v3505 = vunpack.c.l.b16 %v3421
        %v3506 = vunpack.c.l.b16 %v3424
        %v3507 = vunpack.c.l.b16 %v3428
        %v3508 = vunpack.c.l.b16 %v3431
        %v3509 = vunpack.c.l.b16 %v3435
        %v3510 = vunpack.c.l.b16 %v3438
        %v3511 = vunpack.c.l.b16 %v3442
        %v3512 = vunpack.c.l.b16 %v3445
        %v3513 = vunpack.c.l.b16 %v3449
        %v3514 = vunpack.c.l.b16 %v3452
        %v3515 = vunpack.c.l.b16 %v3456
        %v3516 = vunpack.c.l.b16 %v3459
        %v3517 = vunpack.c.l.b16 %v3463
        %v3518 = vunpack.c.l.b16 %v3466
        %v3519 = vunpack.c.l.b16 %v3470
        %v3520 = vunpack.c.l.b16 %v3473
        %v3521 = vunpack.c.l.b16 %v3477
        %v3522 = vunpack.c.l.b16 %v3480
        %v3523 = vunpack.c.l.b16 %v3484
        %v3524 = vunpack.c.l.b16 %v3487
        %v3525 = vunpack.c.l.b16 %v3491
        %v3526 = vunpack.c.l.b16 %v3494
        %v3527 = vpack.c.b16 %v3496, %v3495
        %v3528 = vpack.c.b16 %v3498, %v3497
        %v3529 = vpack.c.b16 %v3500, %v3499
        %v3530 = vpack.c.b16 %v3502, %v3501
        %v3531 = vpack.c.b16 %v3504, %v3503
        %v3532 = vpack.c.b16 %v3506, %v3505
        %v3533 = vpack.c.b16 %v3508, %v3507
        %v3534 = vpack.c.b16 %v3510, %v3509
        %v3535 = vpack.c.b16 %v3512, %v3511
        %v3536 = vpack.c.b16 %v3514, %v3513
        %v3537 = vpack.c.b16 %v3516, %v3515
        %v3538 = vpack.c.b16 %v3518, %v3517
        %v3539 = vpack.c.b16 %v3520, %v3519
        %v3540 = vpack.c.b16 %v3522, %v3521
        %v3541 = vpack.c.b16 %v3524, %v3523
        %v3542 = vpack.c.b16 %v3526, %v3525
        %3559 = vst [vmem:[#allocation3 + $0x40] sm:$0xff] %v3527
        %3560 = vst [vmem:[#allocation3 + $0x88] sm:$0xff] %v3528
        %3561 = vst [vmem:[#allocation3 + $0xd0] sm:$0xff] %v3529
        %3562 = vst [vmem:[#allocation3 + $0x118] sm:$0xff] %v3530
        %3563 = vst [vmem:[#allocation3 + $0x160] sm:$0xff] %v3531
        %3564 = vst [vmem:[#allocation3 + $0x1a8] sm:$0xff] %v3532
        %3565 = vst [vmem:[#allocation3 + $0x1f0] sm:$0xff] %v3533
        %3566 = vst [vmem:[#allocation3 + $0x238] sm:$0xff] %v3534
        %3567 = vst [vmem:[#allocation3 + $0x280] sm:$0xff] %v3535
        %3568 = vst [vmem:[#allocation3 + $0x2c8] sm:$0xff] %v3536
        %3569 = vst [vmem:[#allocation3 + $0x310] sm:$0xff] %v3537
        %3570 = vst [vmem:[#allocation3 + $0x358] sm:$0xff] %v3538
        %3571 = vst [vmem:[#allocation3 + $0x3a0] sm:$0xff] %v3539
        %3572 = vst [vmem:[#allocation3 + $0x3e8] sm:$0xff] %v3540
        %3573 = vst [vmem:[#allocation3 + $0x430] sm:$0xff] %v3541
        %3574 = vst [vmem:[#allocation3 + $0x478] sm:$0xff] %v3542
        %v3575 = vld [vmem:[#allocation3] sm:$0xff]
        %v3576 = vld [vmem:[#allocation3 + $0x8] sm:$0xff]
        %v3577 = vld [vmem:[#allocation3 + $0x10] sm:$0xff]
        %v3578 = vld [vmem:[#allocation3 + $0x18] sm:$0xff]
        %v3579 = vld [vmem:[#allocation3 + $0x20] sm:$0xff]
        %v3580 = vld [vmem:[#allocation3 + $0x28] sm:$0xff]
        %v3581 = vld [vmem:[#allocation3 + $0x30] sm:$0xff]
        %v3582 = vld [vmem:[#allocation3 + $0x38] sm:$0xff]
        %v3583 = vld [vmem:[#allocation3 + $0x40] sm:$0xff]
        %v3584 = vld [vmem:[#allocation3 + $0x48] sm:$0xff]
        %v3585 = vld [vmem:[#allocation3 + $0x50] sm:$0xff]
        %v3586 = vld [vmem:[#allocation3 + $0x58] sm:$0xff]
        %v3587 = vld [vmem:[#allocation3 + $0x60] sm:$0xff]
        %v3588 = vld [vmem:[#allocation3 + $0x68] sm:$0xff]
        %v3589 = vld [vmem:[#allocation3 + $0x70] sm:$0xff]
        %v3590 = vld [vmem:[#allocation3 + $0x78] sm:$0xff]
        %v3591 = vld [vmem:[#allocation3 + $0x80] sm:$0xff]
        %v3592 = vld [vmem:[#allocation3 + $0x88] sm:$0xff]
        %v3593 = vld [vmem:[#allocation3 + $0x90] sm:$0xff]
        %v3594 = vld [vmem:[#allocation3 + $0x98] sm:$0xff]
        %v3595 = vld [vmem:[#allocation3 + $0xa0] sm:$0xff]
        %v3596 = vld [vmem:[#allocation3 + $0xa8] sm:$0xff]
        %v3597 = vld [vmem:[#allocation3 + $0xb0] sm:$0xff]
        %v3598 = vld [vmem:[#allocation3 + $0xb8] sm:$0xff]
        %v3599 = vld [vmem:[#allocation3 + $0xc0] sm:$0xff]
        %v3600 = vld [vmem:[#allocation3 + $0xc8] sm:$0xff]
        %v3601 = vld [vmem:[#allocation3 + $0xd0] sm:$0xff]
        %v3602 = vld [vmem:[#allocation3 + $0xd8] sm:$0xff]
        %v3603 = vld [vmem:[#allocation3 + $0xe0] sm:$0xff]
        %v3604 = vld [vmem:[#allocation3 + $0xe8] sm:$0xff]
        %v3605 = vld [vmem:[#allocation3 + $0xf0] sm:$0xff]
        %v3606 = vld [vmem:[#allocation3 + $0xf8] sm:$0xff]
        %v3607 = vld [vmem:[#allocation3 + $0x100] sm:$0xff]
        %v3608 = vld [vmem:[#allocation3 + $0x108] sm:$0xff]
        %v3609 = vld [vmem:[#allocation3 + $0x110] sm:$0xff]
        %v3610 = vld [vmem:[#allocation3 + $0x118] sm:$0xff]
        %v3611 = vld [vmem:[#allocation3 + $0x120] sm:$0xff]
        %v3612 = vld [vmem:[#allocation3 + $0x128] sm:$0xff]
        %v3613 = vld [vmem:[#allocation3 + $0x130] sm:$0xff]
        %v3614 = vld [vmem:[#allocation3 + $0x138] sm:$0xff]
        %v3615 = vld [vmem:[#allocation3 + $0x140] sm:$0xff]
        %v3616 = vld [vmem:[#allocation3 + $0x148] sm:$0xff]
        %v3617 = vld [vmem:[#allocation3 + $0x150] sm:$0xff]
        %v3618 = vld [vmem:[#allocation3 + $0x158] sm:$0xff]
        %v3619 = vld [vmem:[#allocation3 + $0x160] sm:$0xff]
        %v3620 = vld [vmem:[#allocation3 + $0x168] sm:$0xff]
        %v3621 = vld [vmem:[#allocation3 + $0x170] sm:$0xff]
        %v3622 = vld [vmem:[#allocation3 + $0x178] sm:$0xff]
        %v3623 = vld [vmem:[#allocation3 + $0x180] sm:$0xff]
        %v3624 = vld [vmem:[#allocation3 + $0x188] sm:$0xff]
        %v3625 = vld [vmem:[#allocation3 + $0x190] sm:$0xff]
        %v3626 = vld [vmem:[#allocation3 + $0x198] sm:$0xff]
        %v3627 = vld [vmem:[#allocation3 + $0x1a0] sm:$0xff]
        %v3628 = vld [vmem:[#allocation3 + $0x1a8] sm:$0xff]
        %v3629 = vld [vmem:[#allocation3 + $0x1b0] sm:$0xff]
        %v3630 = vld [vmem:[#allocation3 + $0x1b8] sm:$0xff]
        %v3631 = vld [vmem:[#allocation3 + $0x1c0] sm:$0xff]
        %v3632 = vld [vmem:[#allocation3 + $0x1c8] sm:$0xff]
        %v3633 = vld [vmem:[#allocation3 + $0x1d0] sm:$0xff]
        %v3634 = vld [vmem:[#allocation3 + $0x1d8] sm:$0xff]
        %v3635 = vld [vmem:[#allocation3 + $0x1e0] sm:$0xff]
        %v3636 = vld [vmem:[#allocation3 + $0x1e8] sm:$0xff]
        %v3637 = vld [vmem:[#allocation3 + $0x1f0] sm:$0xff]
        %v3638 = vld [vmem:[#allocation3 + $0x1f8] sm:$0xff]
        %v3639 = vld [vmem:[#allocation3 + $0x200] sm:$0xff]
        %v3640 = vld [vmem:[#allocation3 + $0x208] sm:$0xff]
        %v3641 = vld [vmem:[#allocation3 + $0x210] sm:$0xff]
        %v3642 = vld [vmem:[#allocation3 + $0x218] sm:$0xff]
        %v3643 = vld [vmem:[#allocation3 + $0x220] sm:$0xff]
        %v3644 = vld [vmem:[#allocation3 + $0x228] sm:$0xff]
        %v3645 = vld [vmem:[#allocation3 + $0x230] sm:$0xff]
        %v3646 = vld [vmem:[#allocation3 + $0x238] sm:$0xff]
        %v3647 = vld [vmem:[#allocation3 + $0x240] sm:$0xff]
        %v3648 = vld [vmem:[#allocation3 + $0x248] sm:$0xff]
        %v3649 = vld [vmem:[#allocation3 + $0x250] sm:$0xff]
        %v3650 = vld [vmem:[#allocation3 + $0x258] sm:$0xff]
        %v3651 = vld [vmem:[#allocation3 + $0x260] sm:$0xff]
        %v3652 = vld [vmem:[#allocation3 + $0x268] sm:$0xff]
        %v3653 = vld [vmem:[#allocation3 + $0x270] sm:$0xff]
        %v3654 = vld [vmem:[#allocation3 + $0x278] sm:$0xff]
        %v3655 = vld [vmem:[#allocation3 + $0x280] sm:$0xff]
        %v3656 = vld [vmem:[#allocation3 + $0x288] sm:$0xff]
        %v3657 = vld [vmem:[#allocation3 + $0x290] sm:$0xff]
        %v3658 = vld [vmem:[#allocation3 + $0x298] sm:$0xff]
        %v3659 = vld [vmem:[#allocation3 + $0x2a0] sm:$0xff]
        %v3660 = vld [vmem:[#allocation3 + $0x2a8] sm:$0xff]
        %v3661 = vld [vmem:[#allocation3 + $0x2b0] sm:$0xff]
        %v3662 = vld [vmem:[#allocation3 + $0x2b8] sm:$0xff]
        %v3663 = vld [vmem:[#allocation3 + $0x2c0] sm:$0xff]
        %v3664 = vld [vmem:[#allocation3 + $0x2c8] sm:$0xff]
        %v3665 = vld [vmem:[#allocation3 + $0x2d0] sm:$0xff]
        %v3666 = vld [vmem:[#allocation3 + $0x2d8] sm:$0xff]
        %v3667 = vld [vmem:[#allocation3 + $0x2e0] sm:$0xff]
        %v3668 = vld [vmem:[#allocation3 + $0x2e8] sm:$0xff]
        %v3669 = vld [vmem:[#allocation3 + $0x2f0] sm:$0xff]
        %v3670 = vld [vmem:[#allocation3 + $0x2f8] sm:$0xff]
        %v3671 = vld [vmem:[#allocation3 + $0x300] sm:$0xff]
        %v3672 = vld [vmem:[#allocation3 + $0x308] sm:$0xff]
        %v3673 = vld [vmem:[#allocation3 + $0x310] sm:$0xff]
        %v3674 = vld [vmem:[#allocation3 + $0x318] sm:$0xff]
        %v3675 = vld [vmem:[#allocation3 + $0x320] sm:$0xff]
        %v3676 = vld [vmem:[#allocation3 + $0x328] sm:$0xff]
        %v3677 = vld [vmem:[#allocation3 + $0x330] sm:$0xff]
        %v3678 = vld [vmem:[#allocation3 + $0x338] sm:$0xff]
        %v3679 = vld [vmem:[#allocation3 + $0x340] sm:$0xff]
        %v3680 = vld [vmem:[#allocation3 + $0x348] sm:$0xff]
        %v3681 = vld [vmem:[#allocation3 + $0x350] sm:$0xff]
        %v3682 = vld [vmem:[#allocation3 + $0x358] sm:$0xff]
        %v3683 = vld [vmem:[#allocation3 + $0x360] sm:$0xff]
        %v3684 = vld [vmem:[#allocation3 + $0x368] sm:$0xff]
        %v3685 = vld [vmem:[#allocation3 + $0x370] sm:$0xff]
        %v3686 = vld [vmem:[#allocation3 + $0x378] sm:$0xff]
        %v3687 = vld [vmem:[#allocation3 + $0x380] sm:$0xff]
        %v3688 = vld [vmem:[#allocation3 + $0x388] sm:$0xff]
        %v3689 = vld [vmem:[#allocation3 + $0x390] sm:$0xff]
        %v3690 = vld [vmem:[#allocation3 + $0x398] sm:$0xff]
        %v3691 = vld [vmem:[#allocation3 + $0x3a0] sm:$0xff]
        %v3692 = vld [vmem:[#allocation3 + $0x3a8] sm:$0xff]
        %v3693 = vld [vmem:[#allocation3 + $0x3b0] sm:$0xff]
        %v3694 = vld [vmem:[#allocation3 + $0x3b8] sm:$0xff]
        %v3695 = vld [vmem:[#allocation3 + $0x3c0] sm:$0xff]
        %v3696 = vld [vmem:[#allocation3 + $0x3c8] sm:$0xff]
        %v3697 = vld [vmem:[#allocation3 + $0x3d0] sm:$0xff]
        %v3698 = vld [vmem:[#allocation3 + $0x3d8] sm:$0xff]
        %v3699 = vld [vmem:[#allocation3 + $0x3e0] sm:$0xff]
        %v3700 = vld [vmem:[#allocation3 + $0x3e8] sm:$0xff]
        %v3701 = vld [vmem:[#allocation3 + $0x3f0] sm:$0xff]
        %v3702 = vld [vmem:[#allocation3 + $0x3f8] sm:$0xff]
        %v3703 = vld [vmem:[#allocation3 + $0x400] sm:$0xff]
        %v3704 = vld [vmem:[#allocation3 + $0x408] sm:$0xff]
        %v3705 = vld [vmem:[#allocation3 + $0x410] sm:$0xff]
        %v3706 = vld [vmem:[#allocation3 + $0x418] sm:$0xff]
        %v3707 = vld [vmem:[#allocation3 + $0x420] sm:$0xff]
        %v3708 = vld [vmem:[#allocation3 + $0x428] sm:$0xff]
        %v3709 = vld [vmem:[#allocation3 + $0x430] sm:$0xff]
        %v3710 = vld [vmem:[#allocation3 + $0x438] sm:$0xff]
        %v3711 = vld [vmem:[#allocation3 + $0x440] sm:$0xff]
        %v3712 = vld [vmem:[#allocation3 + $0x448] sm:$0xff]
        %v3713 = vld [vmem:[#allocation3 + $0x450] sm:$0xff]
        %v3714 = vld [vmem:[#allocation3 + $0x458] sm:$0xff]
        %v3715 = vld [vmem:[#allocation3 + $0x460] sm:$0xff]
        %v3716 = vld [vmem:[#allocation3 + $0x468] sm:$0xff]
        %v3717 = vld [vmem:[#allocation3 + $0x470] sm:$0xff]
        %v3718 = vld [vmem:[#allocation3 + $0x478] sm:$0xff]
        %v3719 = vld [vmem:[#allocation7] sm:$0xf]
        %v3720 = vld [vmem:[#allocation7 + $0x4] sm:$0xf]
        %v3721 = vld [vmem:[#allocation7 + $0x8] sm:$0xf]
        %v3722 = vld [vmem:[#allocation7 + $0xc] sm:$0xf]
        %v3723 = vld [vmem:[#allocation7 + $0x10] sm:$0xf]
        %v3724 = vld [vmem:[#allocation7 + $0x14] sm:$0xf]
        %v3725 = vld [vmem:[#allocation7 + $0x18] sm:$0xf]
        %v3726 = vld [vmem:[#allocation7 + $0x1c] sm:$0xf]
        %v3727 = vld [vmem:[#allocation7 + $0x20] sm:$0xf]
        %v3728 = vld [vmem:[#allocation7 + $0x24] sm:$0xf]
        %v3729 = vld [vmem:[#allocation7 + $0x28] sm:$0xf]
        %v3730 = vld [vmem:[#allocation7 + $0x2c] sm:$0xf]
        %v3731 = vld [vmem:[#allocation7 + $0x30] sm:$0xf]
        %v3732 = vld [vmem:[#allocation7 + $0x34] sm:$0xf]
        %v3733 = vld [vmem:[#allocation7 + $0x38] sm:$0xf]
        %v3734 = vld [vmem:[#allocation7 + $0x3c] sm:$0xf]
        %v3735 = vld [vmem:[#allocation7 + $0x40] sm:$0xf]
        %v3736 = vld [vmem:[#allocation7 + $0x44] sm:$0xf]
        %v3737 = vld [vmem:[#allocation7 + $0x48] sm:$0xf]
        %v3738 = vld [vmem:[#allocation7 + $0x4c] sm:$0xf]
        %v3739 = vld [vmem:[#allocation7 + $0x50] sm:$0xf]
        %v3740 = vld [vmem:[#allocation7 + $0x54] sm:$0xf]
        %v3741 = vld [vmem:[#allocation7 + $0x58] sm:$0xf]
        %v3742 = vld [vmem:[#allocation7 + $0x5c] sm:$0xf]
        %v3743 = vld [vmem:[#allocation7 + $0x60] sm:$0xf]
        %v3744 = vld [vmem:[#allocation7 + $0x64] sm:$0xf]
        %v3745 = vld [vmem:[#allocation7 + $0x68] sm:$0xf]
        %v3746 = vld [vmem:[#allocation7 + $0x6c] sm:$0xf]
        %v3747 = vld [vmem:[#allocation7 + $0x70] sm:$0xf]
        %v3748 = vld [vmem:[#allocation7 + $0x74] sm:$0xf]
        %v3749 = vld [vmem:[#allocation7 + $0x78] sm:$0xf]
        %v3750 = vld [vmem:[#allocation7 + $0x7c] sm:$0xf]
        %v3751 = vld [vmem:[#allocation7 + $0x80] sm:$0xf]
        %v3752 = vld [vmem:[#allocation7 + $0x84] sm:$0xf]
        %v3753 = vld [vmem:[#allocation7 + $0x88] sm:$0xf]
        %v3754 = vld [vmem:[#allocation7 + $0x8c] sm:$0xf]
        %v3755 = vld [vmem:[#allocation7 + $0x90] sm:$0xf]
        %v3756 = vld [vmem:[#allocation7 + $0x94] sm:$0xf]
        %v3757 = vld [vmem:[#allocation7 + $0x98] sm:$0xf]
        %v3758 = vld [vmem:[#allocation7 + $0x9c] sm:$0xf]
        %v3759 = vld [vmem:[#allocation7 + $0xa0] sm:$0xf]
        %v3760 = vld [vmem:[#allocation7 + $0xa4] sm:$0xf]
        %v3761 = vld [vmem:[#allocation7 + $0xa8] sm:$0xf]
        %v3762 = vld [vmem:[#allocation7 + $0xac] sm:$0xf]
        %v3763 = vld [vmem:[#allocation7 + $0xb0] sm:$0xf]
        %v3764 = vld [vmem:[#allocation7 + $0xb4] sm:$0xf]
        %v3765 = vld [vmem:[#allocation7 + $0xb8] sm:$0xf]
        %v3766 = vld [vmem:[#allocation7 + $0xbc] sm:$0xf]
        %v3767 = vld [vmem:[#allocation7 + $0xc0] sm:$0xf]
        %v3768 = vld [vmem:[#allocation7 + $0xc4] sm:$0xf]
        %v3769 = vld [vmem:[#allocation7 + $0xc8] sm:$0xf]
        %v3770 = vld [vmem:[#allocation7 + $0xcc] sm:$0xf]
        %v3771 = vld [vmem:[#allocation7 + $0xd0] sm:$0xf]
        %v3772 = vld [vmem:[#allocation7 + $0xd4] sm:$0xf]
        %v3773 = vld [vmem:[#allocation7 + $0xd8] sm:$0xf]
        %v3774 = vld [vmem:[#allocation7 + $0xdc] sm:$0xf]
        %v3775 = vld [vmem:[#allocation7 + $0xe0] sm:$0xf]
        %v3776 = vld [vmem:[#allocation7 + $0xe4] sm:$0xf]
        %v3777 = vld [vmem:[#allocation7 + $0xe8] sm:$0xf]
        %v3778 = vld [vmem:[#allocation7 + $0xec] sm:$0xf]
        %v3779 = vld [vmem:[#allocation7 + $0xf0] sm:$0xf]
        %v3780 = vld [vmem:[#allocation7 + $0xf4] sm:$0xf]
        %v3781 = vld [vmem:[#allocation7 + $0xf8] sm:$0xf]
        %v3782 = vld [vmem:[#allocation7 + $0xfc] sm:$0xf]
        %v3783 = vld [vmem:[#allocation7 + $0x100] sm:$0xf]
        %v3784 = vld [vmem:[#allocation7 + $0x104] sm:$0xf]
        %v3785 = vld [vmem:[#allocation7 + $0x108] sm:$0xf]
        %v3786 = vld [vmem:[#allocation7 + $0x10c] sm:$0xf]
        %v3787 = vld [vmem:[#allocation7 + $0x110] sm:$0xf]
        %v3788 = vld [vmem:[#allocation7 + $0x114] sm:$0xf]
        %v3789 = vld [vmem:[#allocation7 + $0x118] sm:$0xf]
        %v3790 = vld [vmem:[#allocation7 + $0x11c] sm:$0xf]
        %v3791 = vld [vmem:[#allocation7 + $0x120] sm:$0xf]
        %v3792 = vld [vmem:[#allocation7 + $0x124] sm:$0xf]
        %v3793 = vld [vmem:[#allocation7 + $0x128] sm:$0xf]
        %v3794 = vld [vmem:[#allocation7 + $0x12c] sm:$0xf]
        %v3795 = vld [vmem:[#allocation7 + $0x130] sm:$0xf]
        %v3796 = vld [vmem:[#allocation7 + $0x134] sm:$0xf]
        %v3797 = vld [vmem:[#allocation7 + $0x138] sm:$0xf]
        %v3798 = vld [vmem:[#allocation7 + $0x13c] sm:$0xf]
        %v3799 = vld [vmem:[#allocation7 + $0x140] sm:$0xf]
        %v3800 = vld [vmem:[#allocation7 + $0x144] sm:$0xf]
        %v3801 = vld [vmem:[#allocation7 + $0x148] sm:$0xf]
        %v3802 = vld [vmem:[#allocation7 + $0x14c] sm:$0xf]
        %v3803 = vld [vmem:[#allocation7 + $0x150] sm:$0xf]
        %v3804 = vld [vmem:[#allocation7 + $0x154] sm:$0xf]
        %v3805 = vld [vmem:[#allocation7 + $0x158] sm:$0xf]
        %v3806 = vld [vmem:[#allocation7 + $0x15c] sm:$0xf]
        %v3807 = vld [vmem:[#allocation7 + $0x160] sm:$0xf]
        %v3808 = vld [vmem:[#allocation7 + $0x164] sm:$0xf]
        %v3809 = vld [vmem:[#allocation7 + $0x168] sm:$0xf]
        %v3810 = vld [vmem:[#allocation7 + $0x16c] sm:$0xf]
        %v3811 = vld [vmem:[#allocation7 + $0x170] sm:$0xf]
        %v3812 = vld [vmem:[#allocation7 + $0x174] sm:$0xf]
        %v3813 = vld [vmem:[#allocation7 + $0x178] sm:$0xf]
        %v3814 = vld [vmem:[#allocation7 + $0x17c] sm:$0xf]
        %v3815 = vld [vmem:[#allocation7 + $0x180] sm:$0xf]
        %v3816 = vld [vmem:[#allocation7 + $0x184] sm:$0xf]
        %v3817 = vld [vmem:[#allocation7 + $0x188] sm:$0xf]
        %v3818 = vld [vmem:[#allocation7 + $0x18c] sm:$0xf]
        %v3819 = vld [vmem:[#allocation7 + $0x190] sm:$0xf]
        %v3820 = vld [vmem:[#allocation7 + $0x194] sm:$0xf]
        %v3821 = vld [vmem:[#allocation7 + $0x198] sm:$0xf]
        %v3822 = vld [vmem:[#allocation7 + $0x19c] sm:$0xf]
        %v3823 = vld [vmem:[#allocation7 + $0x1a0] sm:$0xf]
        %v3824 = vld [vmem:[#allocation7 + $0x1a4] sm:$0xf]
        %v3825 = vld [vmem:[#allocation7 + $0x1a8] sm:$0xf]
        %v3826 = vld [vmem:[#allocation7 + $0x1ac] sm:$0xf]
        %v3827 = vld [vmem:[#allocation7 + $0x1b0] sm:$0xf]
        %v3828 = vld [vmem:[#allocation7 + $0x1b4] sm:$0xf]
        %v3829 = vld [vmem:[#allocation7 + $0x1b8] sm:$0xf]
        %v3830 = vld [vmem:[#allocation7 + $0x1bc] sm:$0xf]
        %v3831 = vld [vmem:[#allocation7 + $0x1c0] sm:$0xf]
        %v3832 = vld [vmem:[#allocation7 + $0x1c4] sm:$0xf]
        %v3833 = vld [vmem:[#allocation7 + $0x1c8] sm:$0xf]
        %v3834 = vld [vmem:[#allocation7 + $0x1cc] sm:$0xf]
        %v3835 = vld [vmem:[#allocation7 + $0x1d0] sm:$0xf]
        %v3836 = vld [vmem:[#allocation7 + $0x1d4] sm:$0xf]
        %v3837 = vld [vmem:[#allocation7 + $0x1d8] sm:$0xf]
        %v3838 = vld [vmem:[#allocation7 + $0x1dc] sm:$0xf]
        %v3839 = vld [vmem:[#allocation7 + $0x1e0] sm:$0xf]
        %v3840 = vld [vmem:[#allocation7 + $0x1e4] sm:$0xf]
        %v3841 = vld [vmem:[#allocation7 + $0x1e8] sm:$0xf]
        %v3842 = vld [vmem:[#allocation7 + $0x1ec] sm:$0xf]
        %v3843 = vld [vmem:[#allocation7 + $0x1f0] sm:$0xf]
        %v3844 = vld [vmem:[#allocation7 + $0x1f4] sm:$0xf]
        %v3845 = vld [vmem:[#allocation7 + $0x1f8] sm:$0xf]
        %v3846 = vld [vmem:[#allocation7 + $0x1fc] sm:$0xf]
        %v3847 = vld [vmem:[#allocation7 + $0x200] sm:$0xf]
        %v3848 = vld [vmem:[#allocation7 + $0x204] sm:$0xf]
        %v3849 = vld [vmem:[#allocation7 + $0x208] sm:$0xf]
        %v3850 = vld [vmem:[#allocation7 + $0x20c] sm:$0xf]
        %v3851 = vld [vmem:[#allocation7 + $0x210] sm:$0xf]
        %v3852 = vld [vmem:[#allocation7 + $0x214] sm:$0xf]
        %v3853 = vld [vmem:[#allocation7 + $0x218] sm:$0xf]
        %v3854 = vld [vmem:[#allocation7 + $0x21c] sm:$0xf]
        %v3855 = vld [vmem:[#allocation7 + $0x220] sm:$0xf]
        %v3856 = vld [vmem:[#allocation7 + $0x224] sm:$0xf]
        %v3857 = vld [vmem:[#allocation7 + $0x228] sm:$0xf]
        %v3858 = vld [vmem:[#allocation7 + $0x22c] sm:$0xf]
        %v3859 = vld [vmem:[#allocation7 + $0x230] sm:$0xf]
        %v3860 = vld [vmem:[#allocation7 + $0x234] sm:$0xf]
        %v3861 = vld [vmem:[#allocation7 + $0x238] sm:$0xf]
        %v3862 = vld [vmem:[#allocation7 + $0x23c] sm:$0xf]
        %v3863 = vld [vmem:[%s2] sm:$0x1]
        %v3865 = vlaneseq
        %v3866 = vshrl.u32 %v3865, 7
        %v3867 = vsub.s32 0, %v3866
        %v3868 = vrot.slane %v3863, %v3867
        %v4014 = vunpack.c.l.b16 %v3719
        %v4015 = vunpack.c.l.b16 %v3720
        %v4016 = vunpack.c.l.b16 %v3721
        %v4017 = vunpack.c.l.b16 %v3722
        %v4018 = vunpack.c.l.b16 %v3723
        %v4019 = vunpack.c.l.b16 %v3724
        %v4020 = vunpack.c.l.b16 %v3725
        %v4021 = vunpack.c.l.b16 %v3726
        %v4022 = vunpack.c.l.b16 %v3727
        %v4023 = vunpack.c.l.b16 %v3728
        %v4024 = vunpack.c.l.b16 %v3729
        %v4025 = vunpack.c.l.b16 %v3730
        %v4026 = vunpack.c.l.b16 %v3731
        %v4027 = vunpack.c.l.b16 %v3732
        %v4028 = vunpack.c.l.b16 %v3733
        %v4029 = vunpack.c.l.b16 %v3734
        %v4030 = vunpack.c.l.b16 %v3735
        %v4031 = vunpack.c.l.b16 %v3736
        %v4032 = vunpack.c.l.b16 %v3737
        %v4033 = vunpack.c.l.b16 %v3738
        %v4034 = vunpack.c.l.b16 %v3739
        %v4035 = vunpack.c.l.b16 %v3740
        %v4036 = vunpack.c.l.b16 %v3741
        %v4037 = vunpack.c.l.b16 %v3742
        %v4038 = vunpack.c.l.b16 %v3743
        %v4039 = vunpack.c.l.b16 %v3744
        %v4040 = vunpack.c.l.b16 %v3745
        %v4041 = vunpack.c.l.b16 %v3746
        %v4042 = vunpack.c.l.b16 %v3747
        %v4043 = vunpack.c.l.b16 %v3748
        %v4044 = vunpack.c.l.b16 %v3749
        %v4045 = vunpack.c.l.b16 %v3750
        %v4046 = vunpack.c.l.b16 %v3751
        %v4047 = vunpack.c.l.b16 %v3752
        %v4048 = vunpack.c.l.b16 %v3753
        %v4049 = vunpack.c.l.b16 %v3754
        %v4050 = vunpack.c.l.b16 %v3755
        %v4051 = vunpack.c.l.b16 %v3756
        %v4052 = vunpack.c.l.b16 %v3757
        %v4053 = vunpack.c.l.b16 %v3758
        %v4054 = vunpack.c.l.b16 %v3759
        %v4055 = vunpack.c.l.b16 %v3760
        %v4056 = vunpack.c.l.b16 %v3761
        %v4057 = vunpack.c.l.b16 %v3762
        %v4058 = vunpack.c.l.b16 %v3763
        %v4059 = vunpack.c.l.b16 %v3764
        %v4060 = vunpack.c.l.b16 %v3765
        %v4061 = vunpack.c.l.b16 %v3766
        %v4062 = vunpack.c.l.b16 %v3767
        %v4063 = vunpack.c.l.b16 %v3768
        %v4064 = vunpack.c.l.b16 %v3769
        %v4065 = vunpack.c.l.b16 %v3770
        %v4066 = vunpack.c.l.b16 %v3771
        %v4067 = vunpack.c.l.b16 %v3772
        %v4068 = vunpack.c.l.b16 %v3773
        %v4069 = vunpack.c.l.b16 %v3774
        %v4070 = vunpack.c.l.b16 %v3775
        %v4071 = vunpack.c.l.b16 %v3776
        %v4072 = vunpack.c.l.b16 %v3777
        %v4073 = vunpack.c.l.b16 %v3778
        %v4074 = vunpack.c.l.b16 %v3779
        %v4075 = vunpack.c.l.b16 %v3780
        %v4076 = vunpack.c.l.b16 %v3781
        %v4077 = vunpack.c.l.b16 %v3782
        %v4078 = vunpack.c.l.b16 %v3783
        %v4079 = vunpack.c.l.b16 %v3784
        %v4080 = vunpack.c.l.b16 %v3785
        %v4081 = vunpack.c.l.b16 %v3786
        %v4082 = vunpack.c.l.b16 %v3787
        %v4083 = vunpack.c.l.b16 %v3788
        %v4084 = vunpack.c.l.b16 %v3789
        %v4085 = vunpack.c.l.b16 %v3790
        %v4086 = vunpack.c.l.b16 %v3791
        %v4087 = vunpack.c.l.b16 %v3792
        %v4088 = vunpack.c.l.b16 %v3793
        %v4089 = vunpack.c.l.b16 %v3794
        %v4090 = vunpack.c.l.b16 %v3795
        %v4091 = vunpack.c.l.b16 %v3796
        %v4092 = vunpack.c.l.b16 %v3797
        %v4093 = vunpack.c.l.b16 %v3798
        %v4094 = vunpack.c.l.b16 %v3799
        %v4095 = vunpack.c.l.b16 %v3800
        %v4096 = vunpack.c.l.b16 %v3801
        %v4097 = vunpack.c.l.b16 %v3802
        %v4098 = vunpack.c.l.b16 %v3803
        %v4099 = vunpack.c.l.b16 %v3804
        %v4100 = vunpack.c.l.b16 %v3805
        %v4101 = vunpack.c.l.b16 %v3806
        %v4102 = vunpack.c.l.b16 %v3807
        %v4103 = vunpack.c.l.b16 %v3808
        %v4104 = vunpack.c.l.b16 %v3809
        %v4105 = vunpack.c.l.b16 %v3810
        %v4106 = vunpack.c.l.b16 %v3811
        %v4107 = vunpack.c.l.b16 %v3812
        %v4108 = vunpack.c.l.b16 %v3813
        %v4109 = vunpack.c.l.b16 %v3814
        %v4110 = vunpack.c.l.b16 %v3815
        %v4111 = vunpack.c.l.b16 %v3816
        %v4112 = vunpack.c.l.b16 %v3817
        %v4113 = vunpack.c.l.b16 %v3818
        %v4114 = vunpack.c.l.b16 %v3819
        %v4115 = vunpack.c.l.b16 %v3820
        %v4116 = vunpack.c.l.b16 %v3821
        %v4117 = vunpack.c.l.b16 %v3822
        %v4118 = vunpack.c.l.b16 %v3823
        %v4119 = vunpack.c.l.b16 %v3824
        %v4120 = vunpack.c.l.b16 %v3825
        %v4121 = vunpack.c.l.b16 %v3826
        %v4122 = vunpack.c.l.b16 %v3827
        %v4123 = vunpack.c.l.b16 %v3828
        %v4124 = vunpack.c.l.b16 %v3829
        %v4125 = vunpack.c.l.b16 %v3830
        %v4126 = vunpack.c.l.b16 %v3831
        %v4127 = vunpack.c.l.b16 %v3832
        %v4128 = vunpack.c.l.b16 %v3833
        %v4129 = vunpack.c.l.b16 %v3834
        %v4130 = vunpack.c.l.b16 %v3835
        %v4131 = vunpack.c.l.b16 %v3836
        %v4132 = vunpack.c.l.b16 %v3837
        %v4133 = vunpack.c.l.b16 %v3838
        %v4134 = vunpack.c.l.b16 %v3839
        %v4135 = vunpack.c.l.b16 %v3840
        %v4136 = vunpack.c.l.b16 %v3841
        %v4137 = vunpack.c.l.b16 %v3842
        %v4138 = vunpack.c.l.b16 %v3843
        %v4139 = vunpack.c.l.b16 %v3844
        %v4140 = vunpack.c.l.b16 %v3845
        %v4141 = vunpack.c.l.b16 %v3846
        %v4142 = vunpack.c.l.b16 %v3847
        %v4143 = vunpack.c.l.b16 %v3848
        %v4144 = vunpack.c.l.b16 %v3849
        %v4145 = vunpack.c.l.b16 %v3850
        %v4146 = vunpack.c.l.b16 %v3851
        %v4147 = vunpack.c.l.b16 %v3852
        %v4148 = vunpack.c.l.b16 %v3853
        %v4149 = vunpack.c.l.b16 %v3854
        %v4150 = vunpack.c.l.b16 %v3855
        %v4151 = vunpack.c.l.b16 %v3856
        %v4152 = vunpack.c.l.b16 %v3857
        %v4153 = vunpack.c.l.b16 %v3858
        %v4154 = vunpack.c.l.b16 %v3859
        %v4155 = vunpack.c.l.b16 %v3860
        %v4156 = vunpack.c.l.b16 %v3861
        %v4157 = vunpack.c.l.b16 %v3862
        %v4158 = vpack.c.b16 %v4015, %v4014
        %v4159 = vpack.c.b16 %v4017, %v4016
        %v4160 = vpack.c.b16 %v4019, %v4018
        %v4161 = vpack.c.b16 %v4021, %v4020
        %v4162 = vpack.c.b16 %v4023, %v4022
        %v4163 = vpack.c.b16 %v4025, %v4024
        %v4164 = vpack.c.b16 %v4027, %v4026
        %v4165 = vpack.c.b16 %v4029, %v4028
        %v4166 = vpack.c.b16 %v4031, %v4030
        %v4167 = vpack.c.b16 %v4033, %v4032
        %v4168 = vpack.c.b16 %v4035, %v4034
        %v4169 = vpack.c.b16 %v4037, %v4036
        %v4170 = vpack.c.b16 %v4039, %v4038
        %v4171 = vpack.c.b16 %v4041, %v4040
        %v4172 = vpack.c.b16 %v4043, %v4042
        %v4173 = vpack.c.b16 %v4045, %v4044
        %v4174 = vpack.c.b16 %v4047, %v4046
        %v4175 = vpack.c.b16 %v4049, %v4048
        %v4176 = vpack.c.b16 %v4051, %v4050
        %v4177 = vpack.c.b16 %v4053, %v4052
        %v4178 = vpack.c.b16 %v4055, %v4054
        %v4179 = vpack.c.b16 %v4057, %v4056
        %v4180 = vpack.c.b16 %v4059, %v4058
        %v4181 = vpack.c.b16 %v4061, %v4060
        %v4182 = vpack.c.b16 %v4063, %v4062
        %v4183 = vpack.c.b16 %v4065, %v4064
        %v4184 = vpack.c.b16 %v4067, %v4066
        %v4185 = vpack.c.b16 %v4069, %v4068
        %v4186 = vpack.c.b16 %v4071, %v4070
        %v4187 = vpack.c.b16 %v4073, %v4072
        %v4188 = vpack.c.b16 %v4075, %v4074
        %v4189 = vpack.c.b16 %v4077, %v4076
        %v4190 = vpack.c.b16 %v4079, %v4078
        %v4191 = vpack.c.b16 %v4081, %v4080
        %v4192 = vpack.c.b16 %v4083, %v4082
        %v4193 = vpack.c.b16 %v4085, %v4084
        %v4194 = vpack.c.b16 %v4087, %v4086
        %v4195 = vpack.c.b16 %v4089, %v4088
        %v4196 = vpack.c.b16 %v4091, %v4090
        %v4197 = vpack.c.b16 %v4093, %v4092
        %v4198 = vpack.c.b16 %v4095, %v4094
        %v4199 = vpack.c.b16 %v4097, %v4096
        %v4200 = vpack.c.b16 %v4099, %v4098
        %v4201 = vpack.c.b16 %v4101, %v4100
        %v4202 = vpack.c.b16 %v4103, %v4102
        %v4203 = vpack.c.b16 %v4105, %v4104
        %v4204 = vpack.c.b16 %v4107, %v4106
        %v4205 = vpack.c.b16 %v4109, %v4108
        %v4206 = vpack.c.b16 %v4111, %v4110
        %v4207 = vpack.c.b16 %v4113, %v4112
        %v4208 = vpack.c.b16 %v4115, %v4114
        %v4209 = vpack.c.b16 %v4117, %v4116
        %v4210 = vpack.c.b16 %v4119, %v4118
        %v4211 = vpack.c.b16 %v4121, %v4120
        %v4212 = vpack.c.b16 %v4123, %v4122
        %v4213 = vpack.c.b16 %v4125, %v4124
        %v4214 = vpack.c.b16 %v4127, %v4126
        %v4215 = vpack.c.b16 %v4129, %v4128
        %v4216 = vpack.c.b16 %v4131, %v4130
        %v4217 = vpack.c.b16 %v4133, %v4132
        %v4218 = vpack.c.b16 %v4135, %v4134
        %v4219 = vpack.c.b16 %v4137, %v4136
        %v4220 = vpack.c.b16 %v4139, %v4138
        %v4221 = vpack.c.b16 %v4141, %v4140
        %v4222 = vpack.c.b16 %v4143, %v4142
        %v4223 = vpack.c.b16 %v4145, %v4144
        %v4224 = vpack.c.b16 %v4147, %v4146
        %v4225 = vpack.c.b16 %v4149, %v4148
        %v4226 = vpack.c.b16 %v4151, %v4150
        %v4227 = vpack.c.b16 %v4153, %v4152
        %v4228 = vpack.c.b16 %v4155, %v4154
        %v4229 = vpack.c.b16 %v4157, %v4156
        %4302 = vmatprep.subr.bf16.mxu0 0
        %4303 = vmatpush1.bf16.msra.mxu0 %v4158
        %4304 = vmatprep.subr.bf16.mxu0 0
        %4305 = vmatpush1.bf16.msra.mxu0 %v4159
        %4306 = vmatprep.subr.bf16.mxu0 0
        %4307 = vmatpush1.bf16.msra.mxu0 %v4160
        %4308 = vmatprep.subr.bf16.mxu0 0
        %4309 = vmatpush1.bf16.msra.mxu0 %v4161
        %4310 = vmatprep.subr.bf16.mxu0 0
        %4311 = vmatpush1.bf16.msra.mxu0 %v4162
        %4312 = vmatprep.subr.bf16.mxu0 0
        %4313 = vmatpush1.bf16.msra.mxu0 %v4163
        %4314 = vmatprep.subr.bf16.mxu0 0
        %4315 = vmatpush1.bf16.msra.mxu0 %v4164
        %4316 = vmatprep.subr.bf16.mxu0 0
        %4317 = vmatpush1.bf16.msra.mxu0 %v4165
        %4318 = vmatprep.subr.bf16.mxu0 0
        %4319 = vmatpush1.bf16.msra.mxu0 %v4166
        %4320 = vmatprep.subr.bf16.mxu0 0
        %4321 = vmatpush1.bf16.msra.mxu0 %v4167
        %4322 = vmatprep.subr.bf16.mxu0 0
        %4323 = vmatpush1.bf16.msra.mxu0 %v4168
        %4324 = vmatprep.subr.bf16.mxu0 0
        %4325 = vmatpush1.bf16.msra.mxu0 %v4169
        %4326 = vmatprep.subr.bf16.mxu0 0
        %4327 = vmatpush1.bf16.msra.mxu0 %v4170
        %4328 = vmatprep.subr.bf16.mxu0 0
        %4329 = vmatpush1.bf16.msra.mxu0 %v4171
        %4330 = vmatprep.subr.bf16.mxu0 0
        %4331 = vmatpush1.bf16.msra.mxu0 %v4172
        %4332 = vmatprep.subr.bf16.mxu0 0
        %4333 = vmatpush1.bf16.msra.mxu0 %v4173
        %4334 = vmatprep.mubr.bf16.mxu0 %v3576
        %4335 = vmatmul.mubr.bf16.gmra.mrb[0].mxu0 %v3575
        %v4336 = vpop.f32.mrb[0].mxu0
        %v4337 = vadd.f32 %v3868, %v4336
        %v4338 = vpop.f32.mrb[0].mxu0
        %v4339 = vpop.f32.mrb[0].mxu0
        %v4340 = vadd.f32 %v3868, %v4339
        %v4341 = vpop.f32.mrb[0].mxu0
        %4342 = vmatprep.mubr.bf16.mxu0 %v3585
        %4343 = vmatmul.mubr.bf16.gmra.mrb[0].mxu0 %v3584
        %v4344 = vpop.f32.mrb[0].mxu0
        %v4345 = vadd.f32 %v3868, %v4344
        %v4346 = vpop.f32.mrb[0].mxu0
        %v4347 = vpop.f32.mrb[0].mxu0
        %v4348 = vadd.f32 %v3868, %v4347
        %v4349 = vpop.f32.mrb[0].mxu0
        %4350 = vmatprep.mubr.bf16.mxu0 %v3594
        %4351 = vmatmul.mubr.bf16.gmra.mrb[0].mxu0 %v3593
        %v4352 = vpop.f32.mrb[0].mxu0
        %v4353 = vadd.f32 %v3868, %v4352
        %v4354 = vpop.f32.mrb[0].mxu0
        %v4355 = vpop.f32.mrb[0].mxu0
        %v4356 = vadd.f32 %v3868, %v4355
        %v4357 = vpop.f32.mrb[0].mxu0
        %4358 = vmatprep.mubr.bf16.mxu0 %v3603
        %4359 = vmatmul.mubr.bf16.gmra.mrb[0].mxu0 %v3602
        %v4360 = vpop.f32.mrb[0].mxu0
        %v4361 = vadd.f32 %v3868, %v4360
        %v4362 = vpop.f32.mrb[0].mxu0
        %v4363 = vpop.f32.mrb[0].mxu0
        %v4364 = vadd.f32 %v3868, %v4363
        %v4365 = vpop.f32.mrb[0].mxu0
        %4366 = vmatprep.mubr.bf16.mxu0 %v3612
        %4367 = vmatmul.mubr.bf16.gmra.mrb[0].mxu0 %v3611
        %v4368 = vpop.f32.mrb[0].mxu0
        %v4369 = vadd.f32 %v3868, %v4368
        %v4370 = vpop.f32.mrb[0].mxu0
        %v4371 = vpop.f32.mrb[0].mxu0
        %v4372 = vadd.f32 %v3868, %v4371
        %v4373 = vpop.f32.mrb[0].mxu0
        %4374 = vmatprep.mubr.bf16.mxu0 %v3621
        %4375 = vmatmul.mubr.bf16.gmra.mrb[0].mxu0 %v3620
        %v4376 = vpop.f32.mrb[0].mxu0
        %v4377 = vadd.f32 %v3868, %v4376
        %v4378 = vpop.f32.mrb[0].mxu0
        %v4379 = vpop.f32.mrb[0].mxu0
        %v4380 = vadd.f32 %v3868, %v4379
        %v4381 = vpop.f32.mrb[0].mxu0
        %4382 = vmatprep.mubr.bf16.mxu0 %v3630
        %4383 = vmatmul.mubr.bf16.gmra.mrb[0].mxu0 %v3629
        %v4384 = vpop.f32.mrb[0].mxu0
        %v4385 = vadd.f32 %v3868, %v4384
        %v4386 = vpop.f32.mrb[0].mxu0
        %v4387 = vpop.f32.mrb[0].mxu0
        %v4388 = vadd.f32 %v3868, %v4387
        %v4389 = vpop.f32.mrb[0].mxu0
        %4390 = vmatprep.mubr.bf16.mxu0 %v3639
        %4391 = vmatmul.mubr.bf16.gmra.mrb[0].mxu0 %v3638
        %v4392 = vpop.f32.mrb[0].mxu0
        %v4393 = vadd.f32 %v3868, %v4392
        %v4394 = vpop.f32.mrb[0].mxu0
        %v4395 = vpop.f32.mrb[0].mxu0
        %v4396 = vadd.f32 %v3868, %v4395
        %v4397 = vpop.f32.mrb[0].mxu0
        %4398 = vmatprep.mubr.bf16.mxu0 %v3648
        %4399 = vmatmul.mubr.bf16.gmra.mrb[0].mxu0 %v3647
        %v4400 = vpop.f32.mrb[0].mxu0
        %v4401 = vadd.f32 %v3868, %v4400
        %v4402 = vpop.f32.mrb[0].mxu0
        %v4403 = vpop.f32.mrb[0].mxu0
        %v4404 = vadd.f32 %v3868, %v4403
        %v4405 = vpop.f32.mrb[0].mxu0
        %4406 = vmatprep.mubr.bf16.mxu0 %v3657
        %4407 = vmatmul.mubr.bf16.gmra.mrb[0].mxu0 %v3656
        %v4408 = vpop.f32.mrb[0].mxu0
        %v4409 = vadd.f32 %v3868, %v4408
        %v4410 = vpop.f32.mrb[0].mxu0
        %v4411 = vpop.f32.mrb[0].mxu0
        %v4412 = vadd.f32 %v3868, %v4411
        %v4413 = vpop.f32.mrb[0].mxu0
        %4414 = vmatprep.mubr.bf16.mxu0 %v3666
        %4415 = vmatmul.mubr.bf16.gmra.mrb[0].mxu0 %v3665
        %v4416 = vpop.f32.mrb[0].mxu0
        %v4417 = vadd.f32 %v3868, %v4416
        %v4418 = vpop.f32.mrb[0].mxu0
        %v4419 = vpop.f32.mrb[0].mxu0
        %v4420 = vadd.f32 %v3868, %v4419
        %v4421 = vpop.f32.mrb[0].mxu0
        %4422 = vmatprep.mubr.bf16.mxu0 %v3675
        %4423 = vmatmul.mubr.bf16.gmra.mrb[0].mxu0 %v3674
        %v4424 = vpop.f32.mrb[0].mxu0
        %v4425 = vadd.f32 %v3868, %v4424
        %v4426 = vpop.f32.mrb[0].mxu0
        %v4427 = vpop.f32.mrb[0].mxu0
        %v4428 = vadd.f32 %v3868, %v4427
        %v4429 = vpop.f32.mrb[0].mxu0
        %4430 = vmatprep.mubr.bf16.mxu0 %v3684
        %4431 = vmatmul.mubr.bf16.gmra.mrb[0].mxu0 %v3683
        %v4432 = vpop.f32.mrb[0].mxu0
        %v4433 = vadd.f32 %v3868, %v4432
        %v4434 = vpop.f32.mrb[0].mxu0
        %v4435 = vpop.f32.mrb[0].mxu0
        %v4436 = vadd.f32 %v3868, %v4435
        %v4437 = vpop.f32.mrb[0].mxu0
        %4438 = vmatprep.mubr.bf16.mxu0 %v3693
        %4439 = vmatmul.mubr.bf16.gmra.mrb[0].mxu0 %v3692
        %v4440 = vpop.f32.mrb[0].mxu0
        %v4441 = vadd.f32 %v3868, %v4440
        %v4442 = vpop.f32.mrb[0].mxu0
        %v4443 = vpop.f32.mrb[0].mxu0
        %v4444 = vadd.f32 %v3868, %v4443
        %v4445 = vpop.f32.mrb[0].mxu0
        %4446 = vmatprep.mubr.bf16.mxu0 %v3702
        %4447 = vmatmul.mubr.bf16.gmra.mrb[0].mxu0 %v3701
        %v4448 = vpop.f32.mrb[0].mxu0
        %v4449 = vadd.f32 %v3868, %v4448
        %v4450 = vpop.f32.mrb[0].mxu0
        %v4451 = vpop.f32.mrb[0].mxu0
        %v4452 = vadd.f32 %v3868, %v4451
        %v4453 = vpop.f32.mrb[0].mxu0
        %4454 = vmatprep.mubr.bf16.mxu0 %v3711
        %4455 = vmatmul.mubr.bf16.gmra.mrb[0].mxu0 %v3710
        %v4456 = vpop.f32.mrb[0].mxu0
        %v4457 = vadd.f32 %v3868, %v4456
        %v4458 = vpop.f32.mrb[0].mxu0
        %v4459 = vpop.f32.mrb[0].mxu0
        %v4460 = vadd.f32 %v3868, %v4459
        %v4461 = vpop.f32.mrb[0].mxu0
        %4462 = vdwg.mxu0
        %4463 = vmatprep.subr.bf16.mxu0 0
        %4464 = vmatpush1.bf16.msra.mxu0 %v4174
        %4465 = vmatprep.subr.bf16.mxu0 0
        %4466 = vmatpush1.bf16.msra.mxu0 %v4175
        %4467 = vmatprep.subr.bf16.mxu0 0
        %4468 = vmatpush1.bf16.msra.mxu0 %v4176
        %4469 = vmatprep.subr.bf16.mxu0 0
        %4470 = vmatpush1.bf16.msra.mxu0 %v4177
        %4471 = vmatprep.subr.bf16.mxu0 0
        %4472 = vmatpush1.bf16.msra.mxu0 %v4178
        %4473 = vmatprep.subr.bf16.mxu0 0
        %4474 = vmatpush1.bf16.msra.mxu0 %v4179
        %4475 = vmatprep.subr.bf16.mxu0 0
        %4476 = vmatpush1.bf16.msra.mxu0 %v4180
        %4477 = vmatprep.subr.bf16.mxu0 0
        %4478 = vmatpush1.bf16.msra.mxu0 %v4181
        %4479 = vmatprep.subr.bf16.mxu0 0
        %4480 = vmatpush1.bf16.msra.mxu0 %v4182
        %4481 = vmatprep.subr.bf16.mxu0 0
        %4482 = vmatpush1.bf16.msra.mxu0 %v4183
        %4483 = vmatprep.subr.bf16.mxu0 0
        %4484 = vmatpush1.bf16.msra.mxu0 %v4184
        %4485 = vmatprep.subr.bf16.mxu0 0
        %4486 = vmatpush1.bf16.msra.mxu0 %v4185
        %4487 = vmatprep.subr.bf16.mxu0 0
        %4488 = vmatpush1.bf16.msra.mxu0 %v4186
        %4489 = vmatprep.subr.bf16.mxu0 0
        %4490 = vmatpush1.bf16.msra.mxu0 %v4187
        %4491 = vmatprep.subr.bf16.mxu0 0
        %4492 = vmatpush1.bf16.msra.mxu0 %v4188
        %4493 = vmatprep.subr.bf16.mxu0 0
        %4494 = vmatpush1.bf16.msra.mxu0 %v4189
        %4495 = vmatprep.mubr.bf16.mxu0 %v3578
        %4496 = vmatmul.mubr.bf16.gmra.mrb[0].mxu0 %v3577
        %v4497 = vpop.f32.mrb[0].mxu0
        %v4498 = vadd.f32 %v4337, %v4497
        %v4499 = vpop.f32.mrb[0].mxu0
        %v4500 = vpop.f32.mrb[0].mxu0
        %v4501 = vadd.f32 %v4340, %v4500
        %v4502 = vpop.f32.mrb[0].mxu0
        %4503 = vmatprep.mubr.bf16.mxu0 %v3587
        %4504 = vmatmul.mubr.bf16.gmra.mrb[0].mxu0 %v3586
        %v4505 = vpop.f32.mrb[0].mxu0
        %v4506 = vadd.f32 %v4345, %v4505
        %v4507 = vpop.f32.mrb[0].mxu0
        %v4508 = vpop.f32.mrb[0].mxu0
        %v4509 = vadd.f32 %v4348, %v4508
        %v4510 = vpop.f32.mrb[0].mxu0
        %4511 = vmatprep.mubr.bf16.mxu0 %v3596
        %4512 = vmatmul.mubr.bf16.gmra.mrb[0].mxu0 %v3595
        %v4513 = vpop.f32.mrb[0].mxu0
        %v4514 = vadd.f32 %v4353, %v4513
        %v4515 = vpop.f32.mrb[0].mxu0
        %v4516 = vpop.f32.mrb[0].mxu0
        %v4517 = vadd.f32 %v4356, %v4516
        %v4518 = vpop.f32.mrb[0].mxu0
        %4519 = vmatprep.mubr.bf16.mxu0 %v3605
        %4520 = vmatmul.mubr.bf16.gmra.mrb[0].mxu0 %v3604
        %v4521 = vpop.f32.mrb[0].mxu0
        %v4522 = vadd.f32 %v4361, %v4521
        %v4523 = vpop.f32.mrb[0].mxu0
        %v4524 = vpop.f32.mrb[0].mxu0
        %v4525 = vadd.f32 %v4364, %v4524
        %v4526 = vpop.f32.mrb[0].mxu0
        %4527 = vmatprep.mubr.bf16.mxu0 %v3614
        %4528 = vmatmul.mubr.bf16.gmra.mrb[0].mxu0 %v3613
        %v4529 = vpop.f32.mrb[0].mxu0
        %v4530 = vadd.f32 %v4369, %v4529
        %v4531 = vpop.f32.mrb[0].mxu0
        %v4532 = vpop.f32.mrb[0].mxu0
        %v4533 = vadd.f32 %v4372, %v4532
        %v4534 = vpop.f32.mrb[0].mxu0
        %4535 = vmatprep.mubr.bf16.mxu0 %v3623
        %4536 = vmatmul.mubr.bf16.gmra.mrb[0].mxu0 %v3622
        %v4537 = vpop.f32.mrb[0].mxu0
        %v4538 = vadd.f32 %v4377, %v4537
        %v4539 = vpop.f32.mrb[0].mxu0
        %v4540 = vpop.f32.mrb[0].mxu0
        %v4541 = vadd.f32 %v4380, %v4540
        %v4542 = vpop.f32.mrb[0].mxu0
        %4543 = vmatprep.mubr.bf16.mxu0 %v3632
        %4544 = vmatmul.mubr.bf16.gmra.mrb[0].mxu0 %v3631
        %v4545 = vpop.f32.mrb[0].mxu0
        %v4546 = vadd.f32 %v4385, %v4545
        %v4547 = vpop.f32.mrb[0].mxu0
        %v4548 = vpop.f32.mrb[0].mxu0
        %v4549 = vadd.f32 %v4388, %v4548
        %v4550 = vpop.f32.mrb[0].mxu0
        %4551 = vmatprep.mubr.bf16.mxu0 %v3641
        %4552 = vmatmul.mubr.bf16.gmra.mrb[0].mxu0 %v3640
        %v4553 = vpop.f32.mrb[0].mxu0
        %v4554 = vadd.f32 %v4393, %v4553
        %v4555 = vpop.f32.mrb[0].mxu0
        %v4556 = vpop.f32.mrb[0].mxu0
        %v4557 = vadd.f32 %v4396, %v4556
        %v4558 = vpop.f32.mrb[0].mxu0
        %4559 = vmatprep.mubr.bf16.mxu0 %v3650
        %4560 = vmatmul.mubr.bf16.gmra.mrb[0].mxu0 %v3649
        %v4561 = vpop.f32.mrb[0].mxu0
        %v4562 = vadd.f32 %v4401, %v4561
        %v4563 = vpop.f32.mrb[0].mxu0
        %v4564 = vpop.f32.mrb[0].mxu0
        %v4565 = vadd.f32 %v4404, %v4564
        %v4566 = vpop.f32.mrb[0].mxu0
        %4567 = vmatprep.mubr.bf16.mxu0 %v3659
        %4568 = vmatmul.mubr.bf16.gmra.mrb[0].mxu0 %v3658
        %v4569 = vpop.f32.mrb[0].mxu0
        %v4570 = vadd.f32 %v4409, %v4569
        %v4571 = vpop.f32.mrb[0].mxu0
        %v4572 = vpop.f32.mrb[0].mxu0
        %v4573 = vadd.f32 %v4412, %v4572
        %v4574 = vpop.f32.mrb[0].mxu0
        %4575 = vmatprep.mubr.bf16.mxu0 %v3668
        %4576 = vmatmul.mubr.bf16.gmra.mrb[0].mxu0 %v3667
        %v4577 = vpop.f32.mrb[0].mxu0
        %v4578 = vadd.f32 %v4417, %v4577
        %v4579 = vpop.f32.mrb[0].mxu0
        %v4580 = vpop.f32.mrb[0].mxu0
        %v4581 = vadd.f32 %v4420, %v4580
        %v4582 = vpop.f32.mrb[0].mxu0
        %4583 = vmatprep.mubr.bf16.mxu0 %v3677
        %4584 = vmatmul.mubr.bf16.gmra.mrb[0].mxu0 %v3676
        %v4585 = vpop.f32.mrb[0].mxu0
        %v4586 = vadd.f32 %v4425, %v4585
        %v4587 = vpop.f32.mrb[0].mxu0
        %v4588 = vpop.f32.mrb[0].mxu0
        %v4589 = vadd.f32 %v4428, %v4588
        %v4590 = vpop.f32.mrb[0].mxu0
        %4591 = vmatprep.mubr.bf16.mxu0 %v3686
        %4592 = vmatmul.mubr.bf16.gmra.mrb[0].mxu0 %v3685
        %v4593 = vpop.f32.mrb[0].mxu0
        %v4594 = vadd.f32 %v4433, %v4593
        %v4595 = vpop.f32.mrb[0].mxu0
        %v4596 = vpop.f32.mrb[0].mxu0
        %v4597 = vadd.f32 %v4436, %v4596
        %v4598 = vpop.f32.mrb[0].mxu0
        %4599 = vmatprep.mubr.bf16.mxu0 %v3695
        %4600 = vmatmul.mubr.bf16.gmra.mrb[0].mxu0 %v3694
        %v4601 = vpop.f32.mrb[0].mxu0
        %v4602 = vadd.f32 %v4441, %v4601
        %v4603 = vpop.f32.mrb[0].mxu0
        %v4604 = vpop.f32.mrb[0].mxu0
        %v4605 = vadd.f32 %v4444, %v4604
        %v4606 = vpop.f32.mrb[0].mxu0
        %4607 = vmatprep.mubr.bf16.mxu0 %v3704
        %4608 = vmatmul.mubr.bf16.gmra.mrb[0].mxu0 %v3703
        %v4609 = vpop.f32.mrb[0].mxu0
        %v4610 = vadd.f32 %v4449, %v4609
        %v4611 = vpop.f32.mrb[0].mxu0
        %v4612 = vpop.f32.mrb[0].mxu0
        %v4613 = vadd.f32 %v4452, %v4612
        %v4614 = vpop.f32.mrb[0].mxu0
        %4615 = vmatprep.mubr.bf16.mxu0 %v3713
        %4616 = vmatmul.mubr.bf16.gmra.mrb[0].mxu0 %v3712
        %v4617 = vpop.f32.mrb[0].mxu0
        %v4618 = vadd.f32 %v4457, %v4617
        %v4619 = vpop.f32.mrb[0].mxu0
        %v4620 = vpop.f32.mrb[0].mxu0
        %v4621 = vadd.f32 %v4460, %v4620
        %v4622 = vpop.f32.mrb[0].mxu0
        %4623 = vdwg.mxu0
        %4624 = vmatprep.subr.bf16.mxu0 0
        %4625 = vmatpush1.bf16.msra.mxu0 %v4190
        %4626 = vmatprep.subr.bf16.mxu0 0
        %4627 = vmatpush1.bf16.msra.mxu0 %v4191
        %4628 = vmatprep.subr.bf16.mxu0 0
        %4629 = vmatpush1.bf16.msra.mxu0 %v4192
        %4630 = vmatprep.subr.bf16.mxu0 0
        %4631 = vmatpush1.bf16.msra.mxu0 %v4193
        %4632 = vmatprep.subr.bf16.mxu0 0
        %4633 = vmatpush1.bf16.msra.mxu0 %v4194
        %4634 = vmatprep.subr.bf16.mxu0 0
        %4635 = vmatpush1.bf16.msra.mxu0 %v4195
        %4636 = vmatprep.subr.bf16.mxu0 0
        %4637 = vmatpush1.bf16.msra.mxu0 %v4196
        %4638 = vmatprep.subr.bf16.mxu0 0
        %4639 = vmatpush1.bf16.msra.mxu0 %v4197
        %4640 = vmatprep.subr.bf16.mxu0 0
        %4641 = vmatpush1.bf16.msra.mxu0 %v4198
        %4642 = vmatprep.subr.bf16.mxu0 0
        %4643 = vmatpush1.bf16.msra.mxu0 %v4199
        %4644 = vmatprep.subr.bf16.mxu0 0
        %4645 = vmatpush1.bf16.msra.mxu0 %v4200
        %4646 = vmatprep.subr.bf16.mxu0 0
        %4647 = vmatpush1.bf16.msra.mxu0 %v4201
        %4648 = vmatprep.subr.bf16.mxu0 0
        %4649 = vmatpush1.bf16.msra.mxu0 %v4202
        %4650 = vmatprep.subr.bf16.mxu0 0
        %4651 = vmatpush1.bf16.msra.mxu0 %v4203
        %4652 = vmatprep.subr.bf16.mxu0 0
        %4653 = vmatpush1.bf16.msra.mxu0 %v4204
        %4654 = vmatprep.subr.bf16.mxu0 0
        %4655 = vmatpush1.bf16.msra.mxu0 %v4205
        %4656 = vmatprep.mubr.bf16.mxu0 %v3580
        %4657 = vmatmul.mubr.bf16.gmra.mrb[0].mxu0 %v3579
        %v4658 = vpop.f32.mrb[0].mxu0
        %v4659 = vadd.f32 %v4498, %v4658
        %v4660 = vpop.f32.mrb[0].mxu0
        %v4661 = vpop.f32.mrb[0].mxu0
        %v4662 = vadd.f32 %v4501, %v4661
        %v4663 = vpop.f32.mrb[0].mxu0
        %4664 = vmatprep.mubr.bf16.mxu0 %v3589
        %4665 = vmatmul.mubr.bf16.gmra.mrb[0].mxu0 %v3588
        %v4666 = vpop.f32.mrb[0].mxu0
        %v4667 = vadd.f32 %v4506, %v4666
        %v4668 = vpop.f32.mrb[0].mxu0
        %v4669 = vpop.f32.mrb[0].mxu0
        %v4670 = vadd.f32 %v4509, %v4669
        %v4671 = vpop.f32.mrb[0].mxu0
        %4672 = vmatprep.mubr.bf16.mxu0 %v3598
        %4673 = vmatmul.mubr.bf16.gmra.mrb[0].mxu0 %v3597
        %v4674 = vpop.f32.mrb[0].mxu0
        %v4675 = vadd.f32 %v4514, %v4674
        %v4676 = vpop.f32.mrb[0].mxu0
        %v4677 = vpop.f32.mrb[0].mxu0
        %v4678 = vadd.f32 %v4517, %v4677
        %v4679 = vpop.f32.mrb[0].mxu0
        %4680 = vmatprep.mubr.bf16.mxu0 %v3607
        %4681 = vmatmul.mubr.bf16.gmra.mrb[0].mxu0 %v3606
        %v4682 = vpop.f32.mrb[0].mxu0
        %v4683 = vadd.f32 %v4522, %v4682
        %v4684 = vpop.f32.mrb[0].mxu0
        %v4685 = vpop.f32.mrb[0].mxu0
        %v4686 = vadd.f32 %v4525, %v4685
        %v4687 = vpop.f32.mrb[0].mxu0
        %4688 = vmatprep.mubr.bf16.mxu0 %v3616
        %4689 = vmatmul.mubr.bf16.gmra.mrb[0].mxu0 %v3615
        %v4690 = vpop.f32.mrb[0].mxu0
        %v4691 = vadd.f32 %v4530, %v4690
        %v4692 = vpop.f32.mrb[0].mxu0
        %v4693 = vpop.f32.mrb[0].mxu0
        %v4694 = vadd.f32 %v4533, %v4693
        %v4695 = vpop.f32.mrb[0].mxu0
        %4696 = vmatprep.mubr.bf16.mxu0 %v3625
        %4697 = vmatmul.mubr.bf16.gmra.mrb[0].mxu0 %v3624
        %v4698 = vpop.f32.mrb[0].mxu0
        %v4699 = vadd.f32 %v4538, %v4698
        %v4700 = vpop.f32.mrb[0].mxu0
        %v4701 = vpop.f32.mrb[0].mxu0
        %v4702 = vadd.f32 %v4541, %v4701
        %v4703 = vpop.f32.mrb[0].mxu0
        %4704 = vmatprep.mubr.bf16.mxu0 %v3634
        %4705 = vmatmul.mubr.bf16.gmra.mrb[0].mxu0 %v3633
        %v4706 = vpop.f32.mrb[0].mxu0
        %v4707 = vadd.f32 %v4546, %v4706
        %v4708 = vpop.f32.mrb[0].mxu0
        %v4709 = vpop.f32.mrb[0].mxu0
        %v4710 = vadd.f32 %v4549, %v4709
        %v4711 = vpop.f32.mrb[0].mxu0
        %4712 = vmatprep.mubr.bf16.mxu0 %v3643
        %4713 = vmatmul.mubr.bf16.gmra.mrb[0].mxu0 %v3642
        %v4714 = vpop.f32.mrb[0].mxu0
        %v4715 = vadd.f32 %v4554, %v4714
        %v4716 = vpop.f32.mrb[0].mxu0
        %v4717 = vpop.f32.mrb[0].mxu0
        %v4718 = vadd.f32 %v4557, %v4717
        %v4719 = vpop.f32.mrb[0].mxu0
        %4720 = vmatprep.mubr.bf16.mxu0 %v3652
        %4721 = vmatmul.mubr.bf16.gmra.mrb[0].mxu0 %v3651
        %v4722 = vpop.f32.mrb[0].mxu0
        %v4723 = vadd.f32 %v4562, %v4722
        %v4724 = vpop.f32.mrb[0].mxu0
        %v4725 = vpop.f32.mrb[0].mxu0
        %v4726 = vadd.f32 %v4565, %v4725
        %v4727 = vpop.f32.mrb[0].mxu0
        %4728 = vmatprep.mubr.bf16.mxu0 %v3661
        %4729 = vmatmul.mubr.bf16.gmra.mrb[0].mxu0 %v3660
        %v4730 = vpop.f32.mrb[0].mxu0
        %v4731 = vadd.f32 %v4570, %v4730
        %v4732 = vpop.f32.mrb[0].mxu0
        %v4733 = vpop.f32.mrb[0].mxu0
        %v4734 = vadd.f32 %v4573, %v4733
        %v4735 = vpop.f32.mrb[0].mxu0
        %4736 = vmatprep.mubr.bf16.mxu0 %v3670
        %4737 = vmatmul.mubr.bf16.gmra.mrb[0].mxu0 %v3669
        %v4738 = vpop.f32.mrb[0].mxu0
        %v4739 = vadd.f32 %v4578, %v4738
        %v4740 = vpop.f32.mrb[0].mxu0
        %v4741 = vpop.f32.mrb[0].mxu0
        %v4742 = vadd.f32 %v4581, %v4741
        %v4743 = vpop.f32.mrb[0].mxu0
        %4744 = vmatprep.mubr.bf16.mxu0 %v3679
        %4745 = vmatmul.mubr.bf16.gmra.mrb[0].mxu0 %v3678
        %v4746 = vpop.f32.mrb[0].mxu0
        %v4747 = vadd.f32 %v4586, %v4746
        %v4748 = vpop.f32.mrb[0].mxu0
        %v4749 = vpop.f32.mrb[0].mxu0
        %v4750 = vadd.f32 %v4589, %v4749
        %v4751 = vpop.f32.mrb[0].mxu0
        %4752 = vmatprep.mubr.bf16.mxu0 %v3688
        %4753 = vmatmul.mubr.bf16.gmra.mrb[0].mxu0 %v3687
        %v4754 = vpop.f32.mrb[0].mxu0
        %v4755 = vadd.f32 %v4594, %v4754
        %v4756 = vpop.f32.mrb[0].mxu0
        %v4757 = vpop.f32.mrb[0].mxu0
        %v4758 = vadd.f32 %v4597, %v4757
        %v4759 = vpop.f32.mrb[0].mxu0
        %4760 = vmatprep.mubr.bf16.mxu0 %v3697
        %4761 = vmatmul.mubr.bf16.gmra.mrb[0].mxu0 %v3696
        %v4762 = vpop.f32.mrb[0].mxu0
        %v4763 = vadd.f32 %v4602, %v4762
        %v4764 = vpop.f32.mrb[0].mxu0
        %v4765 = vpop.f32.mrb[0].mxu0
        %v4766 = vadd.f32 %v4605, %v4765
        %v4767 = vpop.f32.mrb[0].mxu0
        %4768 = vmatprep.mubr.bf16.mxu0 %v3706
        %4769 = vmatmul.mubr.bf16.gmra.mrb[0].mxu0 %v3705
        %v4770 = vpop.f32.mrb[0].mxu0
        %v4771 = vadd.f32 %v4610, %v4770
        %v4772 = vpop.f32.mrb[0].mxu0
        %v4773 = vpop.f32.mrb[0].mxu0
        %v4774 = vadd.f32 %v4613, %v4773
        %v4775 = vpop.f32.mrb[0].mxu0
        %4776 = vmatprep.mubr.bf16.mxu0 %v3715
        %4777 = vmatmul.mubr.bf16.gmra.mrb[0].mxu0 %v3714
        %v4778 = vpop.f32.mrb[0].mxu0
        %v4779 = vadd.f32 %v4618, %v4778
        %v4780 = vpop.f32.mrb[0].mxu0
        %v4781 = vpop.f32.mrb[0].mxu0
        %v4782 = vadd.f32 %v4621, %v4781
        %v4783 = vpop.f32.mrb[0].mxu0
        %4784 = vdwg.mxu0
        %4785 = vmatprep.subr.bf16.mxu0 0
        %4786 = vmatpush1.bf16.msra.mxu0 %v4206
        %4787 = vmatprep.subr.bf16.mxu0 0
        %4788 = vmatpush1.bf16.msra.mxu0 %v4207
        %4789 = vmatprep.subr.bf16.mxu0 0
        %4790 = vmatpush1.bf16.msra.mxu0 %v4208
        %4791 = vmatprep.subr.bf16.mxu0 0
        %4792 = vmatpush1.bf16.msra.mxu0 %v4209
        %4793 = vmatprep.subr.bf16.mxu0 0
        %4794 = vmatpush1.bf16.msra.mxu0 %v4210
        %4795 = vmatprep.subr.bf16.mxu0 0
        %4796 = vmatpush1.bf16.msra.mxu0 %v4211
        %4797 = vmatprep.subr.bf16.mxu0 0
        %4798 = vmatpush1.bf16.msra.mxu0 %v4212
        %4799 = vmatprep.subr.bf16.mxu0 0
        %4800 = vmatpush1.bf16.msra.mxu0 %v4213
        %4801 = vmatprep.subr.bf16.mxu0 0
        %4802 = vmatpush1.bf16.msra.mxu0 %v4214
        %4803 = vmatprep.subr.bf16.mxu0 0
        %4804 = vmatpush1.bf16.msra.mxu0 %v4215
        %4805 = vmatprep.subr.bf16.mxu0 0
        %4806 = vmatpush1.bf16.msra.mxu0 %v4216
        %4807 = vmatprep.subr.bf16.mxu0 0
        %4808 = vmatpush1.bf16.msra.mxu0 %v4217
        %4809 = vmatprep.subr.bf16.mxu0 0
        %4810 = vmatpush1.bf16.msra.mxu0 %v4218
        %4811 = vmatprep.subr.bf16.mxu0 0
        %4812 = vmatpush1.bf16.msra.mxu0 %v4219
        %4813 = vmatprep.subr.bf16.mxu0 0
        %4814 = vmatpush1.bf16.msra.mxu0 %v4220
        %4815 = vmatprep.subr.bf16.mxu0 0
        %4816 = vmatpush1.bf16.msra.mxu0 %v4221
        %4817 = vmatprep.mubr.bf16.mxu0 %v3582
        %4818 = vmatmul.mubr.bf16.gmra.mrb[0].mxu0 %v3581
        %v4819 = vpop.f32.mrb[0].mxu0
        %v4820 = vadd.f32 %v4659, %v4819
        %v4821 = vpop.f32.mrb[0].mxu0
        %v4822 = vpop.f32.mrb[0].mxu0
        %v4823 = vadd.f32 %v4662, %v4822
        %v4824 = vpop.f32.mrb[0].mxu0
        %4825 = vmatprep.mubr.bf16.mxu0 %v3591
        %4826 = vmatmul.mubr.bf16.gmra.mrb[0].mxu0 %v3590
        %v4827 = vpop.f32.mrb[0].mxu0
        %v4828 = vadd.f32 %v4667, %v4827
        %v4829 = vpop.f32.mrb[0].mxu0
        %v4830 = vpop.f32.mrb[0].mxu0
        %v4831 = vadd.f32 %v4670, %v4830
        %v4832 = vpop.f32.mrb[0].mxu0
        %4833 = vmatprep.mubr.bf16.mxu0 %v3600
        %4834 = vmatmul.mubr.bf16.gmra.mrb[0].mxu0 %v3599
        %v4835 = vpop.f32.mrb[0].mxu0
        %v4836 = vadd.f32 %v4675, %v4835
        %v4837 = vpop.f32.mrb[0].mxu0
        %v4838 = vpop.f32.mrb[0].mxu0
        %v4839 = vadd.f32 %v4678, %v4838
        %v4840 = vpop.f32.mrb[0].mxu0
        %4841 = vmatprep.mubr.bf16.mxu0 %v3609
        %4842 = vmatmul.mubr.bf16.gmra.mrb[0].mxu0 %v3608
        %v4843 = vpop.f32.mrb[0].mxu0
        %v4844 = vadd.f32 %v4683, %v4843
        %v4845 = vpop.f32.mrb[0].mxu0
        %v4846 = vpop.f32.mrb[0].mxu0
        %v4847 = vadd.f32 %v4686, %v4846
        %v4848 = vpop.f32.mrb[0].mxu0
        %4849 = vmatprep.mubr.bf16.mxu0 %v3618
        %4850 = vmatmul.mubr.bf16.gmra.mrb[0].mxu0 %v3617
        %v4851 = vpop.f32.mrb[0].mxu0
        %v4852 = vadd.f32 %v4691, %v4851
        %v4853 = vpop.f32.mrb[0].mxu0
        %v4854 = vpop.f32.mrb[0].mxu0
        %v4855 = vadd.f32 %v4694, %v4854
        %v4856 = vpop.f32.mrb[0].mxu0
        %4857 = vmatprep.mubr.bf16.mxu0 %v3627
        %4858 = vmatmul.mubr.bf16.gmra.mrb[0].mxu0 %v3626
        %v4859 = vpop.f32.mrb[0].mxu0
        %v4860 = vadd.f32 %v4699, %v4859
        %v4861 = vpop.f32.mrb[0].mxu0
        %v4862 = vpop.f32.mrb[0].mxu0
        %v4863 = vadd.f32 %v4702, %v4862
        %v4864 = vpop.f32.mrb[0].mxu0
        %4865 = vmatprep.mubr.bf16.mxu0 %v3636
        %4866 = vmatmul.mubr.bf16.gmra.mrb[0].mxu0 %v3635
        %v4867 = vpop.f32.mrb[0].mxu0
        %v4868 = vadd.f32 %v4707, %v4867
        %v4869 = vpop.f32.mrb[0].mxu0
        %v4870 = vpop.f32.mrb[0].mxu0
        %v4871 = vadd.f32 %v4710, %v4870
        %v4872 = vpop.f32.mrb[0].mxu0
        %4873 = vmatprep.mubr.bf16.mxu0 %v3645
        %4874 = vmatmul.mubr.bf16.gmra.mrb[0].mxu0 %v3644
        %v4875 = vpop.f32.mrb[0].mxu0
        %v4876 = vadd.f32 %v4715, %v4875
        %v4877 = vpop.f32.mrb[0].mxu0
        %v4878 = vpop.f32.mrb[0].mxu0
        %v4879 = vadd.f32 %v4718, %v4878
        %v4880 = vpop.f32.mrb[0].mxu0
        %4881 = vmatprep.mubr.bf16.mxu0 %v3654
        %4882 = vmatmul.mubr.bf16.gmra.mrb[0].mxu0 %v3653
        %v4883 = vpop.f32.mrb[0].mxu0
        %v4884 = vadd.f32 %v4723, %v4883
        %v4885 = vpop.f32.mrb[0].mxu0
        %v4886 = vpop.f32.mrb[0].mxu0
        %v4887 = vadd.f32 %v4726, %v4886
        %v4888 = vpop.f32.mrb[0].mxu0
        %4889 = vmatprep.mubr.bf16.mxu0 %v3663
        %4890 = vmatmul.mubr.bf16.gmra.mrb[0].mxu0 %v3662
        %v4891 = vpop.f32.mrb[0].mxu0
        %v4892 = vadd.f32 %v4731, %v4891
        %v4893 = vpop.f32.mrb[0].mxu0
        %v4894 = vpop.f32.mrb[0].mxu0
        %v4895 = vadd.f32 %v4734, %v4894
        %v4896 = vpop.f32.mrb[0].mxu0
        %4897 = vmatprep.mubr.bf16.mxu0 %v3672
        %4898 = vmatmul.mubr.bf16.gmra.mrb[0].mxu0 %v3671
        %v4899 = vpop.f32.mrb[0].mxu0
        %v4900 = vadd.f32 %v4739, %v4899
        %v4901 = vpop.f32.mrb[0].mxu0
        %v4902 = vpop.f32.mrb[0].mxu0
        %v4903 = vadd.f32 %v4742, %v4902
        %v4904 = vpop.f32.mrb[0].mxu0
        %4905 = vmatprep.mubr.bf16.mxu0 %v3681
        %4906 = vmatmul.mubr.bf16.gmra.mrb[0].mxu0 %v3680
        %v4907 = vpop.f32.mrb[0].mxu0
        %v4908 = vadd.f32 %v4747, %v4907
        %v4909 = vpop.f32.mrb[0].mxu0
        %v4910 = vpop.f32.mrb[0].mxu0
        %v4911 = vadd.f32 %v4750, %v4910
        %v4912 = vpop.f32.mrb[0].mxu0
        %4913 = vmatprep.mubr.bf16.mxu0 %v3690
        %4914 = vmatmul.mubr.bf16.gmra.mrb[0].mxu0 %v3689
        %v4915 = vpop.f32.mrb[0].mxu0
        %v4916 = vadd.f32 %v4755, %v4915
        %v4917 = vpop.f32.mrb[0].mxu0
        %v4918 = vpop.f32.mrb[0].mxu0
        %v4919 = vadd.f32 %v4758, %v4918
        %v4920 = vpop.f32.mrb[0].mxu0
        %4921 = vmatprep.mubr.bf16.mxu0 %v3699
        %4922 = vmatmul.mubr.bf16.gmra.mrb[0].mxu0 %v3698
        %v4923 = vpop.f32.mrb[0].mxu0
        %v4924 = vadd.f32 %v4763, %v4923
        %v4925 = vpop.f32.mrb[0].mxu0
        %v4926 = vpop.f32.mrb[0].mxu0
        %v4927 = vadd.f32 %v4766, %v4926
        %v4928 = vpop.f32.mrb[0].mxu0
        %4929 = vmatprep.mubr.bf16.mxu0 %v3708
        %4930 = vmatmul.mubr.bf16.gmra.mrb[0].mxu0 %v3707
        %v4931 = vpop.f32.mrb[0].mxu0
        %v4932 = vadd.f32 %v4771, %v4931
        %v4933 = vpop.f32.mrb[0].mxu0
        %v4934 = vpop.f32.mrb[0].mxu0
        %v4935 = vadd.f32 %v4774, %v4934
        %v4936 = vpop.f32.mrb[0].mxu0
        %4937 = vmatprep.mubr.bf16.mxu0 %v3717
        %4938 = vmatmul.mubr.bf16.gmra.mrb[0].mxu0 %v3716
        %v4939 = vpop.f32.mrb[0].mxu0
        %v4940 = vadd.f32 %v4779, %v4939
        %v4941 = vpop.f32.mrb[0].mxu0
        %v4942 = vpop.f32.mrb[0].mxu0
        %v4943 = vadd.f32 %v4782, %v4942
        %v4944 = vpop.f32.mrb[0].mxu0
        %4945 = vdwg.mxu0
        %4946 = vmatprep.subr.bf16.mxu0 0
        %4947 = vmatpush1.bf16.msra.mxu0 %v4222
        %4948 = vmatprep.subr.bf16.mxu0 0
        %4949 = vmatpush1.bf16.msra.mxu0 %v4223
        %4950 = vmatprep.subr.bf16.mxu0 0
        %4951 = vmatpush1.bf16.msra.mxu0 %v4224
        %4952 = vmatprep.subr.bf16.mxu0 0
        %4953 = vmatpush1.bf16.msra.mxu0 %v4225
        %4954 = vmatprep.subr.bf16.mxu0 0
        %4955 = vmatpush1.bf16.msra.mxu0 %v4226
        %4956 = vmatprep.subr.bf16.mxu0 0
        %4957 = vmatpush1.bf16.msra.mxu0 %v4227
        %4958 = vmatprep.subr.bf16.mxu0 0
        %4959 = vmatpush1.bf16.msra.mxu0 %v4228
        %4960 = vmatprep.subr.bf16.mxu0 0
        %4961 = vmatpush1.bf16.msra.mxu0 %v4229
        %4962 = vmatprep.subr.bf16.mxu0 0
        %4963 = vmatpush1.bf16.msra.mxu0 0
        %4964 = vmatprep.subr.bf16.mxu0 0
        %4965 = vmatpush1.bf16.msra.mxu0 0
        %4966 = vmatprep.subr.bf16.mxu0 0
        %4967 = vmatpush1.bf16.msra.mxu0 0
        %4968 = vmatprep.subr.bf16.mxu0 0
        %4969 = vmatpush1.bf16.msra.mxu0 0
        %4970 = vmatprep.subr.bf16.mxu0 0
        %4971 = vmatpush1.bf16.msra.mxu0 0
        %4972 = vmatprep.subr.bf16.mxu0 0
        %4973 = vmatpush1.bf16.msra.mxu0 0
        %4974 = vmatprep.subr.bf16.mxu0 0
        %4975 = vmatpush1.bf16.msra.mxu0 0
        %4976 = vmatprep.subr.bf16.mxu0 0
        %4977 = vmatpush1.bf16.msra.mxu0 0
        %4978 = vmatprep.mubr.bf16.mxu0 0
        %4979 = vmatmul.mubr.bf16.gmra.mrb[0].mxu0 %v3583
        %v4980 = vpop.f32.mrb[0].mxu0
        %v4981 = vadd.f32 %v4820, %v4980
        %v4982 = vpop.f32.mrb[0].mxu0
        %v4983 = vpop.f32.mrb[0].mxu0
        %v4984 = vadd.f32 %v4823, %v4983
        %v4985 = vpop.f32.mrb[0].mxu0
        %4986 = vmatprep.mubr.bf16.mxu0 0
        %4987 = vmatmul.mubr.bf16.gmra.mrb[0].mxu0 %v3592
        %v4988 = vpop.f32.mrb[0].mxu0
        %v4989 = vadd.f32 %v4828, %v4988
        %v4990 = vpop.f32.mrb[0].mxu0
        %v4991 = vpop.f32.mrb[0].mxu0
        %v4992 = vadd.f32 %v4831, %v4991
        %v4993 = vpop.f32.mrb[0].mxu0
        %4994 = vmatprep.mubr.bf16.mxu0 0
        %4995 = vmatmul.mubr.bf16.gmra.mrb[0].mxu0 %v3601
        %v4996 = vpop.f32.mrb[0].mxu0
        %v4997 = vadd.f32 %v4836, %v4996
        %v4998 = vpop.f32.mrb[0].mxu0
        %v4999 = vpop.f32.mrb[0].mxu0
        %v5000 = vadd.f32 %v4839, %v4999
        %v5001 = vpop.f32.mrb[0].mxu0
        %5002 = vmatprep.mubr.bf16.mxu0 0
        %5003 = vmatmul.mubr.bf16.gmra.mrb[0].mxu0 %v3610
        %v5004 = vpop.f32.mrb[0].mxu0
        %v5005 = vadd.f32 %v4844, %v5004
        %v5006 = vpop.f32.mrb[0].mxu0
        %v5007 = vpop.f32.mrb[0].mxu0
        %v5008 = vadd.f32 %v4847, %v5007
        %v5009 = vpop.f32.mrb[0].mxu0
        %5010 = vmatprep.mubr.bf16.mxu0 0
        %5011 = vmatmul.mubr.bf16.gmra.mrb[0].mxu0 %v3619
        %v5012 = vpop.f32.mrb[0].mxu0
        %v5013 = vadd.f32 %v4852, %v5012
        %v5014 = vpop.f32.mrb[0].mxu0
        %v5015 = vpop.f32.mrb[0].mxu0
        %v5016 = vadd.f32 %v4855, %v5015
        %v5017 = vpop.f32.mrb[0].mxu0
        %5018 = vmatprep.mubr.bf16.mxu0 0
        %5019 = vmatmul.mubr.bf16.gmra.mrb[0].mxu0 %v3628
        %v5020 = vpop.f32.mrb[0].mxu0
        %v5021 = vadd.f32 %v4860, %v5020
        %v5022 = vpop.f32.mrb[0].mxu0
        %v5023 = vpop.f32.mrb[0].mxu0
        %v5024 = vadd.f32 %v4863, %v5023
        %v5025 = vpop.f32.mrb[0].mxu0
        %5026 = vmatprep.mubr.bf16.mxu0 0
        %5027 = vmatmul.mubr.bf16.gmra.mrb[0].mxu0 %v3637
        %v5028 = vpop.f32.mrb[0].mxu0
        %v5029 = vadd.f32 %v4868, %v5028
        %v5030 = vpop.f32.mrb[0].mxu0
        %v5031 = vpop.f32.mrb[0].mxu0
        %v5032 = vadd.f32 %v4871, %v5031
        %v5033 = vpop.f32.mrb[0].mxu0
        %5034 = vmatprep.mubr.bf16.mxu0 0
        %5035 = vmatmul.mubr.bf16.gmra.mrb[0].mxu0 %v3646
        %v5036 = vpop.f32.mrb[0].mxu0
        %v5037 = vadd.f32 %v4876, %v5036
        %v5038 = vpop.f32.mrb[0].mxu0
        %v5039 = vpop.f32.mrb[0].mxu0
        %v5040 = vadd.f32 %v4879, %v5039
        %v5041 = vpop.f32.mrb[0].mxu0
        %5042 = vmatprep.mubr.bf16.mxu0 0
        %5043 = vmatmul.mubr.bf16.gmra.mrb[0].mxu0 %v3655
        %v5044 = vpop.f32.mrb[0].mxu0
        %v5045 = vadd.f32 %v4884, %v5044
        %v5046 = vpop.f32.mrb[0].mxu0
        %v5047 = vpop.f32.mrb[0].mxu0
        %v5048 = vadd.f32 %v4887, %v5047
        %v5049 = vpop.f32.mrb[0].mxu0
        %5050 = vmatprep.mubr.bf16.mxu0 0
        %5051 = vmatmul.mubr.bf16.gmra.mrb[0].mxu0 %v3664
        %v5052 = vpop.f32.mrb[0].mxu0
        %v5053 = vadd.f32 %v4892, %v5052
        %v5054 = vpop.f32.mrb[0].mxu0
        %v5055 = vpop.f32.mrb[0].mxu0
        %v5056 = vadd.f32 %v4895, %v5055
        %v5057 = vpop.f32.mrb[0].mxu0
        %5058 = vmatprep.mubr.bf16.mxu0 0
        %5059 = vmatmul.mubr.bf16.gmra.mrb[0].mxu0 %v3673
        %v5060 = vpop.f32.mrb[0].mxu0
        %v5061 = vadd.f32 %v4900, %v5060
        %v5062 = vpop.f32.mrb[0].mxu0
        %v5063 = vpop.f32.mrb[0].mxu0
        %v5064 = vadd.f32 %v4903, %v5063
        %v5065 = vpop.f32.mrb[0].mxu0
        %5066 = vmatprep.mubr.bf16.mxu0 0
        %5067 = vmatmul.mubr.bf16.gmra.mrb[0].mxu0 %v3682
        %v5068 = vpop.f32.mrb[0].mxu0
        %v5069 = vadd.f32 %v4908, %v5068
        %v5070 = vpop.f32.mrb[0].mxu0
        %v5071 = vpop.f32.mrb[0].mxu0
        %v5072 = vadd.f32 %v4911, %v5071
        %v5073 = vpop.f32.mrb[0].mxu0
        %5074 = vmatprep.mubr.bf16.mxu0 0
        %5075 = vmatmul.mubr.bf16.gmra.mrb[0].mxu0 %v3691
        %v5076 = vpop.f32.mrb[0].mxu0
        %v5077 = vadd.f32 %v4916, %v5076
        %v5078 = vpop.f32.mrb[0].mxu0
        %v5079 = vpop.f32.mrb[0].mxu0
        %v5080 = vadd.f32 %v4919, %v5079
        %v5081 = vpop.f32.mrb[0].mxu0
        %5082 = vmatprep.mubr.bf16.mxu0 0
        %5083 = vmatmul.mubr.bf16.gmra.mrb[0].mxu0 %v3700
        %v5084 = vpop.f32.mrb[0].mxu0
        %v5085 = vadd.f32 %v4924, %v5084
        %v5086 = vpop.f32.mrb[0].mxu0
        %v5087 = vpop.f32.mrb[0].mxu0
        %v5088 = vadd.f32 %v4927, %v5087
        %v5089 = vpop.f32.mrb[0].mxu0
        %5090 = vmatprep.mubr.bf16.mxu0 0
        %5091 = vmatmul.mubr.bf16.gmra.mrb[0].mxu0 %v3709
        %v5092 = vpop.f32.mrb[0].mxu0
        %v5093 = vadd.f32 %v4932, %v5092
        %v5094 = vpop.f32.mrb[0].mxu0
        %v5095 = vpop.f32.mrb[0].mxu0
        %v5096 = vadd.f32 %v4935, %v5095
        %v5097 = vpop.f32.mrb[0].mxu0
        %5098 = vmatprep.mubr.bf16.mxu0 0
        %5099 = vmatmul.mubr.bf16.gmra.mrb[0].mxu0 %v3718
        %v5100 = vpop.f32.mrb[0].mxu0
        %v5101 = vadd.f32 %v4940, %v5100
        %v5102 = vpop.f32.mrb[0].mxu0
        %v5103 = vpop.f32.mrb[0].mxu0
        %v5104 = vadd.f32 %v4943, %v5103
        %v5105 = vpop.f32.mrb[0].mxu0
        %5106 = vdwg.mxu0
        %v5107 = vmax.f32 %v4981, 0.0
        %v5108 = vmax.f32 %v4984, 0.0
        %v5109 = vmax.f32 %v4989, 0.0
        %v5110 = vmax.f32 %v4992, 0.0
        %v5111 = vmax.f32 %v4997, 0.0
        %v5112 = vmax.f32 %v5000, 0.0
        %v5113 = vmax.f32 %v5005, 0.0
        %v5114 = vmax.f32 %v5008, 0.0
        %v5115 = vmax.f32 %v5013, 0.0
        %v5116 = vmax.f32 %v5016, 0.0
        %v5117 = vmax.f32 %v5021, 0.0
        %v5118 = vmax.f32 %v5024, 0.0
        %v5119 = vmax.f32 %v5029, 0.0
        %v5120 = vmax.f32 %v5032, 0.0
        %v5121 = vmax.f32 %v5037, 0.0
        %v5122 = vmax.f32 %v5040, 0.0
        %v5123 = vmax.f32 %v5045, 0.0
        %v5124 = vmax.f32 %v5048, 0.0
        %v5125 = vmax.f32 %v5053, 0.0
        %v5126 = vmax.f32 %v5056, 0.0
        %v5127 = vmax.f32 %v5061, 0.0
        %v5128 = vmax.f32 %v5064, 0.0
        %v5129 = vmax.f32 %v5069, 0.0
        %v5130 = vmax.f32 %v5072, 0.0
        %v5131 = vmax.f32 %v5077, 0.0
        %v5132 = vmax.f32 %v5080, 0.0
        %v5133 = vmax.f32 %v5085, 0.0
        %v5134 = vmax.f32 %v5088, 0.0
        %v5135 = vmax.f32 %v5093, 0.0
        %v5136 = vmax.f32 %v5096, 0.0
        %v5137 = vmax.f32 %v5101, 0.0
        %v5138 = vmax.f32 %v5104, 0.0
        %v5171 = vcombine.high %v5107, %v5107
        %v5173 = vunpack.c.l.s4 1983009808
        %v5174 = vunpack.c.0.s8 %v5173
        %v5175 = vlaneseq
        %v5176 = vshrl.u32 %v5175, 7
        %v5177 = vsub.s32 %v5174, %v5176
        %v5178 = vrot.slane %v5107, %v5177
        %v5180 = vunpack.c.l.s4 1983009808
        %v5181 = vunpack.c.0.s8 %v5180
        %v5182 = vlaneseq
        %v5183 = vshrl.u32 %v5182, 7
        %v5184 = vsub.s32 %v5181, %v5183
        %v5185 = vrot.slane %v5171, %v5184
        %v5186 = vcombine.high %v5178, %v5178
        %v5187 = vcombine.high %v5185, %v5185
        %v5188 = vcombine.high %v5108, %v5108
        %v5190 = vunpack.c.l.s4 1983009808
        %v5191 = vunpack.c.0.s8 %v5190
        %v5192 = vlaneseq
        %v5193 = vshrl.u32 %v5192, 7
        %v5194 = vsub.s32 %v5191, %v5193
        %v5195 = vrot.slane %v5108, %v5194
        %v5197 = vunpack.c.l.s4 1983009808
        %v5198 = vunpack.c.0.s8 %v5197
        %v5199 = vlaneseq
        %v5200 = vshrl.u32 %v5199, 7
        %v5201 = vsub.s32 %v5198, %v5200
        %v5202 = vrot.slane %v5188, %v5201
        %v5203 = vcombine.high %v5195, %v5195
        %v5204 = vcombine.high %v5202, %v5202
        %v5205 = vcombine.high %v5109, %v5109
        %v5207 = vunpack.c.l.s4 1983009808
        %v5208 = vunpack.c.0.s8 %v5207
        %v5209 = vlaneseq
        %v5210 = vshrl.u32 %v5209, 7
        %v5211 = vsub.s32 %v5208, %v5210
        %v5212 = vrot.slane %v5109, %v5211
        %v5214 = vunpack.c.l.s4 1983009808
        %v5215 = vunpack.c.0.s8 %v5214
        %v5216 = vlaneseq
        %v5217 = vshrl.u32 %v5216, 7
        %v5218 = vsub.s32 %v5215, %v5217
        %v5219 = vrot.slane %v5205, %v5218
        %v5220 = vcombine.high %v5212, %v5212
        %v5221 = vcombine.high %v5219, %v5219
        %v5222 = vcombine.high %v5110, %v5110
        %v5224 = vunpack.c.l.s4 1983009808
        %v5225 = vunpack.c.0.s8 %v5224
        %v5226 = vlaneseq
        %v5227 = vshrl.u32 %v5226, 7
        %v5228 = vsub.s32 %v5225, %v5227
        %v5229 = vrot.slane %v5110, %v5228
        %v5231 = vunpack.c.l.s4 1983009808
        %v5232 = vunpack.c.0.s8 %v5231
        %v5233 = vlaneseq
        %v5234 = vshrl.u32 %v5233, 7
        %v5235 = vsub.s32 %v5232, %v5234
        %v5236 = vrot.slane %v5222, %v5235
        %v5237 = vcombine.high %v5229, %v5229
        %v5238 = vcombine.high %v5236, %v5236
        %v5239 = vcombine.high %v5111, %v5111
        %v5241 = vunpack.c.l.s4 1983009808
        %v5242 = vunpack.c.0.s8 %v5241
        %v5243 = vlaneseq
        %v5244 = vshrl.u32 %v5243, 7
        %v5245 = vsub.s32 %v5242, %v5244
        %v5246 = vrot.slane %v5111, %v5245
        %v5248 = vunpack.c.l.s4 1983009808
        %v5249 = vunpack.c.0.s8 %v5248
        %v5250 = vlaneseq
        %v5251 = vshrl.u32 %v5250, 7
        %v5252 = vsub.s32 %v5249, %v5251
        %v5253 = vrot.slane %v5239, %v5252
        %v5254 = vcombine.high %v5246, %v5246
        %v5255 = vcombine.high %v5253, %v5253
        %v5256 = vcombine.high %v5112, %v5112
        %v5258 = vunpack.c.l.s4 1983009808
        %v5259 = vunpack.c.0.s8 %v5258
        %v5260 = vlaneseq
        %v5261 = vshrl.u32 %v5260, 7
        %v5262 = vsub.s32 %v5259, %v5261
        %v5263 = vrot.slane %v5112, %v5262
        %v5265 = vunpack.c.l.s4 1983009808
        %v5266 = vunpack.c.0.s8 %v5265
        %v5267 = vlaneseq
        %v5268 = vshrl.u32 %v5267, 7
        %v5269 = vsub.s32 %v5266, %v5268
        %v5270 = vrot.slane %v5256, %v5269
        %v5271 = vcombine.high %v5263, %v5263
        %v5272 = vcombine.high %v5270, %v5270
        %v5273 = vcombine.high %v5113, %v5113
        %v5275 = vunpack.c.l.s4 1983009808
        %v5276 = vunpack.c.0.s8 %v5275
        %v5277 = vlaneseq
        %v5278 = vshrl.u32 %v5277, 7
        %v5279 = vsub.s32 %v5276, %v5278
        %v5280 = vrot.slane %v5113, %v5279
        %v5282 = vunpack.c.l.s4 1983009808
        %v5283 = vunpack.c.0.s8 %v5282
        %v5284 = vlaneseq
        %v5285 = vshrl.u32 %v5284, 7
        %v5286 = vsub.s32 %v5283, %v5285
        %v5287 = vrot.slane %v5273, %v5286
        %v5288 = vcombine.high %v5280, %v5280
        %v5289 = vcombine.high %v5287, %v5287
        %v5290 = vcombine.high %v5114, %v5114
        %v5292 = vunpack.c.l.s4 1983009808
        %v5293 = vunpack.c.0.s8 %v5292
        %v5294 = vlaneseq
        %v5295 = vshrl.u32 %v5294, 7
        %v5296 = vsub.s32 %v5293, %v5295
        %v5297 = vrot.slane %v5114, %v5296
        %v5299 = vunpack.c.l.s4 1983009808
        %v5300 = vunpack.c.0.s8 %v5299
        %v5301 = vlaneseq
        %v5302 = vshrl.u32 %v5301, 7
        %v5303 = vsub.s32 %v5300, %v5302
        %v5304 = vrot.slane %v5290, %v5303
        %v5305 = vcombine.high %v5297, %v5297
        %v5306 = vcombine.high %v5304, %v5304
        %v5307 = vcombine.high %v5115, %v5115
        %v5309 = vunpack.c.l.s4 1983009808
        %v5310 = vunpack.c.0.s8 %v5309
        %v5311 = vlaneseq
        %v5312 = vshrl.u32 %v5311, 7
        %v5313 = vsub.s32 %v5310, %v5312
        %v5314 = vrot.slane %v5115, %v5313
        %v5316 = vunpack.c.l.s4 1983009808
        %v5317 = vunpack.c.0.s8 %v5316
        %v5318 = vlaneseq
        %v5319 = vshrl.u32 %v5318, 7
        %v5320 = vsub.s32 %v5317, %v5319
        %v5321 = vrot.slane %v5307, %v5320
        %v5322 = vcombine.high %v5314, %v5314
        %v5323 = vcombine.high %v5321, %v5321
        %v5324 = vcombine.high %v5116, %v5116
        %v5326 = vunpack.c.l.s4 1983009808
        %v5327 = vunpack.c.0.s8 %v5326
        %v5328 = vlaneseq
        %v5329 = vshrl.u32 %v5328, 7
        %v5330 = vsub.s32 %v5327, %v5329
        %v5331 = vrot.slane %v5116, %v5330
        %v5333 = vunpack.c.l.s4 1983009808
        %v5334 = vunpack.c.0.s8 %v5333
        %v5335 = vlaneseq
        %v5336 = vshrl.u32 %v5335, 7
        %v5337 = vsub.s32 %v5334, %v5336
        %v5338 = vrot.slane %v5324, %v5337
        %v5339 = vcombine.high %v5331, %v5331
        %v5340 = vcombine.high %v5338, %v5338
        %v5341 = vcombine.high %v5117, %v5117
        %v5343 = vunpack.c.l.s4 1983009808
        %v5344 = vunpack.c.0.s8 %v5343
        %v5345 = vlaneseq
        %v5346 = vshrl.u32 %v5345, 7
        %v5347 = vsub.s32 %v5344, %v5346
        %v5348 = vrot.slane %v5117, %v5347
        %v5350 = vunpack.c.l.s4 1983009808
        %v5351 = vunpack.c.0.s8 %v5350
        %v5352 = vlaneseq
        %v5353 = vshrl.u32 %v5352, 7
        %v5354 = vsub.s32 %v5351, %v5353
        %v5355 = vrot.slane %v5341, %v5354
        %v5356 = vcombine.high %v5348, %v5348
        %v5357 = vcombine.high %v5355, %v5355
        %v5358 = vcombine.high %v5118, %v5118
        %v5360 = vunpack.c.l.s4 1983009808
        %v5361 = vunpack.c.0.s8 %v5360
        %v5362 = vlaneseq
        %v5363 = vshrl.u32 %v5362, 7
        %v5364 = vsub.s32 %v5361, %v5363
        %v5365 = vrot.slane %v5118, %v5364
        %v5367 = vunpack.c.l.s4 1983009808
        %v5368 = vunpack.c.0.s8 %v5367
        %v5369 = vlaneseq
        %v5370 = vshrl.u32 %v5369, 7
        %v5371 = vsub.s32 %v5368, %v5370
        %v5372 = vrot.slane %v5358, %v5371
        %v5373 = vcombine.high %v5365, %v5365
        %v5374 = vcombine.high %v5372, %v5372
        %v5375 = vcombine.high %v5119, %v5119
        %v5377 = vunpack.c.l.s4 1983009808
        %v5378 = vunpack.c.0.s8 %v5377
        %v5379 = vlaneseq
        %v5380 = vshrl.u32 %v5379, 7
        %v5381 = vsub.s32 %v5378, %v5380
        %v5382 = vrot.slane %v5119, %v5381
        %v5384 = vunpack.c.l.s4 1983009808
        %v5385 = vunpack.c.0.s8 %v5384
        %v5386 = vlaneseq
        %v5387 = vshrl.u32 %v5386, 7
        %v5388 = vsub.s32 %v5385, %v5387
        %v5389 = vrot.slane %v5375, %v5388
        %v5390 = vcombine.high %v5382, %v5382
        %v5391 = vcombine.high %v5389, %v5389
        %v5392 = vcombine.high %v5120, %v5120
        %v5394 = vunpack.c.l.s4 1983009808
        %v5395 = vunpack.c.0.s8 %v5394
        %v5396 = vlaneseq
        %v5397 = vshrl.u32 %v5396, 7
        %v5398 = vsub.s32 %v5395, %v5397
        %v5399 = vrot.slane %v5120, %v5398
        %v5401 = vunpack.c.l.s4 1983009808
        %v5402 = vunpack.c.0.s8 %v5401
        %v5403 = vlaneseq
        %v5404 = vshrl.u32 %v5403, 7
        %v5405 = vsub.s32 %v5402, %v5404
        %v5406 = vrot.slane %v5392, %v5405
        %v5407 = vcombine.high %v5399, %v5399
        %v5408 = vcombine.high %v5406, %v5406
        %v5409 = vcombine.high %v5121, %v5121
        %v5411 = vunpack.c.l.s4 1983009808
        %v5412 = vunpack.c.0.s8 %v5411
        %v5413 = vlaneseq
        %v5414 = vshrl.u32 %v5413, 7
        %v5415 = vsub.s32 %v5412, %v5414
        %v5416 = vrot.slane %v5121, %v5415
        %v5418 = vunpack.c.l.s4 1983009808
        %v5419 = vunpack.c.0.s8 %v5418
        %v5420 = vlaneseq
        %v5421 = vshrl.u32 %v5420, 7
        %v5422 = vsub.s32 %v5419, %v5421
        %v5423 = vrot.slane %v5409, %v5422
        %v5424 = vcombine.high %v5416, %v5416
        %v5425 = vcombine.high %v5423, %v5423
        %v5426 = vcombine.high %v5122, %v5122
        %v5428 = vunpack.c.l.s4 1983009808
        %v5429 = vunpack.c.0.s8 %v5428
        %v5430 = vlaneseq
        %v5431 = vshrl.u32 %v5430, 7
        %v5432 = vsub.s32 %v5429, %v5431
        %v5433 = vrot.slane %v5122, %v5432
        %v5435 = vunpack.c.l.s4 1983009808
        %v5436 = vunpack.c.0.s8 %v5435
        %v5437 = vlaneseq
        %v5438 = vshrl.u32 %v5437, 7
        %v5439 = vsub.s32 %v5436, %v5438
        %v5440 = vrot.slane %v5426, %v5439
        %v5441 = vcombine.high %v5433, %v5433
        %v5442 = vcombine.high %v5440, %v5440
        %v5443 = vcombine.high %v5123, %v5123
        %v5445 = vunpack.c.l.s4 1983009808
        %v5446 = vunpack.c.0.s8 %v5445
        %v5447 = vlaneseq
        %v5448 = vshrl.u32 %v5447, 7
        %v5449 = vsub.s32 %v5446, %v5448
        %v5450 = vrot.slane %v5123, %v5449
        %v5452 = vunpack.c.l.s4 1983009808
        %v5453 = vunpack.c.0.s8 %v5452
        %v5454 = vlaneseq
        %v5455 = vshrl.u32 %v5454, 7
        %v5456 = vsub.s32 %v5453, %v5455
        %v5457 = vrot.slane %v5443, %v5456
        %v5458 = vcombine.high %v5450, %v5450
        %v5459 = vcombine.high %v5457, %v5457
        %v5460 = vcombine.high %v5124, %v5124
        %v5462 = vunpack.c.l.s4 1983009808
        %v5463 = vunpack.c.0.s8 %v5462
        %v5464 = vlaneseq
        %v5465 = vshrl.u32 %v5464, 7
        %v5466 = vsub.s32 %v5463, %v5465
        %v5467 = vrot.slane %v5124, %v5466
        %v5469 = vunpack.c.l.s4 1983009808
        %v5470 = vunpack.c.0.s8 %v5469
        %v5471 = vlaneseq
        %v5472 = vshrl.u32 %v5471, 7
        %v5473 = vsub.s32 %v5470, %v5472
        %v5474 = vrot.slane %v5460, %v5473
        %v5475 = vcombine.high %v5467, %v5467
        %v5476 = vcombine.high %v5474, %v5474
        %v5477 = vcombine.high %v5125, %v5125
        %v5479 = vunpack.c.l.s4 1983009808
        %v5480 = vunpack.c.0.s8 %v5479
        %v5481 = vlaneseq
        %v5482 = vshrl.u32 %v5481, 7
        %v5483 = vsub.s32 %v5480, %v5482
        %v5484 = vrot.slane %v5125, %v5483
        %v5486 = vunpack.c.l.s4 1983009808
        %v5487 = vunpack.c.0.s8 %v5486
        %v5488 = vlaneseq
        %v5489 = vshrl.u32 %v5488, 7
        %v5490 = vsub.s32 %v5487, %v5489
        %v5491 = vrot.slane %v5477, %v5490
        %v5492 = vcombine.high %v5484, %v5484
        %v5493 = vcombine.high %v5491, %v5491
        %v5494 = vcombine.high %v5126, %v5126
        %v5496 = vunpack.c.l.s4 1983009808
        %v5497 = vunpack.c.0.s8 %v5496
        %v5498 = vlaneseq
        %v5499 = vshrl.u32 %v5498, 7
        %v5500 = vsub.s32 %v5497, %v5499
        %v5501 = vrot.slane %v5126, %v5500
        %v5503 = vunpack.c.l.s4 1983009808
        %v5504 = vunpack.c.0.s8 %v5503
        %v5505 = vlaneseq
        %v5506 = vshrl.u32 %v5505, 7
        %v5507 = vsub.s32 %v5504, %v5506
        %v5508 = vrot.slane %v5494, %v5507
        %v5509 = vcombine.high %v5501, %v5501
        %v5510 = vcombine.high %v5508, %v5508
        %v5511 = vcombine.high %v5127, %v5127
        %v5513 = vunpack.c.l.s4 1983009808
        %v5514 = vunpack.c.0.s8 %v5513
        %v5515 = vlaneseq
        %v5516 = vshrl.u32 %v5515, 7
        %v5517 = vsub.s32 %v5514, %v5516
        %v5518 = vrot.slane %v5127, %v5517
        %v5520 = vunpack.c.l.s4 1983009808
        %v5521 = vunpack.c.0.s8 %v5520
        %v5522 = vlaneseq
        %v5523 = vshrl.u32 %v5522, 7
        %v5524 = vsub.s32 %v5521, %v5523
        %v5525 = vrot.slane %v5511, %v5524
        %v5526 = vcombine.high %v5518, %v5518
        %v5527 = vcombine.high %v5525, %v5525
        %v5528 = vcombine.high %v5128, %v5128
        %v5530 = vunpack.c.l.s4 1983009808
        %v5531 = vunpack.c.0.s8 %v5530
        %v5532 = vlaneseq
        %v5533 = vshrl.u32 %v5532, 7
        %v5534 = vsub.s32 %v5531, %v5533
        %v5535 = vrot.slane %v5128, %v5534
        %v5537 = vunpack.c.l.s4 1983009808
        %v5538 = vunpack.c.0.s8 %v5537
        %v5539 = vlaneseq
        %v5540 = vshrl.u32 %v5539, 7
        %v5541 = vsub.s32 %v5538, %v5540
        %v5542 = vrot.slane %v5528, %v5541
        %v5543 = vcombine.high %v5535, %v5535
        %v5544 = vcombine.high %v5542, %v5542
        %v5545 = vcombine.high %v5129, %v5129
        %v5547 = vunpack.c.l.s4 1983009808
        %v5548 = vunpack.c.0.s8 %v5547
        %v5549 = vlaneseq
        %v5550 = vshrl.u32 %v5549, 7
        %v5551 = vsub.s32 %v5548, %v5550
        %v5552 = vrot.slane %v5129, %v5551
        %v5554 = vunpack.c.l.s4 1983009808
        %v5555 = vunpack.c.0.s8 %v5554
        %v5556 = vlaneseq
        %v5557 = vshrl.u32 %v5556, 7
        %v5558 = vsub.s32 %v5555, %v5557
        %v5559 = vrot.slane %v5545, %v5558
        %v5560 = vcombine.high %v5552, %v5552
        %v5561 = vcombine.high %v5559, %v5559
        %v5562 = vcombine.high %v5130, %v5130
        %v5564 = vunpack.c.l.s4 1983009808
        %v5565 = vunpack.c.0.s8 %v5564
        %v5566 = vlaneseq
        %v5567 = vshrl.u32 %v5566, 7
        %v5568 = vsub.s32 %v5565, %v5567
        %v5569 = vrot.slane %v5130, %v5568
        %v5571 = vunpack.c.l.s4 1983009808
        %v5572 = vunpack.c.0.s8 %v5571
        %v5573 = vlaneseq
        %v5574 = vshrl.u32 %v5573, 7
        %v5575 = vsub.s32 %v5572, %v5574
        %v5576 = vrot.slane %v5562, %v5575
        %v5577 = vcombine.high %v5569, %v5569
        %v5578 = vcombine.high %v5576, %v5576
        %v5579 = vcombine.high %v5131, %v5131
        %v5581 = vunpack.c.l.s4 1983009808
        %v5582 = vunpack.c.0.s8 %v5581
        %v5583 = vlaneseq
        %v5584 = vshrl.u32 %v5583, 7
        %v5585 = vsub.s32 %v5582, %v5584
        %v5586 = vrot.slane %v5131, %v5585
        %v5588 = vunpack.c.l.s4 1983009808
        %v5589 = vunpack.c.0.s8 %v5588
        %v5590 = vlaneseq
        %v5591 = vshrl.u32 %v5590, 7
        %v5592 = vsub.s32 %v5589, %v5591
        %v5593 = vrot.slane %v5579, %v5592
        %v5594 = vcombine.high %v5586, %v5586
        %v5595 = vcombine.high %v5593, %v5593
        %v5596 = vcombine.high %v5132, %v5132
        %v5598 = vunpack.c.l.s4 1983009808
        %v5599 = vunpack.c.0.s8 %v5598
        %v5600 = vlaneseq
        %v5601 = vshrl.u32 %v5600, 7
        %v5602 = vsub.s32 %v5599, %v5601
        %v5603 = vrot.slane %v5132, %v5602
        %v5605 = vunpack.c.l.s4 1983009808
        %v5606 = vunpack.c.0.s8 %v5605
        %v5607 = vlaneseq
        %v5608 = vshrl.u32 %v5607, 7
        %v5609 = vsub.s32 %v5606, %v5608
        %v5610 = vrot.slane %v5596, %v5609
        %v5611 = vcombine.high %v5603, %v5603
        %v5612 = vcombine.high %v5610, %v5610
        %v5613 = vcombine.high %v5133, %v5133
        %v5615 = vunpack.c.l.s4 1983009808
        %v5616 = vunpack.c.0.s8 %v5615
        %v5617 = vlaneseq
        %v5618 = vshrl.u32 %v5617, 7
        %v5619 = vsub.s32 %v5616, %v5618
        %v5620 = vrot.slane %v5133, %v5619
        %v5622 = vunpack.c.l.s4 1983009808
        %v5623 = vunpack.c.0.s8 %v5622
        %v5624 = vlaneseq
        %v5625 = vshrl.u32 %v5624, 7
        %v5626 = vsub.s32 %v5623, %v5625
        %v5627 = vrot.slane %v5613, %v5626
        %v5628 = vcombine.high %v5620, %v5620
        %v5629 = vcombine.high %v5627, %v5627
        %v5630 = vcombine.high %v5134, %v5134
        %v5632 = vunpack.c.l.s4 1983009808
        %v5633 = vunpack.c.0.s8 %v5632
        %v5634 = vlaneseq
        %v5635 = vshrl.u32 %v5634, 7
        %v5636 = vsub.s32 %v5633, %v5635
        %v5637 = vrot.slane %v5134, %v5636
        %v5639 = vunpack.c.l.s4 1983009808
        %v5640 = vunpack.c.0.s8 %v5639
        %v5641 = vlaneseq
        %v5642 = vshrl.u32 %v5641, 7
        %v5643 = vsub.s32 %v5640, %v5642
        %v5644 = vrot.slane %v5630, %v5643
        %v5645 = vcombine.high %v5637, %v5637
        %v5646 = vcombine.high %v5644, %v5644
        %v5647 = vcombine.high %v5135, %v5135
        %v5649 = vunpack.c.l.s4 1983009808
        %v5650 = vunpack.c.0.s8 %v5649
        %v5651 = vlaneseq
        %v5652 = vshrl.u32 %v5651, 7
        %v5653 = vsub.s32 %v5650, %v5652
        %v5654 = vrot.slane %v5135, %v5653
        %v5656 = vunpack.c.l.s4 1983009808
        %v5657 = vunpack.c.0.s8 %v5656
        %v5658 = vlaneseq
        %v5659 = vshrl.u32 %v5658, 7
        %v5660 = vsub.s32 %v5657, %v5659
        %v5661 = vrot.slane %v5647, %v5660
        %v5662 = vcombine.high %v5654, %v5654
        %v5663 = vcombine.high %v5661, %v5661
        %v5664 = vcombine.high %v5136, %v5136
        %v5666 = vunpack.c.l.s4 1983009808
        %v5667 = vunpack.c.0.s8 %v5666
        %v5668 = vlaneseq
        %v5669 = vshrl.u32 %v5668, 7
        %v5670 = vsub.s32 %v5667, %v5669
        %v5671 = vrot.slane %v5136, %v5670
        %v5673 = vunpack.c.l.s4 1983009808
        %v5674 = vunpack.c.0.s8 %v5673
        %v5675 = vlaneseq
        %v5676 = vshrl.u32 %v5675, 7
        %v5677 = vsub.s32 %v5674, %v5676
        %v5678 = vrot.slane %v5664, %v5677
        %v5679 = vcombine.high %v5671, %v5671
        %v5680 = vcombine.high %v5678, %v5678
        %v5681 = vcombine.high %v5137, %v5137
        %v5683 = vunpack.c.l.s4 1983009808
        %v5684 = vunpack.c.0.s8 %v5683
        %v5685 = vlaneseq
        %v5686 = vshrl.u32 %v5685, 7
        %v5687 = vsub.s32 %v5684, %v5686
        %v5688 = vrot.slane %v5137, %v5687
        %v5690 = vunpack.c.l.s4 1983009808
        %v5691 = vunpack.c.0.s8 %v5690
        %v5692 = vlaneseq
        %v5693 = vshrl.u32 %v5692, 7
        %v5694 = vsub.s32 %v5691, %v5693
        %v5695 = vrot.slane %v5681, %v5694
        %v5696 = vcombine.high %v5688, %v5688
        %v5697 = vcombine.high %v5695, %v5695
        %v5698 = vcombine.high %v5138, %v5138
        %v5700 = vunpack.c.l.s4 1983009808
        %v5701 = vunpack.c.0.s8 %v5700
        %v5702 = vlaneseq
        %v5703 = vshrl.u32 %v5702, 7
        %v5704 = vsub.s32 %v5701, %v5703
        %v5705 = vrot.slane %v5138, %v5704
        %v5707 = vunpack.c.l.s4 1983009808
        %v5708 = vunpack.c.0.s8 %v5707
        %v5709 = vlaneseq
        %v5710 = vshrl.u32 %v5709, 7
        %v5711 = vsub.s32 %v5708, %v5710
        %v5712 = vrot.slane %v5698, %v5711
        %v5713 = vcombine.high %v5705, %v5705
        %v5714 = vcombine.high %v5712, %v5712
        %vm5843 = vcmask 1041408
        %v5844 = vsel %vm5843, %v5178, -inf
        %v5845 = vrot.slane %v5844, 4
        %v5846 = vmax.f32 %v5844, %v5845
        %v5847 = vrot.slane %v5846, 2
        %v5848 = vmax.f32 %v5846, %v5847
        %v5849 = vrot.slane %v5848, 1
        %v5850 = vmax.f32 %v5848, %v5849
        %v5851 = vsel %vm5843, %v5186, -inf
        %v5852 = vrot.slane %v5851, 4
        %v5853 = vmax.f32 %v5851, %v5852
        %v5854 = vrot.slane %v5853, 2
        %v5855 = vmax.f32 %v5853, %v5854
        %v5856 = vrot.slane %v5855, 1
        %v5857 = vmax.f32 %v5855, %v5856
        %v5858 = vsel %vm5843, %v5185, -inf
        %v5859 = vrot.slane %v5858, 4
        %v5860 = vmax.f32 %v5858, %v5859
        %v5861 = vrot.slane %v5860, 2
        %v5862 = vmax.f32 %v5860, %v5861
        %v5863 = vrot.slane %v5862, 1
        %v5864 = vmax.f32 %v5862, %v5863
        %v5865 = vsel %vm5843, %v5187, -inf
        %v5866 = vrot.slane %v5865, 4
        %v5867 = vmax.f32 %v5865, %v5866
        %v5868 = vrot.slane %v5867, 2
        %v5869 = vmax.f32 %v5867, %v5868
        %v5870 = vrot.slane %v5869, 1
        %v5871 = vmax.f32 %v5869, %v5870
        %v5872 = vsel %vm5843, %v5195, -inf
        %v5873 = vrot.slane %v5872, 4
        %v5874 = vmax.f32 %v5872, %v5873
        %v5875 = vrot.slane %v5874, 2
        %v5876 = vmax.f32 %v5874, %v5875
        %v5877 = vrot.slane %v5876, 1
        %v5878 = vmax.f32 %v5876, %v5877
        %v5879 = vsel %vm5843, %v5203, -inf
        %v5880 = vrot.slane %v5879, 4
        %v5881 = vmax.f32 %v5879, %v5880
        %v5882 = vrot.slane %v5881, 2
        %v5883 = vmax.f32 %v5881, %v5882
        %v5884 = vrot.slane %v5883, 1
        %v5885 = vmax.f32 %v5883, %v5884
        %v5886 = vsel %vm5843, %v5202, -inf
        %v5887 = vrot.slane %v5886, 4
        %v5888 = vmax.f32 %v5886, %v5887
        %v5889 = vrot.slane %v5888, 2
        %v5890 = vmax.f32 %v5888, %v5889
        %v5891 = vrot.slane %v5890, 1
        %v5892 = vmax.f32 %v5890, %v5891
        %v5893 = vsel %vm5843, %v5204, -inf
        %v5894 = vrot.slane %v5893, 4
        %v5895 = vmax.f32 %v5893, %v5894
        %v5896 = vrot.slane %v5895, 2
        %v5897 = vmax.f32 %v5895, %v5896
        %v5898 = vrot.slane %v5897, 1
        %v5899 = vmax.f32 %v5897, %v5898
        %v5900 = vsel %vm5843, %v5212, -inf
        %v5901 = vrot.slane %v5900, 4
        %v5902 = vmax.f32 %v5900, %v5901
        %v5903 = vrot.slane %v5902, 2
        %v5904 = vmax.f32 %v5902, %v5903
        %v5905 = vrot.slane %v5904, 1
        %v5906 = vmax.f32 %v5904, %v5905
        %v5907 = vsel %vm5843, %v5220, -inf
        %v5908 = vrot.slane %v5907, 4
        %v5909 = vmax.f32 %v5907, %v5908
        %v5910 = vrot.slane %v5909, 2
        %v5911 = vmax.f32 %v5909, %v5910
        %v5912 = vrot.slane %v5911, 1
        %v5913 = vmax.f32 %v5911, %v5912
        %v5914 = vsel %vm5843, %v5219, -inf
        %v5915 = vrot.slane %v5914, 4
        %v5916 = vmax.f32 %v5914, %v5915
        %v5917 = vrot.slane %v5916, 2
        %v5918 = vmax.f32 %v5916, %v5917
        %v5919 = vrot.slane %v5918, 1
        %v5920 = vmax.f32 %v5918, %v5919
        %v5921 = vsel %vm5843, %v5221, -inf
        %v5922 = vrot.slane %v5921, 4
        %v5923 = vmax.f32 %v5921, %v5922
        %v5924 = vrot.slane %v5923, 2
        %v5925 = vmax.f32 %v5923, %v5924
        %v5926 = vrot.slane %v5925, 1
        %v5927 = vmax.f32 %v5925, %v5926
        %v5928 = vsel %vm5843, %v5229, -inf
        %v5929 = vrot.slane %v5928, 4
        %v5930 = vmax.f32 %v5928, %v5929
        %v5931 = vrot.slane %v5930, 2
        %v5932 = vmax.f32 %v5930, %v5931
        %v5933 = vrot.slane %v5932, 1
        %v5934 = vmax.f32 %v5932, %v5933
        %v5935 = vsel %vm5843, %v5237, -inf
        %v5936 = vrot.slane %v5935, 4
        %v5937 = vmax.f32 %v5935, %v5936
        %v5938 = vrot.slane %v5937, 2
        %v5939 = vmax.f32 %v5937, %v5938
        %v5940 = vrot.slane %v5939, 1
        %v5941 = vmax.f32 %v5939, %v5940
        %v5942 = vsel %vm5843, %v5236, -inf
        %v5943 = vrot.slane %v5942, 4
        %v5944 = vmax.f32 %v5942, %v5943
        %v5945 = vrot.slane %v5944, 2
        %v5946 = vmax.f32 %v5944, %v5945
        %v5947 = vrot.slane %v5946, 1
        %v5948 = vmax.f32 %v5946, %v5947
        %v5949 = vsel %vm5843, %v5238, -inf
        %v5950 = vrot.slane %v5949, 4
        %v5951 = vmax.f32 %v5949, %v5950
        %v5952 = vrot.slane %v5951, 2
        %v5953 = vmax.f32 %v5951, %v5952
        %v5954 = vrot.slane %v5953, 1
        %v5955 = vmax.f32 %v5953, %v5954
        %v5956 = vsel %vm5843, %v5246, -inf
        %v5957 = vrot.slane %v5956, 4
        %v5958 = vmax.f32 %v5956, %v5957
        %v5959 = vrot.slane %v5958, 2
        %v5960 = vmax.f32 %v5958, %v5959
        %v5961 = vrot.slane %v5960, 1
        %v5962 = vmax.f32 %v5960, %v5961
        %v5963 = vsel %vm5843, %v5254, -inf
        %v5964 = vrot.slane %v5963, 4
        %v5965 = vmax.f32 %v5963, %v5964
        %v5966 = vrot.slane %v5965, 2
        %v5967 = vmax.f32 %v5965, %v5966
        %v5968 = vrot.slane %v5967, 1
        %v5969 = vmax.f32 %v5967, %v5968
        %v5970 = vsel %vm5843, %v5253, -inf
        %v5971 = vrot.slane %v5970, 4
        %v5972 = vmax.f32 %v5970, %v5971
        %v5973 = vrot.slane %v5972, 2
        %v5974 = vmax.f32 %v5972, %v5973
        %v5975 = vrot.slane %v5974, 1
        %v5976 = vmax.f32 %v5974, %v5975
        %v5977 = vsel %vm5843, %v5255, -inf
        %v5978 = vrot.slane %v5977, 4
        %v5979 = vmax.f32 %v5977, %v5978
        %v5980 = vrot.slane %v5979, 2
        %v5981 = vmax.f32 %v5979, %v5980
        %v5982 = vrot.slane %v5981, 1
        %v5983 = vmax.f32 %v5981, %v5982
        %v5984 = vsel %vm5843, %v5263, -inf
        %v5985 = vrot.slane %v5984, 4
        %v5986 = vmax.f32 %v5984, %v5985
        %v5987 = vrot.slane %v5986, 2
        %v5988 = vmax.f32 %v5986, %v5987
        %v5989 = vrot.slane %v5988, 1
        %v5990 = vmax.f32 %v5988, %v5989
        %v5991 = vsel %vm5843, %v5271, -inf
        %v5992 = vrot.slane %v5991, 4
        %v5993 = vmax.f32 %v5991, %v5992
        %v5994 = vrot.slane %v5993, 2
        %v5995 = vmax.f32 %v5993, %v5994
        %v5996 = vrot.slane %v5995, 1
        %v5997 = vmax.f32 %v5995, %v5996
        %v5998 = vsel %vm5843, %v5270, -inf
        %v5999 = vrot.slane %v5998, 4
        %v6000 = vmax.f32 %v5998, %v5999
        %v6001 = vrot.slane %v6000, 2
        %v6002 = vmax.f32 %v6000, %v6001
        %v6003 = vrot.slane %v6002, 1
        %v6004 = vmax.f32 %v6002, %v6003
        %v6005 = vsel %vm5843, %v5272, -inf
        %v6006 = vrot.slane %v6005, 4
        %v6007 = vmax.f32 %v6005, %v6006
        %v6008 = vrot.slane %v6007, 2
        %v6009 = vmax.f32 %v6007, %v6008
        %v6010 = vrot.slane %v6009, 1
        %v6011 = vmax.f32 %v6009, %v6010
        %v6012 = vsel %vm5843, %v5280, -inf
        %v6013 = vrot.slane %v6012, 4
        %v6014 = vmax.f32 %v6012, %v6013
        %v6015 = vrot.slane %v6014, 2
        %v6016 = vmax.f32 %v6014, %v6015
        %v6017 = vrot.slane %v6016, 1
        %v6018 = vmax.f32 %v6016, %v6017
        %v6019 = vsel %vm5843, %v5288, -inf
        %v6020 = vrot.slane %v6019, 4
        %v6021 = vmax.f32 %v6019, %v6020
        %v6022 = vrot.slane %v6021, 2
        %v6023 = vmax.f32 %v6021, %v6022
        %v6024 = vrot.slane %v6023, 1
        %v6025 = vmax.f32 %v6023, %v6024
        %v6026 = vsel %vm5843, %v5287, -inf
        %v6027 = vrot.slane %v6026, 4
        %v6028 = vmax.f32 %v6026, %v6027
        %v6029 = vrot.slane %v6028, 2
        %v6030 = vmax.f32 %v6028, %v6029
        %v6031 = vrot.slane %v6030, 1
        %v6032 = vmax.f32 %v6030, %v6031
        %v6033 = vsel %vm5843, %v5289, -inf
        %v6034 = vrot.slane %v6033, 4
        %v6035 = vmax.f32 %v6033, %v6034
        %v6036 = vrot.slane %v6035, 2
        %v6037 = vmax.f32 %v6035, %v6036
        %v6038 = vrot.slane %v6037, 1
        %v6039 = vmax.f32 %v6037, %v6038
        %v6040 = vsel %vm5843, %v5297, -inf
        %v6041 = vrot.slane %v6040, 4
        %v6042 = vmax.f32 %v6040, %v6041
        %v6043 = vrot.slane %v6042, 2
        %v6044 = vmax.f32 %v6042, %v6043
        %v6045 = vrot.slane %v6044, 1
        %v6046 = vmax.f32 %v6044, %v6045
        %v6047 = vsel %vm5843, %v5305, -inf
        %v6048 = vrot.slane %v6047, 4
        %v6049 = vmax.f32 %v6047, %v6048
        %v6050 = vrot.slane %v6049, 2
        %v6051 = vmax.f32 %v6049, %v6050
        %v6052 = vrot.slane %v6051, 1
        %v6053 = vmax.f32 %v6051, %v6052
        %v6054 = vsel %vm5843, %v5304, -inf
        %v6055 = vrot.slane %v6054, 4
        %v6056 = vmax.f32 %v6054, %v6055
        %v6057 = vrot.slane %v6056, 2
        %v6058 = vmax.f32 %v6056, %v6057
        %v6059 = vrot.slane %v6058, 1
        %v6060 = vmax.f32 %v6058, %v6059
        %v6061 = vsel %vm5843, %v5306, -inf
        %v6062 = vrot.slane %v6061, 4
        %v6063 = vmax.f32 %v6061, %v6062
        %v6064 = vrot.slane %v6063, 2
        %v6065 = vmax.f32 %v6063, %v6064
        %v6066 = vrot.slane %v6065, 1
        %v6067 = vmax.f32 %v6065, %v6066
        %v6068 = vsel %vm5843, %v5314, -inf
        %v6069 = vrot.slane %v6068, 4
        %v6070 = vmax.f32 %v6068, %v6069
        %v6071 = vrot.slane %v6070, 2
        %v6072 = vmax.f32 %v6070, %v6071
        %v6073 = vrot.slane %v6072, 1
        %v6074 = vmax.f32 %v6072, %v6073
        %v6075 = vsel %vm5843, %v5322, -inf
        %v6076 = vrot.slane %v6075, 4
        %v6077 = vmax.f32 %v6075, %v6076
        %v6078 = vrot.slane %v6077, 2
        %v6079 = vmax.f32 %v6077, %v6078
        %v6080 = vrot.slane %v6079, 1
        %v6081 = vmax.f32 %v6079, %v6080
        %v6082 = vsel %vm5843, %v5321, -inf
        %v6083 = vrot.slane %v6082, 4
        %v6084 = vmax.f32 %v6082, %v6083
        %v6085 = vrot.slane %v6084, 2
        %v6086 = vmax.f32 %v6084, %v6085
        %v6087 = vrot.slane %v6086, 1
        %v6088 = vmax.f32 %v6086, %v6087
        %v6089 = vsel %vm5843, %v5323, -inf
        %v6090 = vrot.slane %v6089, 4
        %v6091 = vmax.f32 %v6089, %v6090
        %v6092 = vrot.slane %v6091, 2
        %v6093 = vmax.f32 %v6091, %v6092
        %v6094 = vrot.slane %v6093, 1
        %v6095 = vmax.f32 %v6093, %v6094
        %v6096 = vsel %vm5843, %v5331, -inf
        %v6097 = vrot.slane %v6096, 4
        %v6098 = vmax.f32 %v6096, %v6097
        %v6099 = vrot.slane %v6098, 2
        %v6100 = vmax.f32 %v6098, %v6099
        %v6101 = vrot.slane %v6100, 1
        %v6102 = vmax.f32 %v6100, %v6101
        %v6103 = vsel %vm5843, %v5339, -inf
        %v6104 = vrot.slane %v6103, 4
        %v6105 = vmax.f32 %v6103, %v6104
        %v6106 = vrot.slane %v6105, 2
        %v6107 = vmax.f32 %v6105, %v6106
        %v6108 = vrot.slane %v6107, 1
        %v6109 = vmax.f32 %v6107, %v6108
        %v6110 = vsel %vm5843, %v5338, -inf
        %v6111 = vrot.slane %v6110, 4
        %v6112 = vmax.f32 %v6110, %v6111
        %v6113 = vrot.slane %v6112, 2
        %v6114 = vmax.f32 %v6112, %v6113
        %v6115 = vrot.slane %v6114, 1
        %v6116 = vmax.f32 %v6114, %v6115
        %v6117 = vsel %vm5843, %v5340, -inf
        %v6118 = vrot.slane %v6117, 4
        %v6119 = vmax.f32 %v6117, %v6118
        %v6120 = vrot.slane %v6119, 2
        %v6121 = vmax.f32 %v6119, %v6120
        %v6122 = vrot.slane %v6121, 1
        %v6123 = vmax.f32 %v6121, %v6122
        %v6124 = vsel %vm5843, %v5348, -inf
        %v6125 = vrot.slane %v6124, 4
        %v6126 = vmax.f32 %v6124, %v6125
        %v6127 = vrot.slane %v6126, 2
        %v6128 = vmax.f32 %v6126, %v6127
        %v6129 = vrot.slane %v6128, 1
        %v6130 = vmax.f32 %v6128, %v6129
        %v6131 = vsel %vm5843, %v5356, -inf
        %v6132 = vrot.slane %v6131, 4
        %v6133 = vmax.f32 %v6131, %v6132
        %v6134 = vrot.slane %v6133, 2
        %v6135 = vmax.f32 %v6133, %v6134
        %v6136 = vrot.slane %v6135, 1
        %v6137 = vmax.f32 %v6135, %v6136
        %v6138 = vsel %vm5843, %v5355, -inf
        %v6139 = vrot.slane %v6138, 4
        %v6140 = vmax.f32 %v6138, %v6139
        %v6141 = vrot.slane %v6140, 2
        %v6142 = vmax.f32 %v6140, %v6141
        %v6143 = vrot.slane %v6142, 1
        %v6144 = vmax.f32 %v6142, %v6143
        %v6145 = vsel %vm5843, %v5357, -inf
        %v6146 = vrot.slane %v6145, 4
        %v6147 = vmax.f32 %v6145, %v6146
        %v6148 = vrot.slane %v6147, 2
        %v6149 = vmax.f32 %v6147, %v6148
        %v6150 = vrot.slane %v6149, 1
        %v6151 = vmax.f32 %v6149, %v6150
        %v6152 = vsel %vm5843, %v5365, -inf
        %v6153 = vrot.slane %v6152, 4
        %v6154 = vmax.f32 %v6152, %v6153
        %v6155 = vrot.slane %v6154, 2
        %v6156 = vmax.f32 %v6154, %v6155
        %v6157 = vrot.slane %v6156, 1
        %v6158 = vmax.f32 %v6156, %v6157
        %v6159 = vsel %vm5843, %v5373, -inf
        %v6160 = vrot.slane %v6159, 4
        %v6161 = vmax.f32 %v6159, %v6160
        %v6162 = vrot.slane %v6161, 2
        %v6163 = vmax.f32 %v6161, %v6162
        %v6164 = vrot.slane %v6163, 1
        %v6165 = vmax.f32 %v6163, %v6164
        %v6166 = vsel %vm5843, %v5372, -inf
        %v6167 = vrot.slane %v6166, 4
        %v6168 = vmax.f32 %v6166, %v6167
        %v6169 = vrot.slane %v6168, 2
        %v6170 = vmax.f32 %v6168, %v6169
        %v6171 = vrot.slane %v6170, 1
        %v6172 = vmax.f32 %v6170, %v6171
        %v6173 = vsel %vm5843, %v5374, -inf
        %v6174 = vrot.slane %v6173, 4
        %v6175 = vmax.f32 %v6173, %v6174
        %v6176 = vrot.slane %v6175, 2
        %v6177 = vmax.f32 %v6175, %v6176
        %v6178 = vrot.slane %v6177, 1
        %v6179 = vmax.f32 %v6177, %v6178
        %v6180 = vsel %vm5843, %v5382, -inf
        %v6181 = vrot.slane %v6180, 4
        %v6182 = vmax.f32 %v6180, %v6181
        %v6183 = vrot.slane %v6182, 2
        %v6184 = vmax.f32 %v6182, %v6183
        %v6185 = vrot.slane %v6184, 1
        %v6186 = vmax.f32 %v6184, %v6185
        %v6187 = vsel %vm5843, %v5390, -inf
        %v6188 = vrot.slane %v6187, 4
        %v6189 = vmax.f32 %v6187, %v6188
        %v6190 = vrot.slane %v6189, 2
        %v6191 = vmax.f32 %v6189, %v6190
        %v6192 = vrot.slane %v6191, 1
        %v6193 = vmax.f32 %v6191, %v6192
        %v6194 = vsel %vm5843, %v5389, -inf
        %v6195 = vrot.slane %v6194, 4
        %v6196 = vmax.f32 %v6194, %v6195
        %v6197 = vrot.slane %v6196, 2
        %v6198 = vmax.f32 %v6196, %v6197
        %v6199 = vrot.slane %v6198, 1
        %v6200 = vmax.f32 %v6198, %v6199
        %v6201 = vsel %vm5843, %v5391, -inf
        %v6202 = vrot.slane %v6201, 4
        %v6203 = vmax.f32 %v6201, %v6202
        %v6204 = vrot.slane %v6203, 2
        %v6205 = vmax.f32 %v6203, %v6204
        %v6206 = vrot.slane %v6205, 1
        %v6207 = vmax.f32 %v6205, %v6206
        %v6208 = vsel %vm5843, %v5399, -inf
        %v6209 = vrot.slane %v6208, 4
        %v6210 = vmax.f32 %v6208, %v6209
        %v6211 = vrot.slane %v6210, 2
        %v6212 = vmax.f32 %v6210, %v6211
        %v6213 = vrot.slane %v6212, 1
        %v6214 = vmax.f32 %v6212, %v6213
        %v6215 = vsel %vm5843, %v5407, -inf
        %v6216 = vrot.slane %v6215, 4
        %v6217 = vmax.f32 %v6215, %v6216
        %v6218 = vrot.slane %v6217, 2
        %v6219 = vmax.f32 %v6217, %v6218
        %v6220 = vrot.slane %v6219, 1
        %v6221 = vmax.f32 %v6219, %v6220
        %v6222 = vsel %vm5843, %v5406, -inf
        %v6223 = vrot.slane %v6222, 4
        %v6224 = vmax.f32 %v6222, %v6223
        %v6225 = vrot.slane %v6224, 2
        %v6226 = vmax.f32 %v6224, %v6225
        %v6227 = vrot.slane %v6226, 1
        %v6228 = vmax.f32 %v6226, %v6227
        %v6229 = vsel %vm5843, %v5408, -inf
        %v6230 = vrot.slane %v6229, 4
        %v6231 = vmax.f32 %v6229, %v6230
        %v6232 = vrot.slane %v6231, 2
        %v6233 = vmax.f32 %v6231, %v6232
        %v6234 = vrot.slane %v6233, 1
        %v6235 = vmax.f32 %v6233, %v6234
        %v6236 = vsel %vm5843, %v5416, -inf
        %v6237 = vrot.slane %v6236, 4
        %v6238 = vmax.f32 %v6236, %v6237
        %v6239 = vrot.slane %v6238, 2
        %v6240 = vmax.f32 %v6238, %v6239
        %v6241 = vrot.slane %v6240, 1
        %v6242 = vmax.f32 %v6240, %v6241
        %v6243 = vsel %vm5843, %v5424, -inf
        %v6244 = vrot.slane %v6243, 4
        %v6245 = vmax.f32 %v6243, %v6244
        %v6246 = vrot.slane %v6245, 2
        %v6247 = vmax.f32 %v6245, %v6246
        %v6248 = vrot.slane %v6247, 1
        %v6249 = vmax.f32 %v6247, %v6248
        %v6250 = vsel %vm5843, %v5423, -inf
        %v6251 = vrot.slane %v6250, 4
        %v6252 = vmax.f32 %v6250, %v6251
        %v6253 = vrot.slane %v6252, 2
        %v6254 = vmax.f32 %v6252, %v6253
        %v6255 = vrot.slane %v6254, 1
        %v6256 = vmax.f32 %v6254, %v6255
        %v6257 = vsel %vm5843, %v5425, -inf
        %v6258 = vrot.slane %v6257, 4
        %v6259 = vmax.f32 %v6257, %v6258
        %v6260 = vrot.slane %v6259, 2
        %v6261 = vmax.f32 %v6259, %v6260
        %v6262 = vrot.slane %v6261, 1
        %v6263 = vmax.f32 %v6261, %v6262
        %v6264 = vsel %vm5843, %v5433, -inf
        %v6265 = vrot.slane %v6264, 4
        %v6266 = vmax.f32 %v6264, %v6265
        %v6267 = vrot.slane %v6266, 2
        %v6268 = vmax.f32 %v6266, %v6267
        %v6269 = vrot.slane %v6268, 1
        %v6270 = vmax.f32 %v6268, %v6269
        %v6271 = vsel %vm5843, %v5441, -inf
        %v6272 = vrot.slane %v6271, 4
        %v6273 = vmax.f32 %v6271, %v6272
        %v6274 = vrot.slane %v6273, 2
        %v6275 = vmax.f32 %v6273, %v6274
        %v6276 = vrot.slane %v6275, 1
        %v6277 = vmax.f32 %v6275, %v6276
        %v6278 = vsel %vm5843, %v5440, -inf
        %v6279 = vrot.slane %v6278, 4
        %v6280 = vmax.f32 %v6278, %v6279
        %v6281 = vrot.slane %v6280, 2
        %v6282 = vmax.f32 %v6280, %v6281
        %v6283 = vrot.slane %v6282, 1
        %v6284 = vmax.f32 %v6282, %v6283
        %v6285 = vsel %vm5843, %v5442, -inf
        %v6286 = vrot.slane %v6285, 4
        %v6287 = vmax.f32 %v6285, %v6286
        %v6288 = vrot.slane %v6287, 2
        %v6289 = vmax.f32 %v6287, %v6288
        %v6290 = vrot.slane %v6289, 1
        %v6291 = vmax.f32 %v6289, %v6290
        %v6292 = vsel %vm5843, %v5450, -inf
        %v6293 = vrot.slane %v6292, 4
        %v6294 = vmax.f32 %v6292, %v6293
        %v6295 = vrot.slane %v6294, 2
        %v6296 = vmax.f32 %v6294, %v6295
        %v6297 = vrot.slane %v6296, 1
        %v6298 = vmax.f32 %v6296, %v6297
        %v6299 = vsel %vm5843, %v5458, -inf
        %v6300 = vrot.slane %v6299, 4
        %v6301 = vmax.f32 %v6299, %v6300
        %v6302 = vrot.slane %v6301, 2
        %v6303 = vmax.f32 %v6301, %v6302
        %v6304 = vrot.slane %v6303, 1
        %v6305 = vmax.f32 %v6303, %v6304
        %v6306 = vsel %vm5843, %v5457, -inf
        %v6307 = vrot.slane %v6306, 4
        %v6308 = vmax.f32 %v6306, %v6307
        %v6309 = vrot.slane %v6308, 2
        %v6310 = vmax.f32 %v6308, %v6309
        %v6311 = vrot.slane %v6310, 1
        %v6312 = vmax.f32 %v6310, %v6311
        %v6313 = vsel %vm5843, %v5459, -inf
        %v6314 = vrot.slane %v6313, 4
        %v6315 = vmax.f32 %v6313, %v6314
        %v6316 = vrot.slane %v6315, 2
        %v6317 = vmax.f32 %v6315, %v6316
        %v6318 = vrot.slane %v6317, 1
        %v6319 = vmax.f32 %v6317, %v6318
        %v6320 = vsel %vm5843, %v5467, -inf
        %v6321 = vrot.slane %v6320, 4
        %v6322 = vmax.f32 %v6320, %v6321
        %v6323 = vrot.slane %v6322, 2
        %v6324 = vmax.f32 %v6322, %v6323
        %v6325 = vrot.slane %v6324, 1
        %v6326 = vmax.f32 %v6324, %v6325
        %v6327 = vsel %vm5843, %v5475, -inf
        %v6328 = vrot.slane %v6327, 4
        %v6329 = vmax.f32 %v6327, %v6328
        %v6330 = vrot.slane %v6329, 2
        %v6331 = vmax.f32 %v6329, %v6330
        %v6332 = vrot.slane %v6331, 1
        %v6333 = vmax.f32 %v6331, %v6332
        %v6334 = vsel %vm5843, %v5474, -inf
        %v6335 = vrot.slane %v6334, 4
        %v6336 = vmax.f32 %v6334, %v6335
        %v6337 = vrot.slane %v6336, 2
        %v6338 = vmax.f32 %v6336, %v6337
        %v6339 = vrot.slane %v6338, 1
        %v6340 = vmax.f32 %v6338, %v6339
        %v6341 = vsel %vm5843, %v5476, -inf
        %v6342 = vrot.slane %v6341, 4
        %v6343 = vmax.f32 %v6341, %v6342
        %v6344 = vrot.slane %v6343, 2
        %v6345 = vmax.f32 %v6343, %v6344
        %v6346 = vrot.slane %v6345, 1
        %v6347 = vmax.f32 %v6345, %v6346
        %v6348 = vsel %vm5843, %v5484, -inf
        %v6349 = vrot.slane %v6348, 4
        %v6350 = vmax.f32 %v6348, %v6349
        %v6351 = vrot.slane %v6350, 2
        %v6352 = vmax.f32 %v6350, %v6351
        %v6353 = vrot.slane %v6352, 1
        %v6354 = vmax.f32 %v6352, %v6353
        %v6355 = vsel %vm5843, %v5492, -inf
        %v6356 = vrot.slane %v6355, 4
        %v6357 = vmax.f32 %v6355, %v6356
        %v6358 = vrot.slane %v6357, 2
        %v6359 = vmax.f32 %v6357, %v6358
        %v6360 = vrot.slane %v6359, 1
        %v6361 = vmax.f32 %v6359, %v6360
        %v6362 = vsel %vm5843, %v5491, -inf
        %v6363 = vrot.slane %v6362, 4
        %v6364 = vmax.f32 %v6362, %v6363
        %v6365 = vrot.slane %v6364, 2
        %v6366 = vmax.f32 %v6364, %v6365
        %v6367 = vrot.slane %v6366, 1
        %v6368 = vmax.f32 %v6366, %v6367
        %v6369 = vsel %vm5843, %v5493, -inf
        %v6370 = vrot.slane %v6369, 4
        %v6371 = vmax.f32 %v6369, %v6370
        %v6372 = vrot.slane %v6371, 2
        %v6373 = vmax.f32 %v6371, %v6372
        %v6374 = vrot.slane %v6373, 1
        %v6375 = vmax.f32 %v6373, %v6374
        %v6376 = vsel %vm5843, %v5501, -inf
        %v6377 = vrot.slane %v6376, 4
        %v6378 = vmax.f32 %v6376, %v6377
        %v6379 = vrot.slane %v6378, 2
        %v6380 = vmax.f32 %v6378, %v6379
        %v6381 = vrot.slane %v6380, 1
        %v6382 = vmax.f32 %v6380, %v6381
        %v6383 = vsel %vm5843, %v5509, -inf
        %v6384 = vrot.slane %v6383, 4
        %v6385 = vmax.f32 %v6383, %v6384
        %v6386 = vrot.slane %v6385, 2
        %v6387 = vmax.f32 %v6385, %v6386
        %v6388 = vrot.slane %v6387, 1
        %v6389 = vmax.f32 %v6387, %v6388
        %v6390 = vsel %vm5843, %v5508, -inf
        %v6391 = vrot.slane %v6390, 4
        %v6392 = vmax.f32 %v6390, %v6391
        %v6393 = vrot.slane %v6392, 2
        %v6394 = vmax.f32 %v6392, %v6393
        %v6395 = vrot.slane %v6394, 1
        %v6396 = vmax.f32 %v6394, %v6395
        %v6397 = vsel %vm5843, %v5510, -inf
        %v6398 = vrot.slane %v6397, 4
        %v6399 = vmax.f32 %v6397, %v6398
        %v6400 = vrot.slane %v6399, 2
        %v6401 = vmax.f32 %v6399, %v6400
        %v6402 = vrot.slane %v6401, 1
        %v6403 = vmax.f32 %v6401, %v6402
        %v6404 = vsel %vm5843, %v5518, -inf
        %v6405 = vrot.slane %v6404, 4
        %v6406 = vmax.f32 %v6404, %v6405
        %v6407 = vrot.slane %v6406, 2
        %v6408 = vmax.f32 %v6406, %v6407
        %v6409 = vrot.slane %v6408, 1
        %v6410 = vmax.f32 %v6408, %v6409
        %v6411 = vsel %vm5843, %v5526, -inf
        %v6412 = vrot.slane %v6411, 4
        %v6413 = vmax.f32 %v6411, %v6412
        %v6414 = vrot.slane %v6413, 2
        %v6415 = vmax.f32 %v6413, %v6414
        %v6416 = vrot.slane %v6415, 1
        %v6417 = vmax.f32 %v6415, %v6416
        %v6418 = vsel %vm5843, %v5525, -inf
        %v6419 = vrot.slane %v6418, 4
        %v6420 = vmax.f32 %v6418, %v6419
        %v6421 = vrot.slane %v6420, 2
        %v6422 = vmax.f32 %v6420, %v6421
        %v6423 = vrot.slane %v6422, 1
        %v6424 = vmax.f32 %v6422, %v6423
        %v6425 = vsel %vm5843, %v5527, -inf
        %v6426 = vrot.slane %v6425, 4
        %v6427 = vmax.f32 %v6425, %v6426
        %v6428 = vrot.slane %v6427, 2
        %v6429 = vmax.f32 %v6427, %v6428
        %v6430 = vrot.slane %v6429, 1
        %v6431 = vmax.f32 %v6429, %v6430
        %v6432 = vsel %vm5843, %v5535, -inf
        %v6433 = vrot.slane %v6432, 4
        %v6434 = vmax.f32 %v6432, %v6433
        %v6435 = vrot.slane %v6434, 2
        %v6436 = vmax.f32 %v6434, %v6435
        %v6437 = vrot.slane %v6436, 1
        %v6438 = vmax.f32 %v6436, %v6437
        %v6439 = vsel %vm5843, %v5543, -inf
        %v6440 = vrot.slane %v6439, 4
        %v6441 = vmax.f32 %v6439, %v6440
        %v6442 = vrot.slane %v6441, 2
        %v6443 = vmax.f32 %v6441, %v6442
        %v6444 = vrot.slane %v6443, 1
        %v6445 = vmax.f32 %v6443, %v6444
        %v6446 = vsel %vm5843, %v5542, -inf
        %v6447 = vrot.slane %v6446, 4
        %v6448 = vmax.f32 %v6446, %v6447
        %v6449 = vrot.slane %v6448, 2
        %v6450 = vmax.f32 %v6448, %v6449
        %v6451 = vrot.slane %v6450, 1
        %v6452 = vmax.f32 %v6450, %v6451
        %v6453 = vsel %vm5843, %v5544, -inf
        %v6454 = vrot.slane %v6453, 4
        %v6455 = vmax.f32 %v6453, %v6454
        %v6456 = vrot.slane %v6455, 2
        %v6457 = vmax.f32 %v6455, %v6456
        %v6458 = vrot.slane %v6457, 1
        %v6459 = vmax.f32 %v6457, %v6458
        %v6460 = vsel %vm5843, %v5552, -inf
        %v6461 = vrot.slane %v6460, 4
        %v6462 = vmax.f32 %v6460, %v6461
        %v6463 = vrot.slane %v6462, 2
        %v6464 = vmax.f32 %v6462, %v6463
        %v6465 = vrot.slane %v6464, 1
        %v6466 = vmax.f32 %v6464, %v6465
        %v6467 = vsel %vm5843, %v5560, -inf
        %v6468 = vrot.slane %v6467, 4
        %v6469 = vmax.f32 %v6467, %v6468
        %v6470 = vrot.slane %v6469, 2
        %v6471 = vmax.f32 %v6469, %v6470
        %v6472 = vrot.slane %v6471, 1
        %v6473 = vmax.f32 %v6471, %v6472
        %v6474 = vsel %vm5843, %v5559, -inf
        %v6475 = vrot.slane %v6474, 4
        %v6476 = vmax.f32 %v6474, %v6475
        %v6477 = vrot.slane %v6476, 2
        %v6478 = vmax.f32 %v6476, %v6477
        %v6479 = vrot.slane %v6478, 1
        %v6480 = vmax.f32 %v6478, %v6479
        %v6481 = vsel %vm5843, %v5561, -inf
        %v6482 = vrot.slane %v6481, 4
        %v6483 = vmax.f32 %v6481, %v6482
        %v6484 = vrot.slane %v6483, 2
        %v6485 = vmax.f32 %v6483, %v6484
        %v6486 = vrot.slane %v6485, 1
        %v6487 = vmax.f32 %v6485, %v6486
        %v6488 = vsel %vm5843, %v5569, -inf
        %v6489 = vrot.slane %v6488, 4
        %v6490 = vmax.f32 %v6488, %v6489
        %v6491 = vrot.slane %v6490, 2
        %v6492 = vmax.f32 %v6490, %v6491
        %v6493 = vrot.slane %v6492, 1
        %v6494 = vmax.f32 %v6492, %v6493
        %v6495 = vsel %vm5843, %v5577, -inf
        %v6496 = vrot.slane %v6495, 4
        %v6497 = vmax.f32 %v6495, %v6496
        %v6498 = vrot.slane %v6497, 2
        %v6499 = vmax.f32 %v6497, %v6498
        %v6500 = vrot.slane %v6499, 1
        %v6501 = vmax.f32 %v6499, %v6500
        %v6502 = vsel %vm5843, %v5576, -inf
        %v6503 = vrot.slane %v6502, 4
        %v6504 = vmax.f32 %v6502, %v6503
        %v6505 = vrot.slane %v6504, 2
        %v6506 = vmax.f32 %v6504, %v6505
        %v6507 = vrot.slane %v6506, 1
        %v6508 = vmax.f32 %v6506, %v6507
        %v6509 = vsel %vm5843, %v5578, -inf
        %v6510 = vrot.slane %v6509, 4
        %v6511 = vmax.f32 %v6509, %v6510
        %v6512 = vrot.slane %v6511, 2
        %v6513 = vmax.f32 %v6511, %v6512
        %v6514 = vrot.slane %v6513, 1
        %v6515 = vmax.f32 %v6513, %v6514
        %v6516 = vsel %vm5843, %v5586, -inf
        %v6517 = vrot.slane %v6516, 4
        %v6518 = vmax.f32 %v6516, %v6517
        %v6519 = vrot.slane %v6518, 2
        %v6520 = vmax.f32 %v6518, %v6519
        %v6521 = vrot.slane %v6520, 1
        %v6522 = vmax.f32 %v6520, %v6521
        %v6523 = vsel %vm5843, %v5594, -inf
        %v6524 = vrot.slane %v6523, 4
        %v6525 = vmax.f32 %v6523, %v6524
        %v6526 = vrot.slane %v6525, 2
        %v6527 = vmax.f32 %v6525, %v6526
        %v6528 = vrot.slane %v6527, 1
        %v6529 = vmax.f32 %v6527, %v6528
        %v6530 = vsel %vm5843, %v5593, -inf
        %v6531 = vrot.slane %v6530, 4
        %v6532 = vmax.f32 %v6530, %v6531
        %v6533 = vrot.slane %v6532, 2
        %v6534 = vmax.f32 %v6532, %v6533
        %v6535 = vrot.slane %v6534, 1
        %v6536 = vmax.f32 %v6534, %v6535
        %v6537 = vsel %vm5843, %v5595, -inf
        %v6538 = vrot.slane %v6537, 4
        %v6539 = vmax.f32 %v6537, %v6538
        %v6540 = vrot.slane %v6539, 2
        %v6541 = vmax.f32 %v6539, %v6540
        %v6542 = vrot.slane %v6541, 1
        %v6543 = vmax.f32 %v6541, %v6542
        %v6544 = vsel %vm5843, %v5603, -inf
        %v6545 = vrot.slane %v6544, 4
        %v6546 = vmax.f32 %v6544, %v6545
        %v6547 = vrot.slane %v6546, 2
        %v6548 = vmax.f32 %v6546, %v6547
        %v6549 = vrot.slane %v6548, 1
        %v6550 = vmax.f32 %v6548, %v6549
        %v6551 = vsel %vm5843, %v5611, -inf
        %v6552 = vrot.slane %v6551, 4
        %v6553 = vmax.f32 %v6551, %v6552
        %v6554 = vrot.slane %v6553, 2
        %v6555 = vmax.f32 %v6553, %v6554
        %v6556 = vrot.slane %v6555, 1
        %v6557 = vmax.f32 %v6555, %v6556
        %v6558 = vsel %vm5843, %v5610, -inf
        %v6559 = vrot.slane %v6558, 4
        %v6560 = vmax.f32 %v6558, %v6559
        %v6561 = vrot.slane %v6560, 2
        %v6562 = vmax.f32 %v6560, %v6561
        %v6563 = vrot.slane %v6562, 1
        %v6564 = vmax.f32 %v6562, %v6563
        %v6565 = vsel %vm5843, %v5612, -inf
        %v6566 = vrot.slane %v6565, 4
        %v6567 = vmax.f32 %v6565, %v6566
        %v6568 = vrot.slane %v6567, 2
        %v6569 = vmax.f32 %v6567, %v6568
        %v6570 = vrot.slane %v6569, 1
        %v6571 = vmax.f32 %v6569, %v6570
        %v6572 = vsel %vm5843, %v5620, -inf
        %v6573 = vrot.slane %v6572, 4
        %v6574 = vmax.f32 %v6572, %v6573
        %v6575 = vrot.slane %v6574, 2
        %v6576 = vmax.f32 %v6574, %v6575
        %v6577 = vrot.slane %v6576, 1
        %v6578 = vmax.f32 %v6576, %v6577
        %v6579 = vsel %vm5843, %v5628, -inf
        %v6580 = vrot.slane %v6579, 4
        %v6581 = vmax.f32 %v6579, %v6580
        %v6582 = vrot.slane %v6581, 2
        %v6583 = vmax.f32 %v6581, %v6582
        %v6584 = vrot.slane %v6583, 1
        %v6585 = vmax.f32 %v6583, %v6584
        %v6586 = vsel %vm5843, %v5627, -inf
        %v6587 = vrot.slane %v6586, 4
        %v6588 = vmax.f32 %v6586, %v6587
        %v6589 = vrot.slane %v6588, 2
        %v6590 = vmax.f32 %v6588, %v6589
        %v6591 = vrot.slane %v6590, 1
        %v6592 = vmax.f32 %v6590, %v6591
        %v6593 = vsel %vm5843, %v5629, -inf
        %v6594 = vrot.slane %v6593, 4
        %v6595 = vmax.f32 %v6593, %v6594
        %v6596 = vrot.slane %v6595, 2
        %v6597 = vmax.f32 %v6595, %v6596
        %v6598 = vrot.slane %v6597, 1
        %v6599 = vmax.f32 %v6597, %v6598
        %v6600 = vsel %vm5843, %v5637, -inf
        %v6601 = vrot.slane %v6600, 4
        %v6602 = vmax.f32 %v6600, %v6601
        %v6603 = vrot.slane %v6602, 2
        %v6604 = vmax.f32 %v6602, %v6603
        %v6605 = vrot.slane %v6604, 1
        %v6606 = vmax.f32 %v6604, %v6605
        %v6607 = vsel %vm5843, %v5645, -inf
        %v6608 = vrot.slane %v6607, 4
        %v6609 = vmax.f32 %v6607, %v6608
        %v6610 = vrot.slane %v6609, 2
        %v6611 = vmax.f32 %v6609, %v6610
        %v6612 = vrot.slane %v6611, 1
        %v6613 = vmax.f32 %v6611, %v6612
        %v6614 = vsel %vm5843, %v5644, -inf
        %v6615 = vrot.slane %v6614, 4
        %v6616 = vmax.f32 %v6614, %v6615
        %v6617 = vrot.slane %v6616, 2
        %v6618 = vmax.f32 %v6616, %v6617
        %v6619 = vrot.slane %v6618, 1
        %v6620 = vmax.f32 %v6618, %v6619
        %v6621 = vsel %vm5843, %v5646, -inf
        %v6622 = vrot.slane %v6621, 4
        %v6623 = vmax.f32 %v6621, %v6622
        %v6624 = vrot.slane %v6623, 2
        %v6625 = vmax.f32 %v6623, %v6624
        %v6626 = vrot.slane %v6625, 1
        %v6627 = vmax.f32 %v6625, %v6626
        %v6628 = vsel %vm5843, %v5654, -inf
        %v6629 = vrot.slane %v6628, 4
        %v6630 = vmax.f32 %v6628, %v6629
        %v6631 = vrot.slane %v6630, 2
        %v6632 = vmax.f32 %v6630, %v6631
        %v6633 = vrot.slane %v6632, 1
        %v6634 = vmax.f32 %v6632, %v6633
        %v6635 = vsel %vm5843, %v5662, -inf
        %v6636 = vrot.slane %v6635, 4
        %v6637 = vmax.f32 %v6635, %v6636
        %v6638 = vrot.slane %v6637, 2
        %v6639 = vmax.f32 %v6637, %v6638
        %v6640 = vrot.slane %v6639, 1
        %v6641 = vmax.f32 %v6639, %v6640
        %v6642 = vsel %vm5843, %v5661, -inf
        %v6643 = vrot.slane %v6642, 4
        %v6644 = vmax.f32 %v6642, %v6643
        %v6645 = vrot.slane %v6644, 2
        %v6646 = vmax.f32 %v6644, %v6645
        %v6647 = vrot.slane %v6646, 1
        %v6648 = vmax.f32 %v6646, %v6647
        %v6649 = vsel %vm5843, %v5663, -inf
        %v6650 = vrot.slane %v6649, 4
        %v6651 = vmax.f32 %v6649, %v6650
        %v6652 = vrot.slane %v6651, 2
        %v6653 = vmax.f32 %v6651, %v6652
        %v6654 = vrot.slane %v6653, 1
        %v6655 = vmax.f32 %v6653, %v6654
        %v6656 = vsel %vm5843, %v5671, -inf
        %v6657 = vrot.slane %v6656, 4
        %v6658 = vmax.f32 %v6656, %v6657
        %v6659 = vrot.slane %v6658, 2
        %v6660 = vmax.f32 %v6658, %v6659
        %v6661 = vrot.slane %v6660, 1
        %v6662 = vmax.f32 %v6660, %v6661
        %v6663 = vsel %vm5843, %v5679, -inf
        %v6664 = vrot.slane %v6663, 4
        %v6665 = vmax.f32 %v6663, %v6664
        %v6666 = vrot.slane %v6665, 2
        %v6667 = vmax.f32 %v6665, %v6666
        %v6668 = vrot.slane %v6667, 1
        %v6669 = vmax.f32 %v6667, %v6668
        %v6670 = vsel %vm5843, %v5678, -inf
        %v6671 = vrot.slane %v6670, 4
        %v6672 = vmax.f32 %v6670, %v6671
        %v6673 = vrot.slane %v6672, 2
        %v6674 = vmax.f32 %v6672, %v6673
        %v6675 = vrot.slane %v6674, 1
        %v6676 = vmax.f32 %v6674, %v6675
        %v6677 = vsel %vm5843, %v5680, -inf
        %v6678 = vrot.slane %v6677, 4
        %v6679 = vmax.f32 %v6677, %v6678
        %v6680 = vrot.slane %v6679, 2
        %v6681 = vmax.f32 %v6679, %v6680
        %v6682 = vrot.slane %v6681, 1
        %v6683 = vmax.f32 %v6681, %v6682
        %v6684 = vsel %vm5843, %v5688, -inf
        %v6685 = vrot.slane %v6684, 4
        %v6686 = vmax.f32 %v6684, %v6685
        %v6687 = vrot.slane %v6686, 2
        %v6688 = vmax.f32 %v6686, %v6687
        %v6689 = vrot.slane %v6688, 1
        %v6690 = vmax.f32 %v6688, %v6689
        %v6691 = vsel %vm5843, %v5696, -inf
        %v6692 = vrot.slane %v6691, 4
        %v6693 = vmax.f32 %v6691, %v6692
        %v6694 = vrot.slane %v6693, 2
        %v6695 = vmax.f32 %v6693, %v6694
        %v6696 = vrot.slane %v6695, 1
        %v6697 = vmax.f32 %v6695, %v6696
        %v6698 = vsel %vm5843, %v5695, -inf
        %v6699 = vrot.slane %v6698, 4
        %v6700 = vmax.f32 %v6698, %v6699
        %v6701 = vrot.slane %v6700, 2
        %v6702 = vmax.f32 %v6700, %v6701
        %v6703 = vrot.slane %v6702, 1
        %v6704 = vmax.f32 %v6702, %v6703
        %v6705 = vsel %vm5843, %v5697, -inf
        %v6706 = vrot.slane %v6705, 4
        %v6707 = vmax.f32 %v6705, %v6706
        %v6708 = vrot.slane %v6707, 2
        %v6709 = vmax.f32 %v6707, %v6708
        %v6710 = vrot.slane %v6709, 1
        %v6711 = vmax.f32 %v6709, %v6710
        %v6712 = vsel %vm5843, %v5705, -inf
        %v6713 = vrot.slane %v6712, 4
        %v6714 = vmax.f32 %v6712, %v6713
        %v6715 = vrot.slane %v6714, 2
        %v6716 = vmax.f32 %v6714, %v6715
        %v6717 = vrot.slane %v6716, 1
        %v6718 = vmax.f32 %v6716, %v6717
        %v6719 = vsel %vm5843, %v5713, -inf
        %v6720 = vrot.slane %v6719, 4
        %v6721 = vmax.f32 %v6719, %v6720
        %v6722 = vrot.slane %v6721, 2
        %v6723 = vmax.f32 %v6721, %v6722
        %v6724 = vrot.slane %v6723, 1
        %v6725 = vmax.f32 %v6723, %v6724
        %v6726 = vsel %vm5843, %v5712, -inf
        %v6727 = vrot.slane %v6726, 4
        %v6728 = vmax.f32 %v6726, %v6727
        %v6729 = vrot.slane %v6728, 2
        %v6730 = vmax.f32 %v6728, %v6729
        %v6731 = vrot.slane %v6730, 1
        %v6732 = vmax.f32 %v6730, %v6731
        %v6733 = vsel %vm5843, %v5714, -inf
        %v6734 = vrot.slane %v6733, 4
        %v6735 = vmax.f32 %v6733, %v6734
        %v6736 = vrot.slane %v6735, 2
        %v6737 = vmax.f32 %v6735, %v6736
        %v6738 = vrot.slane %v6737, 1
        %v6739 = vmax.f32 %v6737, %v6738
        %v6740 = vmax.f32 %v5850, %v5906
        %v6741 = vmax.f32 %v5857, %v5913
        %v6742 = vmax.f32 %v5864, %v5920
        %v6743 = vmax.f32 %v5871, %v5927
        %v6744 = vmax.f32 %v5878, %v5934
        %v6745 = vmax.f32 %v5885, %v5941
        %v6746 = vmax.f32 %v5892, %v5948
        %v6747 = vmax.f32 %v5899, %v5955
        %v6748 = vmax.f32 %v5962, %v6018
        %v6749 = vmax.f32 %v5969, %v6025
        %v6750 = vmax.f32 %v5976, %v6032
        %v6751 = vmax.f32 %v5983, %v6039
        %v6752 = vmax.f32 %v5990, %v6046
        %v6753 = vmax.f32 %v5997, %v6053
        %v6754 = vmax.f32 %v6004, %v6060
        %v6755 = vmax.f32 %v6011, %v6067
        %v6756 = vmax.f32 %v6074, %v6130
        %v6757 = vmax.f32 %v6081, %v6137
        %v6758 = vmax.f32 %v6088, %v6144
        %v6759 = vmax.f32 %v6095, %v6151
        %v6760 = vmax.f32 %v6102, %v6158
        %v6761 = vmax.f32 %v6109, %v6165
        %v6762 = vmax.f32 %v6116, %v6172
        %v6763 = vmax.f32 %v6123, %v6179
        %v6764 = vmax.f32 %v6186, %v6242
        %v6765 = vmax.f32 %v6193, %v6249
        %v6766 = vmax.f32 %v6200, %v6256
        %v6767 = vmax.f32 %v6207, %v6263
        %v6768 = vmax.f32 %v6214, %v6270
        %v6769 = vmax.f32 %v6221, %v6277
        %v6770 = vmax.f32 %v6228, %v6284
        %v6771 = vmax.f32 %v6235, %v6291
        %v6772 = vmax.f32 %v6298, %v6354
        %v6773 = vmax.f32 %v6305, %v6361
        %v6774 = vmax.f32 %v6312, %v6368
        %v6775 = vmax.f32 %v6319, %v6375
        %v6776 = vmax.f32 %v6326, %v6382
        %v6777 = vmax.f32 %v6333, %v6389
        %v6778 = vmax.f32 %v6340, %v6396
        %v6779 = vmax.f32 %v6347, %v6403
        %v6780 = vmax.f32 %v6410, %v6466
        %v6781 = vmax.f32 %v6417, %v6473
        %v6782 = vmax.f32 %v6424, %v6480
        %v6783 = vmax.f32 %v6431, %v6487
        %v6784 = vmax.f32 %v6438, %v6494
        %v6785 = vmax.f32 %v6445, %v6501
        %v6786 = vmax.f32 %v6452, %v6508
        %v6787 = vmax.f32 %v6459, %v6515
        %v6788 = vmax.f32 %v6522, %v6578
        %v6789 = vmax.f32 %v6529, %v6585
        %v6790 = vmax.f32 %v6536, %v6592
        %v6791 = vmax.f32 %v6543, %v6599
        %v6792 = vmax.f32 %v6550, %v6606
        %v6793 = vmax.f32 %v6557, %v6613
        %v6794 = vmax.f32 %v6564, %v6620
        %v6795 = vmax.f32 %v6571, %v6627
        %v6796 = vmax.f32 %v6634, %v6690
        %v6797 = vmax.f32 %v6641, %v6697
        %v6798 = vmax.f32 %v6648, %v6704
        %v6799 = vmax.f32 %v6655, %v6711
        %v6800 = vmax.f32 %v6662, %v6718
        %v6801 = vmax.f32 %v6669, %v6725
        %v6802 = vmax.f32 %v6676, %v6732
        %v6803 = vmax.f32 %v6683, %v6739
        %v6804 = vpack.c.bf16 %v6740, %v6740
        %v6805 = vpack.c.bf16 %v6741, %v6741
        %v6806 = vpack.c.bf16 %v6742, %v6742
        %v6807 = vpack.c.bf16 %v6743, %v6743
        %v6808 = vpack.c.bf16 %v6744, %v6744
        %v6809 = vpack.c.bf16 %v6745, %v6745
        %v6810 = vpack.c.bf16 %v6746, %v6746
        %v6811 = vpack.c.bf16 %v6747, %v6747
        %v6812 = vpack.c.bf16 %v6748, %v6748
        %v6813 = vpack.c.bf16 %v6749, %v6749
        %v6814 = vpack.c.bf16 %v6750, %v6750
        %v6815 = vpack.c.bf16 %v6751, %v6751
        %v6816 = vpack.c.bf16 %v6752, %v6752
        %v6817 = vpack.c.bf16 %v6753, %v6753
        %v6818 = vpack.c.bf16 %v6754, %v6754
        %v6819 = vpack.c.bf16 %v6755, %v6755
        %v6820 = vpack.c.bf16 %v6756, %v6756
        %v6821 = vpack.c.bf16 %v6757, %v6757
        %v6822 = vpack.c.bf16 %v6758, %v6758
        %v6823 = vpack.c.bf16 %v6759, %v6759
        %v6824 = vpack.c.bf16 %v6760, %v6760
        %v6825 = vpack.c.bf16 %v6761, %v6761
        %v6826 = vpack.c.bf16 %v6762, %v6762
        %v6827 = vpack.c.bf16 %v6763, %v6763
        %v6828 = vpack.c.bf16 %v6764, %v6764
        %v6829 = vpack.c.bf16 %v6765, %v6765
        %v6830 = vpack.c.bf16 %v6766, %v6766
        %v6831 = vpack.c.bf16 %v6767, %v6767
        %v6832 = vpack.c.bf16 %v6768, %v6768
        %v6833 = vpack.c.bf16 %v6769, %v6769
        %v6834 = vpack.c.bf16 %v6770, %v6770
        %v6835 = vpack.c.bf16 %v6771, %v6771
        %v6836 = vpack.c.bf16 %v6772, %v6772
        %v6837 = vpack.c.bf16 %v6773, %v6773
        %v6838 = vpack.c.bf16 %v6774, %v6774
        %v6839 = vpack.c.bf16 %v6775, %v6775
        %v6840 = vpack.c.bf16 %v6776, %v6776
        %v6841 = vpack.c.bf16 %v6777, %v6777
        %v6842 = vpack.c.bf16 %v6778, %v6778
        %v6843 = vpack.c.bf16 %v6779, %v6779
        %v6844 = vpack.c.bf16 %v6780, %v6780
        %v6845 = vpack.c.bf16 %v6781, %v6781
        %v6846 = vpack.c.bf16 %v6782, %v6782
        %v6847 = vpack.c.bf16 %v6783, %v6783
        %v6848 = vpack.c.bf16 %v6784, %v6784
        %v6849 = vpack.c.bf16 %v6785, %v6785
        %v6850 = vpack.c.bf16 %v6786, %v6786
        %v6851 = vpack.c.bf16 %v6787, %v6787
        %v6852 = vpack.c.bf16 %v6788, %v6788
        %v6853 = vpack.c.bf16 %v6789, %v6789
        %v6854 = vpack.c.bf16 %v6790, %v6790
        %v6855 = vpack.c.bf16 %v6791, %v6791
        %v6856 = vpack.c.bf16 %v6792, %v6792
        %v6857 = vpack.c.bf16 %v6793, %v6793
        %v6858 = vpack.c.bf16 %v6794, %v6794
        %v6859 = vpack.c.bf16 %v6795, %v6795
        %v6860 = vpack.c.bf16 %v6796, %v6796
        %v6861 = vpack.c.bf16 %v6797, %v6797
        %v6862 = vpack.c.bf16 %v6798, %v6798
        %v6863 = vpack.c.bf16 %v6799, %v6799
        %v6864 = vpack.c.bf16 %v6800, %v6800
        %v6865 = vpack.c.bf16 %v6801, %v6801
        %v6866 = vpack.c.bf16 %v6802, %v6802
        %v6867 = vpack.c.bf16 %v6803, %v6803
        %v6932 = vunpack.c.l.b16 %v6804
        %v6933 = vunpack.c.l.b16 %v6805
        %v6934 = vunpack.c.l.b16 %v6806
        %v6935 = vunpack.c.l.b16 %v6807
        %v6936 = vunpack.c.l.b16 %v6808
        %v6937 = vunpack.c.l.b16 %v6809
        %v6938 = vunpack.c.l.b16 %v6810
        %v6939 = vunpack.c.l.b16 %v6811
        %v6940 = vunpack.c.l.b16 %v6812
        %v6941 = vunpack.c.l.b16 %v6813
        %v6942 = vunpack.c.l.b16 %v6814
        %v6943 = vunpack.c.l.b16 %v6815
        %v6944 = vunpack.c.l.b16 %v6816
        %v6945 = vunpack.c.l.b16 %v6817
        %v6946 = vunpack.c.l.b16 %v6818
        %v6947 = vunpack.c.l.b16 %v6819
        %v6948 = vunpack.c.l.b16 %v6820
        %v6949 = vunpack.c.l.b16 %v6821
        %v6950 = vunpack.c.l.b16 %v6822
        %v6951 = vunpack.c.l.b16 %v6823
        %v6952 = vunpack.c.l.b16 %v6824
        %v6953 = vunpack.c.l.b16 %v6825
        %v6954 = vunpack.c.l.b16 %v6826
        %v6955 = vunpack.c.l.b16 %v6827
        %v6956 = vunpack.c.l.b16 %v6828
        %v6957 = vunpack.c.l.b16 %v6829
        %v6958 = vunpack.c.l.b16 %v6830
        %v6959 = vunpack.c.l.b16 %v6831
        %v6960 = vunpack.c.l.b16 %v6832
        %v6961 = vunpack.c.l.b16 %v6833
        %v6962 = vunpack.c.l.b16 %v6834
        %v6963 = vunpack.c.l.b16 %v6835
        %v6964 = vunpack.c.l.b16 %v6836
        %v6965 = vunpack.c.l.b16 %v6837
        %v6966 = vunpack.c.l.b16 %v6838
        %v6967 = vunpack.c.l.b16 %v6839
        %v6968 = vunpack.c.l.b16 %v6840
        %v6969 = vunpack.c.l.b16 %v6841
        %v6970 = vunpack.c.l.b16 %v6842
        %v6971 = vunpack.c.l.b16 %v6843
        %v6972 = vunpack.c.l.b16 %v6844
        %v6973 = vunpack.c.l.b16 %v6845
        %v6974 = vunpack.c.l.b16 %v6846
        %v6975 = vunpack.c.l.b16 %v6847
        %v6976 = vunpack.c.l.b16 %v6848
        %v6977 = vunpack.c.l.b16 %v6849
        %v6978 = vunpack.c.l.b16 %v6850
        %v6979 = vunpack.c.l.b16 %v6851
        %v6980 = vunpack.c.l.b16 %v6852
        %v6981 = vunpack.c.l.b16 %v6853
        %v6982 = vunpack.c.l.b16 %v6854
        %v6983 = vunpack.c.l.b16 %v6855
        %v6984 = vunpack.c.l.b16 %v6856
        %v6985 = vunpack.c.l.b16 %v6857
        %v6986 = vunpack.c.l.b16 %v6858
        %v6987 = vunpack.c.l.b16 %v6859
        %v6988 = vunpack.c.l.b16 %v6860
        %v6989 = vunpack.c.l.b16 %v6861
        %v6990 = vunpack.c.l.b16 %v6862
        %v6991 = vunpack.c.l.b16 %v6863
        %v6992 = vunpack.c.l.b16 %v6864
        %v6993 = vunpack.c.l.b16 %v6865
        %v6994 = vunpack.c.l.b16 %v6866
        %v6995 = vunpack.c.l.b16 %v6867
        %v6996 = vpack.c.b16 %v6932, %v6932
        %v6997 = vpack.c.b16 %v6933, %v6933
        %v6998 = vpack.c.b16 %v6934, %v6934
        %v6999 = vpack.c.b16 %v6935, %v6935
        %v7000 = vpack.c.b16 %v6936, %v6936
        %v7001 = vpack.c.b16 %v6937, %v6937
        %v7002 = vpack.c.b16 %v6938, %v6938
        %v7003 = vpack.c.b16 %v6939, %v6939
        %v7004 = vpack.c.b16 %v6940, %v6940
        %v7005 = vpack.c.b16 %v6941, %v6941
        %v7006 = vpack.c.b16 %v6942, %v6942
        %v7007 = vpack.c.b16 %v6943, %v6943
        %v7008 = vpack.c.b16 %v6944, %v6944
        %v7009 = vpack.c.b16 %v6945, %v6945
        %v7010 = vpack.c.b16 %v6946, %v6946
        %v7011 = vpack.c.b16 %v6947, %v6947
        %v7012 = vpack.c.b16 %v6948, %v6948
        %v7013 = vpack.c.b16 %v6949, %v6949
        %v7014 = vpack.c.b16 %v6950, %v6950
        %v7015 = vpack.c.b16 %v6951, %v6951
        %v7016 = vpack.c.b16 %v6952, %v6952
        %v7017 = vpack.c.b16 %v6953, %v6953
        %v7018 = vpack.c.b16 %v6954, %v6954
        %v7019 = vpack.c.b16 %v6955, %v6955
        %v7020 = vpack.c.b16 %v6956, %v6956
        %v7021 = vpack.c.b16 %v6957, %v6957
        %v7022 = vpack.c.b16 %v6958, %v6958
        %v7023 = vpack.c.b16 %v6959, %v6959
        %v7024 = vpack.c.b16 %v6960, %v6960
        %v7025 = vpack.c.b16 %v6961, %v6961
        %v7026 = vpack.c.b16 %v6962, %v6962
        %v7027 = vpack.c.b16 %v6963, %v6963
        %v7028 = vpack.c.b16 %v6964, %v6964
        %v7029 = vpack.c.b16 %v6965, %v6965
        %v7030 = vpack.c.b16 %v6966, %v6966
        %v7031 = vpack.c.b16 %v6967, %v6967
        %v7032 = vpack.c.b16 %v6968, %v6968
        %v7033 = vpack.c.b16 %v6969, %v6969
        %v7034 = vpack.c.b16 %v6970, %v6970
        %v7035 = vpack.c.b16 %v6971, %v6971
        %v7036 = vpack.c.b16 %v6972, %v6972
        %v7037 = vpack.c.b16 %v6973, %v6973
        %v7038 = vpack.c.b16 %v6974, %v6974
        %v7039 = vpack.c.b16 %v6975, %v6975
        %v7040 = vpack.c.b16 %v6976, %v6976
        %v7041 = vpack.c.b16 %v6977, %v6977
        %v7042 = vpack.c.b16 %v6978, %v6978
        %v7043 = vpack.c.b16 %v6979, %v6979
        %v7044 = vpack.c.b16 %v6980, %v6980
        %v7045 = vpack.c.b16 %v6981, %v6981
        %v7046 = vpack.c.b16 %v6982, %v6982
        %v7047 = vpack.c.b16 %v6983, %v6983
        %v7048 = vpack.c.b16 %v6984, %v6984
        %v7049 = vpack.c.b16 %v6985, %v6985
        %v7050 = vpack.c.b16 %v6986, %v6986
        %v7051 = vpack.c.b16 %v6987, %v6987
        %v7052 = vpack.c.b16 %v6988, %v6988
        %v7053 = vpack.c.b16 %v6989, %v6989
        %v7054 = vpack.c.b16 %v6990, %v6990
        %v7055 = vpack.c.b16 %v6991, %v6991
        %v7056 = vpack.c.b16 %v6992, %v6992
        %v7057 = vpack.c.b16 %v6993, %v6993
        %v7058 = vpack.c.b16 %v6994, %v6994
        %v7059 = vpack.c.b16 %v6995, %v6995
        %v7060 = vunpack.c.l.b16 %v6996
        %v7061 = vunpack.c.l.b16 %v6997
        %v7062 = vunpack.c.l.b16 %v6998
        %v7063 = vunpack.c.l.b16 %v6999
        %v7064 = vunpack.c.l.b16 %v7000
        %v7065 = vunpack.c.l.b16 %v7001
        %v7066 = vunpack.c.l.b16 %v7002
        %v7067 = vunpack.c.l.b16 %v7003
        %v7068 = vunpack.c.l.b16 %v7004
        %v7069 = vunpack.c.l.b16 %v7005
        %v7070 = vunpack.c.l.b16 %v7006
        %v7071 = vunpack.c.l.b16 %v7007
        %v7072 = vunpack.c.l.b16 %v7008
        %v7073 = vunpack.c.l.b16 %v7009
        %v7074 = vunpack.c.l.b16 %v7010
        %v7075 = vunpack.c.l.b16 %v7011
        %v7076 = vunpack.c.l.b16 %v7012
        %v7077 = vunpack.c.l.b16 %v7013
        %v7078 = vunpack.c.l.b16 %v7014
        %v7079 = vunpack.c.l.b16 %v7015
        %v7080 = vunpack.c.l.b16 %v7016
        %v7081 = vunpack.c.l.b16 %v7017
        %v7082 = vunpack.c.l.b16 %v7018
        %v7083 = vunpack.c.l.b16 %v7019
        %v7084 = vunpack.c.l.b16 %v7020
        %v7085 = vunpack.c.l.b16 %v7021
        %v7086 = vunpack.c.l.b16 %v7022
        %v7087 = vunpack.c.l.b16 %v7023
        %v7088 = vunpack.c.l.b16 %v7024
        %v7089 = vunpack.c.l.b16 %v7025
        %v7090 = vunpack.c.l.b16 %v7026
        %v7091 = vunpack.c.l.b16 %v7027
        %v7092 = vunpack.c.l.b16 %v7028
        %v7093 = vunpack.c.l.b16 %v7029
        %v7094 = vunpack.c.l.b16 %v7030
        %v7095 = vunpack.c.l.b16 %v7031
        %v7096 = vunpack.c.l.b16 %v7032
        %v7097 = vunpack.c.l.b16 %v7033
        %v7098 = vunpack.c.l.b16 %v7034
        %v7099 = vunpack.c.l.b16 %v7035
        %v7100 = vunpack.c.l.b16 %v7036
        %v7101 = vunpack.c.l.b16 %v7037
        %v7102 = vunpack.c.l.b16 %v7038
        %v7103 = vunpack.c.l.b16 %v7039
        %v7104 = vunpack.c.l.b16 %v7040
        %v7105 = vunpack.c.l.b16 %v7041
        %v7106 = vunpack.c.l.b16 %v7042
        %v7107 = vunpack.c.l.b16 %v7043
        %v7108 = vunpack.c.l.b16 %v7044
        %v7109 = vunpack.c.l.b16 %v7045
        %v7110 = vunpack.c.l.b16 %v7046
        %v7111 = vunpack.c.l.b16 %v7047
        %v7112 = vunpack.c.l.b16 %v7048
        %v7113 = vunpack.c.l.b16 %v7049
        %v7114 = vunpack.c.l.b16 %v7050
        %v7115 = vunpack.c.l.b16 %v7051
        %v7116 = vunpack.c.l.b16 %v7052
        %v7117 = vunpack.c.l.b16 %v7053
        %v7118 = vunpack.c.l.b16 %v7054
        %v7119 = vunpack.c.l.b16 %v7055
        %v7120 = vunpack.c.l.b16 %v7056
        %v7121 = vunpack.c.l.b16 %v7057
        %v7122 = vunpack.c.l.b16 %v7058
        %v7123 = vunpack.c.l.b16 %v7059
        %vm7124 = vcmask 1041409
        %v7125 = vsel %vm7124, %v7061, %v7060
        %vm7126 = vcmask 1042434
        %v7127 = vsel %vm7126, %v7062, %v7125
        %vm7128 = vcmask 1043459
        %v7129 = vsel %vm7128, %v7063, %v7127
        %vm7130 = vcmask 1044484
        %v7131 = vsel %vm7130, %v7064, %v7129
        %vm7132 = vcmask 1045509
        %v7133 = vsel %vm7132, %v7065, %v7131
        %vm7134 = vcmask 1046534
        %v7135 = vsel %vm7134, %v7066, %v7133
        %vm7136 = vcmask 1047559
        %v7137 = vsel %vm7136, %v7067, %v7135
        %v7138 = vsel %vm7124, %v7069, %v7068
        %v7139 = vsel %vm7126, %v7070, %v7138
        %v7140 = vsel %vm7128, %v7071, %v7139
        %v7141 = vsel %vm7130, %v7072, %v7140
        %v7142 = vsel %vm7132, %v7073, %v7141
        %v7143 = vsel %vm7134, %v7074, %v7142
        %v7144 = vsel %vm7136, %v7075, %v7143
        %v7145 = vsel %vm7124, %v7077, %v7076
        %v7146 = vsel %vm7126, %v7078, %v7145
        %v7147 = vsel %vm7128, %v7079, %v7146
        %v7148 = vsel %vm7130, %v7080, %v7147
        %v7149 = vsel %vm7132, %v7081, %v7148
        %v7150 = vsel %vm7134, %v7082, %v7149
        %v7151 = vsel %vm7136, %v7083, %v7150
        %v7152 = vsel %vm7124, %v7085, %v7084
        %v7153 = vsel %vm7126, %v7086, %v7152
        %v7154 = vsel %vm7128, %v7087, %v7153
        %v7155 = vsel %vm7130, %v7088, %v7154
        %v7156 = vsel %vm7132, %v7089, %v7155
        %v7157 = vsel %vm7134, %v7090, %v7156
        %v7158 = vsel %vm7136, %v7091, %v7157
        %v7159 = vsel %vm7124, %v7093, %v7092
        %v7160 = vsel %vm7126, %v7094, %v7159
        %v7161 = vsel %vm7128, %v7095, %v7160
        %v7162 = vsel %vm7130, %v7096, %v7161
        %v7163 = vsel %vm7132, %v7097, %v7162
        %v7164 = vsel %vm7134, %v7098, %v7163
        %v7165 = vsel %vm7136, %v7099, %v7164
        %v7166 = vsel %vm7124, %v7101, %v7100
        %v7167 = vsel %vm7126, %v7102, %v7166
        %v7168 = vsel %vm7128, %v7103, %v7167
        %v7169 = vsel %vm7130, %v7104, %v7168
        %v7170 = vsel %vm7132, %v7105, %v7169
        %v7171 = vsel %vm7134, %v7106, %v7170
        %v7172 = vsel %vm7136, %v7107, %v7171
        %v7173 = vsel %vm7124, %v7109, %v7108
        %v7174 = vsel %vm7126, %v7110, %v7173
        %v7175 = vsel %vm7128, %v7111, %v7174
        %v7176 = vsel %vm7130, %v7112, %v7175
        %v7177 = vsel %vm7132, %v7113, %v7176
        %v7178 = vsel %vm7134, %v7114, %v7177
        %v7179 = vsel %vm7136, %v7115, %v7178
        %v7180 = vsel %vm7124, %v7117, %v7116
        %v7181 = vsel %vm7126, %v7118, %v7180
        %v7182 = vsel %vm7128, %v7119, %v7181
        %v7183 = vsel %vm7130, %v7120, %v7182
        %v7184 = vsel %vm7132, %v7121, %v7183
        %v7185 = vsel %vm7134, %v7122, %v7184
        %v7186 = vsel %vm7136, %v7123, %v7185
        %v7187 = vpack.c.b16 %v7137, %v7137
        %v7188 = vpack.c.b16 %v7144, %v7144
        %v7189 = vpack.c.b16 %v7151, %v7151
        %v7190 = vpack.c.b16 %v7158, %v7158
        %v7191 = vpack.c.b16 %v7165, %v7165
        %v7192 = vpack.c.b16 %v7172, %v7172
        %v7193 = vpack.c.b16 %v7179, %v7179
        %v7194 = vpack.c.b16 %v7186, %v7186
        %7203 = vst [vmem:[%s203] sm:$0xf] %v7187
        %7204 = vst [vmem:[%s203 + $0x4] sm:$0xf] %v7188
        %7205 = vst [vmem:[%s203 + $0x8] sm:$0xf] %v7189
        %7206 = vst [vmem:[%s203 + $0xc] sm:$0xf] %v7190
        %7207 = vst [vmem:[%s203 + $0x10] sm:$0xf] %v7191
        %7208 = vst [vmem:[%s203 + $0x14] sm:$0xf] %v7192
        %7209 = vst [vmem:[%s203 + $0x18] sm:$0xf] %v7193
        %7210 = vst [vmem:[%s203 + $0x1c] sm:$0xf] %v7194
        %s7211 = sand.u32 %s97, 1
        %s7212 = scalar_lea.sflag [#allocation6], %s7211
        %s7213 = sand.u32 %s97, 1
        %s7214 = smul.addr %s7213, 32
        %s7215 = scalar_lea.vmem [#allocation9], %s7214
        // Predicated region
        $region45: #{tpu_custom_call.1} parent=31 // pred_check
          %p7216 = pneg %p107
        $region46: #{tpu_custom_call.1} parent=31 // pred_check_branch
          %7218 = sbr.rel (%p7216) target = $region48
        $region47: #{tpu_custom_call.1} parent=31 // pred_region
          %s7220 = ssub.s32 512, 512
          %7221 = vsyncadd %s7212, %s7220
          %s7222 = smul.addr %s21, 8
          %s7223 = smul.addr %s7222, 64
          %s7224 = scalar_lea.hbm %s3, %s7223
          %s7225 = sshll.u32 %s7215, 4
          %s7226 = int_to_ptr.vmem [resolvable:$true] %s7225
          %7231 = dma.vmem_to_hbm [thread:$0]  %s7226, 512, %s7224, %s7212, 64, 64, 4
        $region48: #{tpu_custom_call.1} parent=31 // pred_fallthru
          _
      $region32: #{tpu_custom_call.1} parent=5 // pred_fallthru
        _
      %p7232 = scmp.le.s32.totalorder 2, %s16
      // Predicated region
      $region49: #{tpu_custom_call.1} parent=5 // pred_check
        %p7233 = pneg %p7232
      $region50: #{tpu_custom_call.1} parent=5 // pred_check_branch
        %7235 = sbr.rel (%p7233) target = $region52
      $region51: #{tpu_custom_call.1} parent=5 // pred_region
        %s7236 = ssub.s32 %s16, 2
        // Predicated region
        $region53: #{tpu_custom_call.1} parent=51 // pred_check
          %p7237 = pneg %p113
        $region54: #{tpu_custom_call.1} parent=51 // pred_check_branch
          %7239 = sbr.rel (%p7237) target = $region56
        $region55: #{tpu_custom_call.1} parent=51 // pred_region
          %s7240 = sand.u32 %s98, 1
          %s7241 = scalar_lea.sflag [#allocation6], %s7240
          %s7242 = sand.u32 %s98, 1
          %s7243 = smul.addr %s7242, 32
          %s7244 = scalar_lea.vmem [#allocation9], %s7243
          %7245 = dma.done %s7241, 512
        $region56: #{tpu_custom_call.1} parent=51 // pred_fallthru
          _
      $region52: #{tpu_custom_call.1} parent=5 // pred_fallthru
        _
    $region6: #{tpu_custom_call.1} parent=1 // loop_footer
      %s20 = sadd.s32 1, %s16
    $region7: #{tpu_custom_call.1} parent=1 // loop_footer_branch
      %15 = sbr.rel target = $region3
    $region8: #{tpu_custom_call.1} parent=1 // loop_exit
      _
    %7246 = vsyncpa [#allocation5], 1
    %s7247 = scalar_lea.sflag [#allocation5], 1
    %7248 = vsyncpa %s7247, 1
    %7249 = vsyncpa [#allocation8], 1
    %7250 = vsyncpa [#allocation6], 1
    %s7251 = scalar_lea.sflag [#allocation6], 1
    %7252 = vsyncpa %s7251, 1

</llo_original>
